<compile_context>
chip_gen: v5e
topology: v5e:2x2
jax: 0.10.0
libtpu: 0.0.40
codegen_flags: <defaults>
</compile_context>

<pallas_src>
import functools
import math

import jax
import jax.numpy as jnp
from jax.experimental import pallas as pl
from jax.experimental.pallas import tpu as pltpu

TWO_PI = 2.0 * math.pi

# Byte budget for the double-buffered pipeline blocks, and the explicit scoped
# VMEM limit handed to Mosaic (fits all of v5e / v6e / v7x).
_VMEM_BLOCK_BUDGET = 32 * 1024 * 1024
_VMEM_LIMIT_BYTES = 48 * 1024 * 1024


# ---------------------------------------------------------------------------
# Kernels (fused modulation + complex multiply).
# ---------------------------------------------------------------------------
def _modulation(phase, unconstrain_phase):
    if unconstrain_phase:
        constr_phase = phase
    else:
        constr_phase = TWO_PI * jax.nn.sigmoid(phase)
    return jnp.cos(constr_phase), jnp.sin(constr_phase)


def _mask_kernel(phase_ref, er_ref, ei_ref, or_ref, oi_ref, *,
                 unconstrain_phase):
    # phase block: (th, N); field blocks: (tb, th, N).
    mr, mi = _modulation(phase_ref[...], unconstrain_phase)
    mr = mr[None, :, :]
    mi = mi[None, :, :]
    er = er_ref[...]
    ei = ei_ref[...]
    # (mr + i*mi) * (er + i*ei)
    or_ref[...] = mr * er - mi * ei
    oi_ref[...] = mr * ei + mi * er


def _mask_kernel_amp(inv_max_ref, phase_ref, amp_ref, er_ref, ei_ref,
                     or_ref, oi_ref, *, unconstrain_phase):
    mr, mi = _modulation(phase_ref[...], unconstrain_phase)
    # relu(amplitude) * (1 / global_max) -- the global max reduction was done
    # once outside; only a VPU multiply remains here.
    amp = jnp.maximum(amp_ref[...], 0.0) * inv_max_ref[0]
    mr = (amp * mr)[None, :, :]
    mi = (amp * mi)[None, :, :]
    er = er_ref[...]
    ei = ei_ref[...]
    or_ref[...] = mr * er - mi * ei
    oi_ref[...] = mr * ei + mi * er


# ---------------------------------------------------------------------------
# VMEM-budget tile selection.
# ---------------------------------------------------------------------------
def _largest_divisor_leq(n, cap):
    cap = max(1, min(n, cap))
    for d in range(cap, 0, -1):
        if n % d == 0:
            return d
    return 1


def _largest_mult8_divisor_leq(n, cap):
    cap = min(cap, n)
    cap -= cap % 8
    for d in range(cap, 7, -8):
        if n % d == 0:
            return d
    return 8


def _select_tiles(B, N, n_mask_refs):
    """Pick (tb images, th rows) per grid step from a VMEM byte budget.

    Per step the pipeline holds 4 field planes (er, ei, or, oi), each
    double-buffered, of (tb, th, N) f32, plus n_mask_refs mask blocks
    (phase [, amplitude]) of (th, N) f32, also double-buffered.
    """
    mask_full = n_mask_refs * 2 * N * N * 4
    per_image = 4 * 2 * N * N * 4
    if mask_full + per_image <= _VMEM_BLOCK_BUDGET or N % 8 != 0:
        # Whole-image rows; pack several batch images into each block.
        # (N % 8 != 0 forces full-extent rows; blocks may then exceed the
        #  budget for very large non-multiple-of-8 masks -- documented edge.)
        th = N
        cap = max(1, (_VMEM_BLOCK_BUDGET - mask_full) // per_image)
        if B >= 2:
            # Keep >= 2 grid steps so v7x's two TensorCores both get work.
            cap = min(cap, max(1, B // 2))
        tb = _largest_divisor_leq(B, cap)
    else:
        # Image does not fit: tile rows within an image (multiple-of-8 divisor).
        tb = 1
        per_row = (4 * 2 + n_mask_refs * 2) * N * 4
        cap_rows = max(8, _VMEM_BLOCK_BUDGET // per_row)
        th = _largest_mult8_divisor_leq(N, cap_rows)
    return tb, th


# ---------------------------------------------------------------------------
# Wrappers.
# ---------------------------------------------------------------------------
def mask_layer_apply_planar(er, ei, phase, amplitude=None, *,
                            unconstrain_phase=False):
    """Apply the mask to planar (real, imag) float32 fields [B, N, N].

    Preferred entry point: callers that keep fields planar across layers avoid
    the complex<->planar HBM round trips entirely.
    """
    B, N, N2 = er.shape
    assert N == N2 and ei.shape == er.shape
    phase = phase.astype(jnp.float32)
    er = er.astype(jnp.float32)
    ei = ei.astype(jnp.float32)
    include_amplitude = amplitude is not None
    n_mask_refs = 2 if include_amplitude else 1

    tb, th = _select_tiles(B, N, n_mask_refs)
    # Batch is the innermost (fastest) grid axis, so the mask block index is
    # constant across it and the phase/amplitude tiles are DMA'd only when the
    # row block changes (Pallas skips the copy on a revisited block index).
    grid = (N // th, B // tb)

    field_spec = pl.BlockSpec((tb, th, N), lambda r, b: (b, r, 0))
    mask_spec = pl.BlockSpec((th, N), lambda r, b: (r, 0))

    block_bytes = (4 * 2 * tb * th * N + n_mask_refs * 2 * th * N) * 4
    vmem_limit = max(_VMEM_LIMIT_BYTES, block_bytes + (8 << 20))

    cost = pl.CostEstimate(
        flops=(6 + 2 * n_mask_refs) * B * N * N,
        transcendentals=(2 if unconstrain_phase else 4) * (B // tb) * N * N,
        # 2 input planes + 2 output planes + mask parameters.
        bytes_accessed=(4 * B * N * N + n_mask_refs * N * N) * 4,
    )
    compiler_params = pltpu.CompilerParams(
        dimension_semantics=("parallel", "parallel"),
        vmem_limit_bytes=vmem_limit,
    )
    out_shape = (jax.ShapeDtypeStruct((B, N, N), jnp.float32),
                 jax.ShapeDtypeStruct((B, N, N), jnp.float32))

    if include_amplitude:
        amplitude = amplitude.astype(jnp.float32)
        relu_amp = jnp.maximum(amplitude, 0.0)
        # Tiny N x N reduction done once in XLA; the scalar reciprocal rides
        # into the kernel through SMEM.  (All-non-positive amplitude -> inf,
        # same hazard as the PyTorch reference.)
        inv_max = (1.0 / jnp.max(relu_amp)).reshape((1,)).astype(jnp.float32)
        kernel = functools.partial(_mask_kernel_amp,
                                   unconstrain_phase=unconstrain_phase)
        in_specs = [pl.BlockSpec(memory_space=pltpu.MemorySpace.SMEM),
                    mask_spec, mask_spec, field_spec, field_spec]
        operands = (inv_max, phase, amplitude, er, ei)
    else:
        kernel = functools.partial(_mask_kernel,
                                   unconstrain_phase=unconstrain_phase)
        in_specs = [mask_spec, field_spec, field_spec]
        operands = (phase, er, ei)

    out_r, out_i = pl.pallas_call(
        kernel,
        out_shape=out_shape,
        grid_spec=pltpu.PrefetchScalarGridSpec(
            num_scalar_prefetch=0,
            grid=grid,
            in_specs=in_specs,
            out_specs=[field_spec, field_spec],
        ),
        compiler_params=compiler_params,
        cost_estimate=cost,
    )(*operands)
    return out_r, out_i


def mask_layer_forward(E, phase, amplitude=None, *, unconstrain_phase=False):
    """Pallas implementation of MaskLayer.forward (distance_before_mask=None).

    E: complex64 [B, N, N]; phase: float32 [N, N];
    amplitude: float32 [N, N] or None (None == include_amplitude=False).
    Returns complex64 [B, N, N].
    """
    B, N, N2 = E.shape
    assert N == N2
    # One fused XLA pass per direction for the complex <-> planar conversion
    # (complex dtypes cannot enter a Pallas kernel).  Callers that already hold
    # planar fields should call mask_layer_apply_planar directly.
    er = jnp.real(E).astype(jnp.float32)
    ei = jnp.imag(E).astype(jnp.float32)
    out_r, out_i = mask_layer_apply_planar(
        er, ei, phase, amplitude, unconstrain_phase=unconstrain_phase)
    return jax.lax.complex(out_r, out_i)


if __name__ == "__main__":
    B, N = 2, 128  # batch, N_pixels (small, TPU-tile friendly)

    key = jax.random.PRNGKey(0)
    k1, k2, k3, k4 = jax.random.split(key, 4)

    # Deterministic synthetic parameters (module __init__ gives the shapes:
    # phase [N, N] zeros, amplitude [N, N] ones; perturbed here so the test
    # exercises the full compute path, still fully deterministic).
    phase = 0.1 * jax.random.normal(k1, (N, N), dtype=jnp.float32)
    amplitude = jax.random.uniform(k2, (N, N), dtype=jnp.float32,
                                   minval=0.5, maxval=1.5)

    # Input complex field E [B, N, N].
    e_real = jax.random.normal(k3, (B, N, N), dtype=jnp.float32)
    e_imag = jax.random.normal(k4, (B, N, N), dtype=jnp.float32)
    E = jax.lax.complex(e_real, e_imag)

    # include_amplitude=True path.
    out_amp = jax.block_until_ready(
        mask_layer_forward(E, phase, amplitude, unconstrain_phase=False))
    # include_amplitude=False path (phase-only mask).
    out_noamp = jax.block_until_ready(
        mask_layer_forward(E, phase, None, unconstrain_phase=False))

    # Pure-JAX reference (mirrors the PyTorch forward exactly).
    constr_phase = TWO_PI * jax.nn.sigmoid(phase)
    modulation = jnp.cos(constr_phase) + 1j * jnp.sin(constr_phase)
    relu_amp = jnp.maximum(amplitude, 0.0)
    mod_with_amp = (relu_amp / jnp.max(relu_amp)) * modulation
    ref_amp = mod_with_amp[None, :, :] * E
    ref_noamp = modulation[None, :, :] * E

    assert out_amp.shape == (B, N, N) and out_amp.dtype == jnp.complex64
    assert out_noamp.shape == (B, N, N) and out_noamp.dtype == jnp.complex64
    assert jnp.allclose(out_amp, ref_amp, atol=1e-5, rtol=1e-5), \
        "mismatch vs reference (amplitude path)"
    assert jnp.allclose(out_noamp, ref_noamp, atol=1e-5, rtol=1e-5), \
        "mismatch vs reference (phase-only path)"

    print("KERNEL_OK")
</pallas_src>

<mosaic_0001>
module attributes {stable_mosaic.version = 11 : i64} {
  func.func @_mask_kernel_amp(%arg0: i32, %arg1: i32, %arg2: memref<1xf32, #tpu.memory_space<smem>>, %arg3: memref<128x128xf32, #tpu.memory_space<vmem>>, %arg4: memref<128x128xf32, #tpu.memory_space<vmem>>, %arg5: memref<1x128x128xf32, #tpu.memory_space<vmem>>, %arg6: memref<1x128x128xf32, #tpu.memory_space<vmem>>, %arg7: memref<1x128x128xf32, #tpu.memory_space<vmem>>, %arg8: memref<1x128x128xf32, #tpu.memory_space<vmem>>) attributes {dimension_semantics = [#tpu.dimension_semantics<parallel>, #tpu.dimension_semantics<parallel>], iteration_bounds = array<i64: 1, 2>, scalar_prefetch = 0 : i64, scratch_operands = 0 : i64, tpu.core_type = #tpu.core_type<tc>, window_params = [{transform_indices = @transform_0, window_bounds = array<i64: 1>}, {transform_indices = @transform_1, window_bounds = array<i64: 128, 128>}, {transform_indices = @transform_2, window_bounds = array<i64: 128, 128>}, {transform_indices = @transform_3, window_bounds = array<i64: 1, 128, 128>}, {transform_indices = @transform_4, window_bounds = array<i64: 1, 128, 128>}, {transform_indices = @transform_5, window_bounds = array<i64: 1, 128, 128>}, {transform_indices = @transform_6, window_bounds = array<i64: 1, 128, 128>}]} {
    %c0 = arith.constant 0 : index
    %c0_0 = arith.constant 0 : index
    %0 = vector.load %arg3[%c0, %c0_0] : memref<128x128xf32, #tpu.memory_space<vmem>>, vector<128x128xf32>
    %1 = arith.negf %0 : vector<128x128xf32>
    %2 = math.exp %1 : vector<128x128xf32>
    %cst = arith.constant 1.000000e+00 : f32
    %3 = vector.broadcast %cst : f32 to vector<128x128xf32>
    %4 = arith.addf %3, %2 : vector<128x128xf32>
    %5 = arith.divf %3, %4 : vector<128x128xf32>
    %cst_1 = arith.constant 6.28318548 : f32
    %6 = vector.broadcast %cst_1 : f32 to vector<128x128xf32>
    %7 = arith.mulf %6, %5 : vector<128x128xf32>
    %8 = math.cos %7 : vector<128x128xf32>
    %9 = math.sin %7 : vector<128x128xf32>
    %c0_2 = arith.constant 0 : index
    %c0_3 = arith.constant 0 : index
    %10 = vector.load %arg4[%c0_2, %c0_3] : memref<128x128xf32, #tpu.memory_space<vmem>>, vector<128x128xf32>
    %cst_4 = arith.constant 0.000000e+00 : f32
    %11 = vector.broadcast %cst_4 : f32 to vector<128x128xf32>
    %12 = arith.maximumf %10, %11 : vector<128x128xf32>
    %c0_5 = arith.constant 0 : index
    %13 = memref.load %arg2[%c0_5] : memref<1xf32, #tpu.memory_space<smem>>
    %14 = vector.broadcast %13 : f32 to vector<128x128xf32>
    %15 = arith.mulf %12, %14 : vector<128x128xf32>
    %16 = arith.mulf %15, %8 : vector<128x128xf32>
    %17 = vector.shape_cast %16 : vector<128x128xf32> to vector<1x128x128xf32>
    %18 = arith.mulf %15, %9 : vector<128x128xf32>
    %19 = vector.shape_cast %18 : vector<128x128xf32> to vector<1x128x128xf32>
    %c0_6 = arith.constant 0 : index
    %c0_7 = arith.constant 0 : index
    %c0_8 = arith.constant 0 : index
    %20 = vector.load %arg5[%c0_6, %c0_7, %c0_8] : memref<1x128x128xf32, #tpu.memory_space<vmem>>, vector<1x128x128xf32>
    %c0_9 = arith.constant 0 : index
    %c0_10 = arith.constant 0 : index
    %c0_11 = arith.constant 0 : index
    %21 = vector.load %arg6[%c0_9, %c0_10, %c0_11] : memref<1x128x128xf32, #tpu.memory_space<vmem>>, vector<1x128x128xf32>
    %22 = arith.mulf %17, %20 : vector<1x128x128xf32>
    %23 = arith.mulf %19, %21 : vector<1x128x128xf32>
    %24 = arith.subf %22, %23 : vector<1x128x128xf32>
    %c0_12 = arith.constant 0 : index
    %c0_13 = arith.constant 0 : index
    %c0_14 = arith.constant 0 : index
    %25 = vector.load %arg7[%c0_12, %c0_13, %c0_14] : memref<1x128x128xf32, #tpu.memory_space<vmem>>, vector<1x128x128xf32>
    tpu.vector_store %arg7[%c0_12, %c0_13, %c0_14], %24 {strides = array<i32>} : memref<1x128x128xf32, #tpu.memory_space<vmem>>, vector<1x128x128xf32>,
    %26 = arith.mulf %17, %21 : vector<1x128x128xf32>
    %27 = arith.mulf %19, %20 : vector<1x128x128xf32>
    %28 = arith.addf %26, %27 : vector<1x128x128xf32>
    %c0_15 = arith.constant 0 : index
    %c0_16 = arith.constant 0 : index
    %c0_17 = arith.constant 0 : index
    %29 = vector.load %arg8[%c0_15, %c0_16, %c0_17] : memref<1x128x128xf32, #tpu.memory_space<vmem>>, vector<1x128x128xf32>
    tpu.vector_store %arg8[%c0_15, %c0_16, %c0_17], %28 {strides = array<i32>} : memref<1x128x128xf32, #tpu.memory_space<vmem>>, vector<1x128x128xf32>,
    return
  }
  func.func @transform_0(%arg0: i32, %arg1: i32) -> i32 {
    %c0_i32 = arith.constant 0 : i32
    %c0_i32_0 = arith.constant 0 : i32
    return %c0_i32 : i32
  }
  func.func @transform_1(%arg0: i32, %arg1: i32) -> (i32, i32) {
    %c0_i32 = arith.constant 0 : i32
    %c0_i32_0 = arith.constant 0 : i32
    return %arg0, %c0_i32 : i32, i32
  }
  func.func @transform_2(%arg0: i32, %arg1: i32) -> (i32, i32) {
    %c0_i32 = arith.constant 0 : i32
    %c0_i32_0 = arith.constant 0 : i32
    return %arg0, %c0_i32 : i32, i32
  }
  func.func @transform_3(%arg0: i32, %arg1: i32) -> (i32, i32, i32) {
    %c0_i32 = arith.constant 0 : i32
    %c0_i32_0 = arith.constant 0 : i32
    return %arg1, %arg0, %c0_i32 : i32, i32, i32
  }
  func.func @transform_4(%arg0: i32, %arg1: i32) -> (i32, i32, i32) {
    %c0_i32 = arith.constant 0 : i32
    %c0_i32_0 = arith.constant 0 : i32
    return %arg1, %arg0, %c0_i32 : i32, i32, i32
  }
  func.func @transform_5(%arg0: i32, %arg1: i32) -> (i32, i32, i32) {
    %c0_i32 = arith.constant 0 : i32
    %c0_i32_0 = arith.constant 0 : i32
    return %arg1, %arg0, %c0_i32 : i32, i32, i32
  }
  func.func @transform_6(%arg0: i32, %arg1: i32) -> (i32, i32, i32) {
    %c0_i32 = arith.constant 0 : i32
    %c0_i32_0 = arith.constant 0 : i32
    return %arg1, %arg0, %c0_i32 : i32, i32, i32
  }
}

</mosaic_0001>

<llo_original>
// kernel: tpu_custom_call.1
$region0: #{tpu_custom_call.1}
  #allocation0 [shape = 'u32[]', space=smem, size = 0x4, offset = 0x4, fixed_abs, tag = 'smem constant byte address 0x4 - core index']
  #allocation1 [shape = 'u32[72,128]{1,0:T(1,128)}', space=vmem, size = 0x9000, scoped, tag = 'internal scratch']
  #allocation2 [shape = 'f32[1]{0:T(128)S(6)}', space=smem, size = 0x200, scoped, tag = 'scoped memory for tpu_custom_call.1']
  %s0 = inlined_call_operand.<no memory space> [shape: f32[1], index: 0, kind: input, shape index: {}]
  %s1 = inlined_call_operand.hbm [shape: f32[128,128], index: 1, kind: input, shape index: {}]
  %s2 = inlined_call_operand.hbm [shape: f32[128,128], index: 2, kind: input, shape index: {}]
  %s3 = inlined_call_operand.hbm [shape: f32[2,128,128], index: 3, kind: input, shape index: {}]
  %s4 = inlined_call_operand.hbm [shape: f32[2,128,128], index: 4, kind: input, shape index: {}]
  %s5 = inlined_call_operand.hbm [shape: f32[2,128,128], index: 5, kind: output, shape index: {0}]
  %s6 = inlined_call_operand.hbm [shape: f32[2,128,128], index: 6, kind: output, shape index: {1}]
  %7 = xla_tuple %s5, %s6
  %s8 = sld [smem:[#allocation0]]
  $region77: #{tpu_custom_call.1} parent=0
    _
  %s10 = ssub.s32 1, %s8
  %s11 = scalar_select 0, %s10, %s8
  %12 = sst [smem:[#allocation2]] %s0
  $region1: #{tpu_custom_call.1} parent=0
    #allocation3 [shape = 'u8[65536]{0}', space=vmem, size = 0x10000, scoped, tag = 'input window, operand 1, single buffered']
    #allocation4 [shape = 's32[2]{0}', space=sflag, size = 0x8, scoped, tag = 'scoped memory for tpu_custom_call.1']
    #allocation5 [shape = 's32[2]{0}', space=sflag, size = 0x8, scoped, tag = 'scoped memory for tpu_custom_call.1']
    #allocation6 [shape = 'u8[65536]{0}', space=vmem, size = 0x10000, scoped, tag = 'input window, operand 2, single buffered']
    #allocation7 [shape = 's32[1]{0}', space=sflag, size = 0x4, scoped, tag = 'scoped memory for tpu_custom_call.1']
    #allocation8 [shape = 'u8[131072]{0}', space=vmem, size = 0x20000, scoped, tag = 'input window, operand 3']
    #allocation9 [shape = 'u8[131072]{0}', space=vmem, size = 0x20000, scoped, tag = 'input window, operand 4']
    #allocation10 [shape = 'u8[131072]{0}', space=vmem, size = 0x20000, scoped, tag = 'output window, operand 0']
    #allocation11 [shape = 'u8[131072]{0}', space=vmem, size = 0x20000, scoped, tag = 'output window, operand 1']
    #allocation12 [shape = 's32[2]{0}', space=sflag, size = 0x8, scoped, tag = 'scoped memory for tpu_custom_call.1']
    %13 = vsyncpa [#allocation4], 0
    %14 = vsyncpa [#allocation7], 0
    %15 = vsyncpa [#allocation5], 0
    %s16 = scalar_lea.sflag [#allocation5], 1
    %17 = vsyncpa %s16, 0
    %18 = vsyncpa [#allocation12], 0
    %s19 = scalar_lea.sflag [#allocation12], 1
    %20 = vsyncpa %s19, 0
    loop: start=0, step=1, limit=4
    $region2: #{tpu_custom_call.1} parent=1 // loop_pre_header
      _
    $region3: #{tpu_custom_call.1} parent=1 // loop_header
      %s22 = sphi 0, %s26
      %p23 = scmp.ge.s32.totalorder %s22, 4
      %s29 = sphi 0, %s41
      %s30 = sphi 0, %s37
      %s31 = sphi 0, %s29
      %s32 = sphi 0, %s30
      %s33 = sphi 0, %s31
      %s34 = sphi 0, %s32
      %s42 = sphi 0, %s42
      %s44 = sphi 0, %s42
      %s45 = sphi 0, %s44
      %s59 = sphi 0, %s45
      %s65 = sphi 0, %s67
      %s68 = sphi 0, %s65
      %s69 = sphi 0, %s68
      %s85 = sphi 0, %s69
      %s91 = sphi 0, %s93
      %s94 = sphi 0, %s91
      %s95 = sphi 0, %s94
      %s111 = sphi 0, %s95
      %s119 = sphi 0, %s121
      %s122 = sphi 0, %s119
      %s123 = sphi 0, %s122
      %s139 = sphi 0, %s123
      %s147 = sphi 0, %s149
      %s150 = sphi 0, %s147
      %s151 = sphi 0, %s150
      %s167 = sphi 0, %s151
      %s175 = sphi 0, %s177
      %s178 = sphi 0, %s175
      %s179 = sphi 0, %s178
      %s195 = sphi 0, %s179
      %s203 = sphi 0, %s205
      %s206 = sphi 0, %s203
      %s207 = sphi 0, %s206
      %s223 = sphi 0, %s207
    $region4: #{tpu_custom_call.1} parent=1 // loop_header_branch
      %25 = sbr.rel (%p23) target = $region8
    $region5: #{tpu_custom_call.1} parent=1 // loop_body
      %s27 = ssub.s32 %s22, 1
      %s28 = ssub.s32 %s22, 2
      %s35 = sadd.s32 1, %s30
      %p36 = scmp.ge.s32.totalorder %s35, 2
      %s37 = scalar_select %p36, 0, %s35
      %s38 = sadd.s32 1, %s29
      %s39 = scalar_select %p36, %s38, %s29
      %p40 = scmp.ge.s32.totalorder %s39, 1
      %s41 = scalar_select %p40, 0, %s39
      %s43 = sadd.s32 %s42, 1
      %p46 = scmp.eq.s32.totalorder %s22, 1
      %p47 = scmp.ne.s32.totalorder %s42, %s44
      %p48 = scmp.eq.s32.totalorder %s22, 0
      %p49 = por %p47, %p48
      %p50 = scmp.ne.s32.totalorder %s42, %s44
      %p51 = scmp.eq.s32.totalorder %s27, 1
      %p52 = por %p50, %p51
      %p53 = scmp.ne.s32.totalorder %s44, %s45
      %p54 = scmp.eq.s32.totalorder %s27, 0
      %p55 = por %p53, %p54
      %p56 = scmp.ne.s32.totalorder %s44, %s45
      %p57 = scmp.eq.s32.totalorder %s28, 1
      %p58 = por %p56, %p57
      %p60 = scmp.ne.s32.totalorder %s45, %s59
      %p61 = scmp.eq.s32.totalorder %s28, 0
      %p62 = por %p60, %p61
      %s63 = ssub.s32 %s29, %s41
      %p64 = scmp.eq.s32.totalorder %s63, 0
      %s66 = sadd.s32 %s65, 1
      %s67 = scalar_select %p64, %s65, %s66
      %p70 = pneg %p64
      %p71 = scmp.eq.s32.totalorder %s22, 1
      %p72 = por %p70, %p71
      %p73 = scmp.ne.s32.totalorder %s65, %s68
      %p74 = scmp.eq.s32.totalorder %s22, 0
      %p75 = por %p73, %p74
      %p76 = scmp.ne.s32.totalorder %s65, %s68
      %p77 = scmp.eq.s32.totalorder %s27, 1
      %p78 = por %p76, %p77
      %p79 = scmp.ne.s32.totalorder %s68, %s69
      %p80 = scmp.eq.s32.totalorder %s27, 0
      %p81 = por %p79, %p80
      %p82 = scmp.ne.s32.totalorder %s68, %s69
      %p83 = scmp.eq.s32.totalorder %s28, 1
      %p84 = por %p82, %p83
      %p86 = scmp.ne.s32.totalorder %s69, %s85
      %p87 = scmp.eq.s32.totalorder %s28, 0
      %p88 = por %p86, %p87
      %s89 = ssub.s32 %s29, %s41
      %p90 = scmp.eq.s32.totalorder %s89, 0
      %s92 = sadd.s32 %s91, 1
      %s93 = scalar_select %p90, %s91, %s92
      %p96 = pneg %p90
      %p97 = scmp.eq.s32.totalorder %s22, 1
      %p98 = por %p96, %p97
      %p99 = scmp.ne.s32.totalorder %s91, %s94
      %p100 = scmp.eq.s32.totalorder %s22, 0
      %p101 = por %p99, %p100
      %p102 = scmp.ne.s32.totalorder %s91, %s94
      %p103 = scmp.eq.s32.totalorder %s27, 1
      %p104 = por %p102, %p103
      %p105 = scmp.ne.s32.totalorder %s94, %s95
      %p106 = scmp.eq.s32.totalorder %s27, 0
      %p107 = por %p105, %p106
      %p108 = scmp.ne.s32.totalorder %s94, %s95
      %p109 = scmp.eq.s32.totalorder %s28, 1
      %p110 = por %p108, %p109
      %p112 = scmp.ne.s32.totalorder %s95, %s111
      %p113 = scmp.eq.s32.totalorder %s28, 0
      %p114 = por %p112, %p113
      %s115 = ssub.s32 %s30, %s37
      %s116 = ssub.s32 %s29, %s41
      %s117 = sor.u32 %s115, %s116
      %p118 = scmp.eq.s32.totalorder %s117, 0
      %s120 = sadd.s32 %s119, 1
      %s121 = scalar_select %p118, %s119, %s120
      %p124 = pneg %p118
      %p125 = scmp.eq.s32.totalorder %s22, 1
      %p126 = por %p124, %p125
      %p127 = scmp.ne.s32.totalorder %s119, %s122
      %p128 = scmp.eq.s32.totalorder %s22, 0
      %p129 = por %p127, %p128
      %p130 = scmp.ne.s32.totalorder %s119, %s122
      %p131 = scmp.eq.s32.totalorder %s27, 1
      %p132 = por %p130, %p131
      %p133 = scmp.ne.s32.totalorder %s122, %s123
      %p134 = scmp.eq.s32.totalorder %s27, 0
      %p135 = por %p133, %p134
      %p136 = scmp.ne.s32.totalorder %s122, %s123
      %p137 = scmp.eq.s32.totalorder %s28, 1
      %p138 = por %p136, %p137
      %p140 = scmp.ne.s32.totalorder %s123, %s139
      %p141 = scmp.eq.s32.totalorder %s28, 0
      %p142 = por %p140, %p141
      %s143 = ssub.s32 %s30, %s37
      %s144 = ssub.s32 %s29, %s41
      %s145 = sor.u32 %s143, %s144
      %p146 = scmp.eq.s32.totalorder %s145, 0
      %s148 = sadd.s32 %s147, 1
      %s149 = scalar_select %p146, %s147, %s148
      %p152 = pneg %p146
      %p153 = scmp.eq.s32.totalorder %s22, 1
      %p154 = por %p152, %p153
      %p155 = scmp.ne.s32.totalorder %s147, %s150
      %p156 = scmp.eq.s32.totalorder %s22, 0
      %p157 = por %p155, %p156
      %p158 = scmp.ne.s32.totalorder %s147, %s150
      %p159 = scmp.eq.s32.totalorder %s27, 1
      %p160 = por %p158, %p159
      %p161 = scmp.ne.s32.totalorder %s150, %s151
      %p162 = scmp.eq.s32.totalorder %s27, 0
      %p163 = por %p161, %p162
      %p164 = scmp.ne.s32.totalorder %s150, %s151
      %p165 = scmp.eq.s32.totalorder %s28, 1
      %p166 = por %p164, %p165
      %p168 = scmp.ne.s32.totalorder %s151, %s167
      %p169 = scmp.eq.s32.totalorder %s28, 0
      %p170 = por %p168, %p169
      %s171 = ssub.s32 %s30, %s37
      %s172 = ssub.s32 %s29, %s41
      %s173 = sor.u32 %s171, %s172
      %p174 = scmp.eq.s32.totalorder %s173, 0
      %s176 = sadd.s32 %s175, 1
      %s177 = scalar_select %p174, %s175, %s176
      %p180 = pneg %p174
      %p181 = scmp.eq.s32.totalorder %s22, 1
      %p182 = por %p180, %p181
      %p183 = scmp.ne.s32.totalorder %s175, %s178
      %p184 = scmp.eq.s32.totalorder %s22, 0
      %p185 = por %p183, %p184
      %p186 = scmp.ne.s32.totalorder %s175, %s178
      %p187 = scmp.eq.s32.totalorder %s27, 1
      %p188 = por %p186, %p187
      %p189 = scmp.ne.s32.totalorder %s178, %s179
      %p190 = scmp.eq.s32.totalorder %s27, 0
      %p191 = por %p189, %p190
      %p192 = scmp.ne.s32.totalorder %s178, %s179
      %p193 = scmp.eq.s32.totalorder %s28, 1
      %p194 = por %p192, %p193
      %p196 = scmp.ne.s32.totalorder %s179, %s195
      %p197 = scmp.eq.s32.totalorder %s28, 0
      %p198 = por %p196, %p197
      %s199 = ssub.s32 %s30, %s37
      %s200 = ssub.s32 %s29, %s41
      %s201 = sor.u32 %s199, %s200
      %p202 = scmp.eq.s32.totalorder %s201, 0
      %s204 = sadd.s32 %s203, 1
      %s205 = scalar_select %p202, %s203, %s204
      %p208 = pneg %p202
      %p209 = scmp.eq.s32.totalorder %s22, 1
      %p210 = por %p208, %p209
      %p211 = scmp.ne.s32.totalorder %s203, %s206
      %p212 = scmp.eq.s32.totalorder %s22, 0
      %p213 = por %p211, %p212
      %p214 = scmp.ne.s32.totalorder %s203, %s206
      %p215 = scmp.eq.s32.totalorder %s27, 1
      %p216 = por %p214, %p215
      %p217 = scmp.ne.s32.totalorder %s206, %s207
      %p218 = scmp.eq.s32.totalorder %s27, 0
      %p219 = por %p217, %p218
      %p220 = scmp.ne.s32.totalorder %s206, %s207
      %p221 = scmp.eq.s32.totalorder %s28, 1
      %p222 = por %p220, %p221
      %p224 = scmp.ne.s32.totalorder %s207, %s223
      %p225 = scmp.eq.s32.totalorder %s28, 0
      %p226 = por %p224, %p225
      %p227 = scmp.le.s32.totalorder 1, %s22
      %p228 = scmp.lt.s32.totalorder %s22, 3
      %p229 = pnand %p227, %p228
      %p230 = pneg %p229
      // Predicated region
      $region9: #{tpu_custom_call.1} parent=5 // pred_check
        _
      $region10: #{tpu_custom_call.1} parent=5 // pred_check_branch
        %232 = sbr.rel (%p229) target = $region12
      $region11: #{tpu_custom_call.1} parent=5 // pred_region
        %s233 = ssub.s32 %s22, 1
        // Predicated region
        $region13: #{tpu_custom_call.1} parent=11 // pred_check
          %p234 = pneg %p55
        $region14: #{tpu_custom_call.1} parent=11 // pred_check_branch
          %236 = sbr.rel (%p234) target = $region16
        $region15: #{tpu_custom_call.1} parent=11 // pred_region
          _
        $region16: #{tpu_custom_call.1} parent=11 // pred_fallthru
          _
        // Predicated region
        $region17: #{tpu_custom_call.1} parent=11 // pred_check
          %p237 = pneg %p81
        $region18: #{tpu_custom_call.1} parent=11 // pred_check_branch
          %239 = sbr.rel (%p237) target = $region20
        $region19: #{tpu_custom_call.1} parent=11 // pred_region
          %s240 = smul.u32 16, %s31
          %242 = vsyncadd [#allocation4], 0
          %s243 = smul.addr %s240, 8
          %s244 = scalar_lea.hbm %s1, %s243
          %s245 = sshll.u32 %s244, 4
          %s246 = int_to_ptr.hbm [resolvable:$true] %s245
          %s247 = sshll.u32 [#allocation3], 4
          %s248 = int_to_ptr.vmem [resolvable:$true] %s247
          %253 = dma.hbm_to_vmem [thread:$0]  %s246, 2048, %s248, [#allocation4], 128, 128, 8
        $region20: #{tpu_custom_call.1} parent=11 // pred_fallthru
          _
        // Predicated region
        $region21: #{tpu_custom_call.1} parent=11 // pred_check
          %p254 = pneg %p107
        $region22: #{tpu_custom_call.1} parent=11 // pred_check_branch
          %256 = sbr.rel (%p254) target = $region24
        $region23: #{tpu_custom_call.1} parent=11 // pred_region
          %s257 = smul.u32 16, %s31
          %259 = vsyncadd [#allocation7], 0
          %s260 = smul.addr %s257, 8
          %s261 = scalar_lea.hbm %s2, %s260
          %s262 = sshll.u32 %s261, 4
          %s263 = int_to_ptr.hbm [resolvable:$true] %s262
          %s264 = sshll.u32 [#allocation6], 4
          %s265 = int_to_ptr.vmem [resolvable:$true] %s264
          %270 = dma.hbm_to_vmem [thread:$0]  %s263, 2048, %s265, [#allocation7], 128, 128, 8
        $region24: #{tpu_custom_call.1} parent=11 // pred_fallthru
          _
      $region12: #{tpu_custom_call.1} parent=5 // pred_fallthru
        _
      %p271 = scmp.lt.s32.totalorder %s22, 2
      // Predicated region
      $region25: #{tpu_custom_call.1} parent=5 // pred_check
        %p272 = pneg %p271
      $region26: #{tpu_custom_call.1} parent=5 // pred_check_branch
        %274 = sbr.rel (%p272) target = $region28
      $region27: #{tpu_custom_call.1} parent=5 // pred_region
        // Predicated region
        $region29: #{tpu_custom_call.1} parent=27 // pred_check
          %p275 = pneg %p129
        $region30: #{tpu_custom_call.1} parent=27 // pred_check_branch
          %277 = sbr.rel (%p275) target = $region32
        $region31: #{tpu_custom_call.1} parent=27 // pred_region
          %s278 = sand.u32 %s22, 1
          %s279 = scalar_lea.sflag [#allocation4], %s278
          %s280 = sand.u32 %s119, 1
          %s281 = smul.addr %s280, 128
          %s282 = scalar_lea.vmem [#allocation8], %s281
          %s283 = smul.u32 16, %s29
          %285 = vsyncadd %s279, 0
          %s286 = smul.addr %s30, 16
          %s287 = sadd.s32 %s283, %s286
          %s288 = smul.addr %s287, 8
          %s289 = scalar_lea.hbm %s3, %s288
          %s290 = sshll.u32 %s289, 4
          %s291 = int_to_ptr.hbm [resolvable:$true] %s290
          %s292 = sshll.u32 %s282, 4
          %s293 = int_to_ptr.vmem [resolvable:$true] %s292
          %298 = dma.hbm_to_vmem [thread:$0]  %s291, 2048, %s293, %s279, 128, 128, 8
        $region32: #{tpu_custom_call.1} parent=27 // pred_fallthru
          _
        // Predicated region
        $region33: #{tpu_custom_call.1} parent=27 // pred_check
          %p299 = pneg %p157
        $region34: #{tpu_custom_call.1} parent=27 // pred_check_branch
          %301 = sbr.rel (%p299) target = $region36
        $region35: #{tpu_custom_call.1} parent=27 // pred_region
          %s302 = sand.u32 %s22, 1
          %s303 = scalar_lea.sflag [#allocation4], %s302
          %s304 = sand.u32 %s147, 1
          %s305 = smul.addr %s304, 128
          %s306 = scalar_lea.vmem [#allocation9], %s305
          %s307 = smul.u32 16, %s29
          %309 = vsyncadd %s303, 0
          %s310 = smul.addr %s30, 16
          %s311 = sadd.s32 %s307, %s310
          %s312 = smul.addr %s311, 8
          %s313 = scalar_lea.hbm %s4, %s312
          %s314 = sshll.u32 %s313, 4
          %s315 = int_to_ptr.hbm [resolvable:$true] %s314
          %s316 = sshll.u32 %s306, 4
          %s317 = int_to_ptr.vmem [resolvable:$true] %s316
          %322 = dma.hbm_to_vmem [thread:$0]  %s315, 2048, %s317, %s303, 128, 128, 8
        $region36: #{tpu_custom_call.1} parent=27 // pred_fallthru
          _
      $region28: #{tpu_custom_call.1} parent=5 // pred_fallthru
        _
      %p323 = scmp.le.s32.totalorder 1, %s22
      %p324 = scmp.lt.s32.totalorder %s22, 3
      %p325 = pnand %p323, %p324
      %p326 = pneg %p325
      // Predicated region
      $region37: #{tpu_custom_call.1} parent=5 // pred_check
        _
      $region38: #{tpu_custom_call.1} parent=5 // pred_check_branch
        %328 = sbr.rel (%p325) target = $region40
      $region39: #{tpu_custom_call.1} parent=5 // pred_region
        %s329 = ssub.s32 %s22, 1
        // Predicated region
        $region41: #{tpu_custom_call.1} parent=39 // pred_check
          %p330 = pneg %p81
        $region42: #{tpu_custom_call.1} parent=39 // pred_check_branch
          %332 = sbr.rel (%p330) target = $region44
        $region43: #{tpu_custom_call.1} parent=39 // pred_region
          %334 = dma.done [#allocation4], 2048
        $region44: #{tpu_custom_call.1} parent=39 // pred_fallthru
          _
        // Predicated region
        $region45: #{tpu_custom_call.1} parent=39 // pred_check
          %p335 = pneg %p107
        $region46: #{tpu_custom_call.1} parent=39 // pred_check_branch
          %337 = sbr.rel (%p335) target = $region48
        $region47: #{tpu_custom_call.1} parent=39 // pred_region
          %339 = dma.done [#allocation7], 2048
        $region48: #{tpu_custom_call.1} parent=39 // pred_fallthru
          _
        %s340 = sand.u32 %s27, 1
        %s341 = scalar_lea.sflag [#allocation4], %s340
        %s342 = sand.u32 %s122, 1
        %s343 = smul.addr %s342, 128
        %s344 = scalar_lea.vmem [#allocation8], %s343
        // Predicated region
        $region49: #{tpu_custom_call.1} parent=39 // pred_check
          %p345 = pneg %p135
        $region50: #{tpu_custom_call.1} parent=39 // pred_check_branch
          %347 = sbr.rel (%p345) target = $region52
        $region51: #{tpu_custom_call.1} parent=39 // pred_region
          %349 = dma.done %s341, 2048
        $region52: #{tpu_custom_call.1} parent=39 // pred_fallthru
          _
        %s350 = sand.u32 %s27, 1
        %s351 = scalar_lea.sflag [#allocation4], %s350
        %s352 = sand.u32 %s150, 1
        %s353 = smul.addr %s352, 128
        %s354 = scalar_lea.vmem [#allocation9], %s353
        // Predicated region
        $region53: #{tpu_custom_call.1} parent=39 // pred_check
          %p355 = pneg %p163
        $region54: #{tpu_custom_call.1} parent=39 // pred_check_branch
          %357 = sbr.rel (%p355) target = $region56
        $region55: #{tpu_custom_call.1} parent=39 // pred_region
          %359 = dma.done %s351, 2048
        $region56: #{tpu_custom_call.1} parent=39 // pred_fallthru
          _
        %p360 = pneg %p55
        %p361 = pneg %p52
        %p362 = pneg %p81
        %p363 = pneg %p78
        %p364 = pneg %p107
        %p365 = pneg %p104
        %s366 = sand.u32 %s27, 1
        %s367 = scalar_lea.sflag [#allocation4], %s366
        %s368 = sand.u32 %s122, 1
        %s369 = smul.addr %s368, 128
        %s370 = scalar_lea.vmem [#allocation8], %s369
        %p371 = pneg %p135
        %p372 = pneg %p132
        %s373 = sand.u32 %s27, 1
        %s374 = scalar_lea.sflag [#allocation4], %s373
        %s375 = sand.u32 %s150, 1
        %s376 = smul.addr %s375, 128
        %s377 = scalar_lea.vmem [#allocation9], %s376
        %p378 = pneg %p163
        %p379 = pneg %p160
        %p380 = pneg %p191
        %p381 = pneg %p188
        %s382 = sand.u32 %s178, 1
        %s383 = scalar_lea.sflag [#allocation5], %s382
        %s384 = sand.u32 %s178, 1
        %s385 = smul.addr %s384, 128
        %s386 = scalar_lea.vmem [#allocation10], %s385
        %p387 = pneg %p219
        %p388 = pneg %p216
        %s389 = sand.u32 %s206, 1
        %s390 = scalar_lea.sflag [#allocation12], %s389
        %s391 = sand.u32 %s206, 1
        %s392 = smul.addr %s391, 128
        %s393 = scalar_lea.vmem [#allocation11], %s392
        %s394 = smul.u32 16, %s31
        %s395 = smul.u32 16, %s31
        %s396 = smul.u32 16, %s31
        %s397 = smul.u32 16, %s31
        %s398 = smul.u32 16, %s31
        %s399 = smul.u32 16, %s31
        %v400 = vld [vmem:[#allocation3] sm:$0xff]
        %v401 = vld [vmem:[#allocation3 + $0x8] sm:$0xff]
        %v402 = vld [vmem:[#allocation3 + $0x10] sm:$0xff]
        %v403 = vld [vmem:[#allocation3 + $0x18] sm:$0xff]
        %v404 = vld [vmem:[#allocation3 + $0x20] sm:$0xff]
        %v405 = vld [vmem:[#allocation3 + $0x28] sm:$0xff]
        %v406 = vld [vmem:[#allocation3 + $0x30] sm:$0xff]
        %v407 = vld [vmem:[#allocation3 + $0x38] sm:$0xff]
        %v408 = vld [vmem:[#allocation3 + $0x40] sm:$0xff]
        %v409 = vld [vmem:[#allocation3 + $0x48] sm:$0xff]
        %v410 = vld [vmem:[#allocation3 + $0x50] sm:$0xff]
        %v411 = vld [vmem:[#allocation3 + $0x58] sm:$0xff]
        %v412 = vld [vmem:[#allocation3 + $0x60] sm:$0xff]
        %v413 = vld [vmem:[#allocation3 + $0x68] sm:$0xff]
        %v414 = vld [vmem:[#allocation3 + $0x70] sm:$0xff]
        %v415 = vld [vmem:[#allocation3 + $0x78] sm:$0xff]
        %v416 = vxor.u32 %v400, 2147483648
        %v417 = vxor.u32 %v401, 2147483648
        %v418 = vxor.u32 %v402, 2147483648
        %v419 = vxor.u32 %v403, 2147483648
        %v420 = vxor.u32 %v404, 2147483648
        %v421 = vxor.u32 %v405, 2147483648
        %v422 = vxor.u32 %v406, 2147483648
        %v423 = vxor.u32 %v407, 2147483648
        %v424 = vxor.u32 %v408, 2147483648
        %v425 = vxor.u32 %v409, 2147483648
        %v426 = vxor.u32 %v410, 2147483648
        %v427 = vxor.u32 %v411, 2147483648
        %v428 = vxor.u32 %v412, 2147483648
        %v429 = vxor.u32 %v413, 2147483648
        %v430 = vxor.u32 %v414, 2147483648
        %v431 = vxor.u32 %v415, 2147483648
        %v432 = vmul.f32 %v416, 1.442695
        %v433 = vpow.pop %v432
        %v434 = vmul.f32 %v417, 1.442695
        %v435 = vpow.pop %v434
        %v436 = vmul.f32 %v418, 1.442695
        %v437 = vpow.pop %v436
        %v438 = vmul.f32 %v419, 1.442695
        %v439 = vpow.pop %v438
        %v440 = vmul.f32 %v420, 1.442695
        %v441 = vpow.pop %v440
        %v442 = vmul.f32 %v421, 1.442695
        %v443 = vpow.pop %v442
        %v444 = vmul.f32 %v422, 1.442695
        %v445 = vpow.pop %v444
        %v446 = vmul.f32 %v423, 1.442695
        %v447 = vpow.pop %v446
        %v448 = vmul.f32 %v424, 1.442695
        %v449 = vpow.pop %v448
        %v450 = vmul.f32 %v425, 1.442695
        %v451 = vpow.pop %v450
        %v452 = vmul.f32 %v426, 1.442695
        %v453 = vpow.pop %v452
        %v454 = vmul.f32 %v427, 1.442695
        %v455 = vpow.pop %v454
        %v456 = vmul.f32 %v428, 1.442695
        %v457 = vpow.pop %v456
        %v458 = vmul.f32 %v429, 1.442695
        %v459 = vpow.pop %v458
        %v460 = vmul.f32 %v430, 1.442695
        %v461 = vpow.pop %v460
        %v462 = vmul.f32 %v431, 1.442695
        %v463 = vpow.pop %v462
        %v464 = vadd.f32 %v433, 1.0
        %v465 = vadd.f32 %v435, 1.0
        %v466 = vadd.f32 %v437, 1.0
        %v467 = vadd.f32 %v439, 1.0
        %v468 = vadd.f32 %v441, 1.0
        %v469 = vadd.f32 %v443, 1.0
        %v470 = vadd.f32 %v445, 1.0
        %v471 = vadd.f32 %v447, 1.0
        %v472 = vadd.f32 %v449, 1.0
        %v473 = vadd.f32 %v451, 1.0
        %v474 = vadd.f32 %v453, 1.0
        %v475 = vadd.f32 %v455, 1.0
        %v476 = vadd.f32 %v457, 1.0
        %v477 = vadd.f32 %v459, 1.0
        %v478 = vadd.f32 %v461, 1.0
        %v479 = vadd.f32 %v463, 1.0
        %v480 = vrcp.pop %v464
        %v481 = vmul.f32 %v464, %v480
        %v482 = vsub.f32 1.0, %v481
        %v483 = vmul.f32 %v480, %v482
        %v484 = vadd.f32 %v480, %v483
        %vm485 = vweird.f32 %v464
        %vm486 = vweird.f32 %v480
        %vm487 = vmor %vm485, %vm486
        %v488 = vsel %vm487, %v480, %v484
        %v489 = vand.u32 2147483647, %v464
        %vm490 = vcmp.eq.f32.partialorder %v489, 8.507059e+37
        %v491 = vand.u32 %v464, 2147483648
        %v492 = vor.u32 1.1754944e-38, %v491
        %v493 = vsel %vm490, %v492, %v488
        %v494 = vmul.f32 1.0, %v493
        %v495 = vrcp.pop %v465
        %v496 = vmul.f32 %v465, %v495
        %v497 = vsub.f32 1.0, %v496
        %v498 = vmul.f32 %v495, %v497
        %v499 = vadd.f32 %v495, %v498
        %vm500 = vweird.f32 %v465
        %vm501 = vweird.f32 %v495
        %vm502 = vmor %vm500, %vm501
        %v503 = vsel %vm502, %v495, %v499
        %v504 = vand.u32 2147483647, %v465
        %vm505 = vcmp.eq.f32.partialorder %v504, 8.507059e+37
        %v506 = vand.u32 %v465, 2147483648
        %v507 = vor.u32 1.1754944e-38, %v506
        %v508 = vsel %vm505, %v507, %v503
        %v509 = vmul.f32 1.0, %v508
        %v510 = vrcp.pop %v466
        %v511 = vmul.f32 %v466, %v510
        %v512 = vsub.f32 1.0, %v511
        %v513 = vmul.f32 %v510, %v512
        %v514 = vadd.f32 %v510, %v513
        %vm515 = vweird.f32 %v466
        %vm516 = vweird.f32 %v510
        %vm517 = vmor %vm515, %vm516
        %v518 = vsel %vm517, %v510, %v514
        %v519 = vand.u32 2147483647, %v466
        %vm520 = vcmp.eq.f32.partialorder %v519, 8.507059e+37
        %v521 = vand.u32 %v466, 2147483648
        %v522 = vor.u32 1.1754944e-38, %v521
        %v523 = vsel %vm520, %v522, %v518
        %v524 = vmul.f32 1.0, %v523
        %v525 = vrcp.pop %v467
        %v526 = vmul.f32 %v467, %v525
        %v527 = vsub.f32 1.0, %v526
        %v528 = vmul.f32 %v525, %v527
        %v529 = vadd.f32 %v525, %v528
        %vm530 = vweird.f32 %v467
        %vm531 = vweird.f32 %v525
        %vm532 = vmor %vm530, %vm531
        %v533 = vsel %vm532, %v525, %v529
        %v534 = vand.u32 2147483647, %v467
        %vm535 = vcmp.eq.f32.partialorder %v534, 8.507059e+37
        %v536 = vand.u32 %v467, 2147483648
        %v537 = vor.u32 1.1754944e-38, %v536
        %v538 = vsel %vm535, %v537, %v533
        %v539 = vmul.f32 1.0, %v538
        %v540 = vrcp.pop %v468
        %v541 = vmul.f32 %v468, %v540
        %v542 = vsub.f32 1.0, %v541
        %v543 = vmul.f32 %v540, %v542
        %v544 = vadd.f32 %v540, %v543
        %vm545 = vweird.f32 %v468
        %vm546 = vweird.f32 %v540
        %vm547 = vmor %vm545, %vm546
        %v548 = vsel %vm547, %v540, %v544
        %v549 = vand.u32 2147483647, %v468
        %vm550 = vcmp.eq.f32.partialorder %v549, 8.507059e+37
        %v551 = vand.u32 %v468, 2147483648
        %v552 = vor.u32 1.1754944e-38, %v551
        %v553 = vsel %vm550, %v552, %v548
        %v554 = vmul.f32 1.0, %v553
        %v555 = vrcp.pop %v469
        %v556 = vmul.f32 %v469, %v555
        %v557 = vsub.f32 1.0, %v556
        %v558 = vmul.f32 %v555, %v557
        %v559 = vadd.f32 %v555, %v558
        %vm560 = vweird.f32 %v469
        %vm561 = vweird.f32 %v555
        %vm562 = vmor %vm560, %vm561
        %v563 = vsel %vm562, %v555, %v559
        %v564 = vand.u32 2147483647, %v469
        %vm565 = vcmp.eq.f32.partialorder %v564, 8.507059e+37
        %v566 = vand.u32 %v469, 2147483648
        %v567 = vor.u32 1.1754944e-38, %v566
        %v568 = vsel %vm565, %v567, %v563
        %v569 = vmul.f32 1.0, %v568
        %v570 = vrcp.pop %v470
        %v571 = vmul.f32 %v470, %v570
        %v572 = vsub.f32 1.0, %v571
        %v573 = vmul.f32 %v570, %v572
        %v574 = vadd.f32 %v570, %v573
        %vm575 = vweird.f32 %v470
        %vm576 = vweird.f32 %v570
        %vm577 = vmor %vm575, %vm576
        %v578 = vsel %vm577, %v570, %v574
        %v579 = vand.u32 2147483647, %v470
        %vm580 = vcmp.eq.f32.partialorder %v579, 8.507059e+37
        %v581 = vand.u32 %v470, 2147483648
        %v582 = vor.u32 1.1754944e-38, %v581
        %v583 = vsel %vm580, %v582, %v578
        %v584 = vmul.f32 1.0, %v583
        %v585 = vrcp.pop %v471
        %v586 = vmul.f32 %v471, %v585
        %v587 = vsub.f32 1.0, %v586
        %v588 = vmul.f32 %v585, %v587
        %v589 = vadd.f32 %v585, %v588
        %vm590 = vweird.f32 %v471
        %vm591 = vweird.f32 %v585
        %vm592 = vmor %vm590, %vm591
        %v593 = vsel %vm592, %v585, %v589
        %v594 = vand.u32 2147483647, %v471
        %vm595 = vcmp.eq.f32.partialorder %v594, 8.507059e+37
        %v596 = vand.u32 %v471, 2147483648
        %v597 = vor.u32 1.1754944e-38, %v596
        %v598 = vsel %vm595, %v597, %v593
        %v599 = vmul.f32 1.0, %v598
        %v600 = vrcp.pop %v472
        %v601 = vmul.f32 %v472, %v600
        %v602 = vsub.f32 1.0, %v601
        %v603 = vmul.f32 %v600, %v602
        %v604 = vadd.f32 %v600, %v603
        %vm605 = vweird.f32 %v472
        %vm606 = vweird.f32 %v600
        %vm607 = vmor %vm605, %vm606
        %v608 = vsel %vm607, %v600, %v604
        %v609 = vand.u32 2147483647, %v472
        %vm610 = vcmp.eq.f32.partialorder %v609, 8.507059e+37
        %v611 = vand.u32 %v472, 2147483648
        %v612 = vor.u32 1.1754944e-38, %v611
        %v613 = vsel %vm610, %v612, %v608
        %v614 = vmul.f32 1.0, %v613
        %v615 = vrcp.pop %v473
        %v616 = vmul.f32 %v473, %v615
        %v617 = vsub.f32 1.0, %v616
        %v618 = vmul.f32 %v615, %v617
        %v619 = vadd.f32 %v615, %v618
        %vm620 = vweird.f32 %v473
        %vm621 = vweird.f32 %v615
        %vm622 = vmor %vm620, %vm621
        %v623 = vsel %vm622, %v615, %v619
        %v624 = vand.u32 2147483647, %v473
        %vm625 = vcmp.eq.f32.partialorder %v624, 8.507059e+37
        %v626 = vand.u32 %v473, 2147483648
        %v627 = vor.u32 1.1754944e-38, %v626
        %v628 = vsel %vm625, %v627, %v623
        %v629 = vmul.f32 1.0, %v628
        %v630 = vrcp.pop %v474
        %v631 = vmul.f32 %v474, %v630
        %v632 = vsub.f32 1.0, %v631
        %v633 = vmul.f32 %v630, %v632
        %v634 = vadd.f32 %v630, %v633
        %vm635 = vweird.f32 %v474
        %vm636 = vweird.f32 %v630
        %vm637 = vmor %vm635, %vm636
        %v638 = vsel %vm637, %v630, %v634
        %v639 = vand.u32 2147483647, %v474
        %vm640 = vcmp.eq.f32.partialorder %v639, 8.507059e+37
        %v641 = vand.u32 %v474, 2147483648
        %v642 = vor.u32 1.1754944e-38, %v641
        %v643 = vsel %vm640, %v642, %v638
        %v644 = vmul.f32 1.0, %v643
        %v645 = vrcp.pop %v475
        %v646 = vmul.f32 %v475, %v645
        %v647 = vsub.f32 1.0, %v646
        %v648 = vmul.f32 %v645, %v647
        %v649 = vadd.f32 %v645, %v648
        %vm650 = vweird.f32 %v475
        %vm651 = vweird.f32 %v645
        %vm652 = vmor %vm650, %vm651
        %v653 = vsel %vm652, %v645, %v649
        %v654 = vand.u32 2147483647, %v475
        %vm655 = vcmp.eq.f32.partialorder %v654, 8.507059e+37
        %v656 = vand.u32 %v475, 2147483648
        %v657 = vor.u32 1.1754944e-38, %v656
        %v658 = vsel %vm655, %v657, %v653
        %v659 = vmul.f32 1.0, %v658
        %v660 = vrcp.pop %v476
        %v661 = vmul.f32 %v476, %v660
        %v662 = vsub.f32 1.0, %v661
        %v663 = vmul.f32 %v660, %v662
        %v664 = vadd.f32 %v660, %v663
        %vm665 = vweird.f32 %v476
        %vm666 = vweird.f32 %v660
        %vm667 = vmor %vm665, %vm666
        %v668 = vsel %vm667, %v660, %v664
        %v669 = vand.u32 2147483647, %v476
        %vm670 = vcmp.eq.f32.partialorder %v669, 8.507059e+37
        %v671 = vand.u32 %v476, 2147483648
        %v672 = vor.u32 1.1754944e-38, %v671
        %v673 = vsel %vm670, %v672, %v668
        %v674 = vmul.f32 1.0, %v673
        %v675 = vrcp.pop %v477
        %v676 = vmul.f32 %v477, %v675
        %v677 = vsub.f32 1.0, %v676
        %v678 = vmul.f32 %v675, %v677
        %v679 = vadd.f32 %v675, %v678
        %vm680 = vweird.f32 %v477
        %vm681 = vweird.f32 %v675
        %vm682 = vmor %vm680, %vm681
        %v683 = vsel %vm682, %v675, %v679
        %v684 = vand.u32 2147483647, %v477
        %vm685 = vcmp.eq.f32.partialorder %v684, 8.507059e+37
        %v686 = vand.u32 %v477, 2147483648
        %v687 = vor.u32 1.1754944e-38, %v686
        %v688 = vsel %vm685, %v687, %v683
        %v689 = vmul.f32 1.0, %v688
        %v690 = vrcp.pop %v478
        %v691 = vmul.f32 %v478, %v690
        %v692 = vsub.f32 1.0, %v691
        %v693 = vmul.f32 %v690, %v692
        %v694 = vadd.f32 %v690, %v693
        %vm695 = vweird.f32 %v478
        %vm696 = vweird.f32 %v690
        %vm697 = vmor %vm695, %vm696
        %v698 = vsel %vm697, %v690, %v694
        %v699 = vand.u32 2147483647, %v478
        %vm700 = vcmp.eq.f32.partialorder %v699, 8.507059e+37
        %v701 = vand.u32 %v478, 2147483648
        %v702 = vor.u32 1.1754944e-38, %v701
        %v703 = vsel %vm700, %v702, %v698
        %v704 = vmul.f32 1.0, %v703
        %v705 = vrcp.pop %v479
        %v706 = vmul.f32 %v479, %v705
        %v707 = vsub.f32 1.0, %v706
        %v708 = vmul.f32 %v705, %v707
        %v709 = vadd.f32 %v705, %v708
        %vm710 = vweird.f32 %v479
        %vm711 = vweird.f32 %v705
        %vm712 = vmor %vm710, %vm711
        %v713 = vsel %vm712, %v705, %v709
        %v714 = vand.u32 2147483647, %v479
        %vm715 = vcmp.eq.f32.partialorder %v714, 8.507059e+37
        %v716 = vand.u32 %v479, 2147483648
        %v717 = vor.u32 1.1754944e-38, %v716
        %v718 = vsel %vm715, %v717, %v713
        %v719 = vmul.f32 1.0, %v718
        %v720 = vmul.f32 %v494, 6.2831855
        %v721 = vmul.f32 %v509, 6.2831855
        %v722 = vmul.f32 %v524, 6.2831855
        %v723 = vmul.f32 %v539, 6.2831855
        %v724 = vmul.f32 %v554, 6.2831855
        %v725 = vmul.f32 %v569, 6.2831855
        %v726 = vmul.f32 %v584, 6.2831855
        %v727 = vmul.f32 %v599, 6.2831855
        %v728 = vmul.f32 %v614, 6.2831855
        %v729 = vmul.f32 %v629, 6.2831855
        %v730 = vmul.f32 %v644, 6.2831855
        %v731 = vmul.f32 %v659, 6.2831855
        %v732 = vmul.f32 %v674, 6.2831855
        %v733 = vmul.f32 %v689, 6.2831855
        %v734 = vmul.f32 %v704, 6.2831855
        %v735 = vmul.f32 %v719, 6.2831855
        %v736 = vand.u32 2147483647, %v720
        %vm737 = vcmp.le.f32.partialorder %v736, 0.7853982
        %vm738 = vcmp.lt.s32.totalorder %v720, 0
        %v739 = vand.u32 %v720, 2139095040
        %v740 = vshrl.u32 %v739, 23
        %v741 = vsub.s32 %v740, 127
        %v742 = vand.u32 2147483647, %v720
        %v743 = vand.u32 %v742, 8388607
        %v744 = vor.u32 %v743, 8388608
        %v745 = vsub.s32 0, %v744
        %v746 = vadd.s32 %v741, 1
        %vm747 = vcmp.gt.s32.totalorder %v746, 0
        %v748 = vsel %vm747, %v746, 0
        %v749 = vshrl.u32 %v748, 5
        %v750 = vand.u32 %v748, 31
        %v751 = vsub.s32 32, %v750
        %v752 = vshrl.u32 683565275, %v751
        %v753 = vshll.u32 683565275, %v750
        %v754 = vshrl.u32 2475754826, %v751
        %v755 = vor.u32 %v753, %v754
        %v756 = vshll.u32 2475754826, %v750
        %v757 = vshrl.u32 2131351028, %v751
        %v758 = vor.u32 %v756, %v757
        %v759 = vshll.u32 2131351028, %v750
        %v760 = vshrl.u32 2102212464, %v751
        %v761 = vor.u32 %v759, %v760
        %v762 = vshll.u32 2102212464, %v750
        %v763 = vshrl.u32 920167782, %v751
        %v764 = vor.u32 %v762, %v763
        %v765 = vshll.u32 920167782, %v750
        %v766 = vshrl.u32 1326507024, %v751
        %v767 = vor.u32 %v765, %v766
        %vm768 = vcmp.lt.s32.totalorder %v749, 1
        %vm769 = vcmp.lt.s32.totalorder %v749, 2
        %vm770 = vcmp.lt.s32.totalorder %v749, 3
        %vm771 = vcmp.lt.s32.totalorder %v749, 4
        %v772 = vsel %vm768, %v752, %v755
        %v773 = vsel %vm771, %v761, 2102212464
        %v774 = vsel %vm770, %v758, %v773
        %v775 = vsel %vm769, %v772, %v774
        %v776 = vsel %vm768, %v755, %v758
        %v777 = vsel %vm771, %v764, 920167782
        %v778 = vsel %vm770, %v761, %v777
        %v779 = vsel %vm769, %v776, %v778
        %v780 = vsel %vm768, %v758, %v761
        %v781 = vsel %vm771, %v767, 1326507024
        %v782 = vsel %vm770, %v764, %v781
        %v783 = vsel %vm769, %v780, %v782
        %v784 = vshll.u32 %v744, 8
        %v785 = vand.u32 %v784, 65535
        %v786 = vshrl.u32 %v784, 16
        %v787 = vand.u32 %v783, 65535
        %v788 = vshrl.u32 %v783, 16
        %v789 = vmul.u32 %v785, %v787
        %v790 = vmul.u32 %v785, %v788
        %v791 = vmul.u32 %v786, %v787
        %v792 = vmul.u32 %v786, %v788
        %v793 = vshll.u32 %v790, 16
        %v794 = vshrl.u32 %v790, 16
        %v795 = vshll.u32 %v791, 16
        %v796 = vshrl.u32 %v791, 16
        %vm797 = vc.u32 %v789, %v793
        %v798 = vsel %vm797, 1, 0
        %v799 = vadd.s32 %v789, %v793
        %v800 = vadd.s32 %v792, %v798
        %vm801 = vc.u32 %v799, %v795
        %v802 = vsel %vm801, 1, 0
        %v803 = vadd.s32 %v799, %v795
        %v804 = vadd.s32 %v800, %v802
        %v805 = vadd.s32 %v804, %v794
        %v806 = vadd.s32 %v805, %v796
        %v807 = vand.u32 %v784, 65535
        %v808 = vshrl.u32 %v784, 16
        %v809 = vand.u32 %v779, 65535
        %v810 = vshrl.u32 %v779, 16
        %v811 = vmul.u32 %v807, %v809
        %v812 = vmul.u32 %v807, %v810
        %v813 = vmul.u32 %v808, %v809
        %v814 = vmul.u32 %v808, %v810
        %v815 = vshll.u32 %v812, 16
        %v816 = vshrl.u32 %v812, 16
        %v817 = vshll.u32 %v813, 16
        %v818 = vshrl.u32 %v813, 16
        %vm819 = vc.u32 %v811, %v815
        %v820 = vsel %vm819, 1, 0
        %v821 = vadd.s32 %v811, %v815
        %v822 = vadd.s32 %v814, %v820
        %vm823 = vc.u32 %v821, %v817
        %v824 = vsel %vm823, 1, 0
        %v825 = vadd.s32 %v821, %v817
        %v826 = vadd.s32 %v822, %v824
        %v827 = vadd.s32 %v826, %v816
        %v828 = vadd.s32 %v827, %v818
        %v829 = vmul.u32 %v784, %v775
        %v830 = vadd.s32 %v806, %v825
        %vm831 = vc.u32 %v806, %v825
        %v832 = vadd.s32 %v828, 1
        %v833 = vsel %vm831, %v832, %v828
        %v834 = vadd.s32 %v829, %v833
        %v835 = vadd.s32 %v834, 536870912
        %v836 = vshrl.u32 %v835, 30
        %v837 = vshll.u32 %v836, 30
        %v838 = vsub.s32 %v834, %v837
        %vm839 = vcmp.lt.s32.totalorder %v838, 0
        %v840 = vsub.s32 0, %v838
        %v841 = vsel %vm839, %v840, %v838
        %v842 = vclz %v841
        %v843 = vsub.s32 %v842, 2
        %vm844 = vcmp.gt.s32.totalorder 0, %v843
        %v845 = vsel %vm844, 0, %v843
        %v846 = vsub.s32 32, %v845
        %v847 = vshll.u32 %v838, %v845
        %v848 = vshrl.u32 %v830, %v846
        %v849 = vor.u32 %v847, %v848
        %v850 = vsub.s32 4294967266, %v845
        %v851 = vadd.s32 %v850, 127
        %v852 = vshll.u32 %v851, 23
        %v853 = vor.u32 4788187, %v852
        %v854 = vand.u32 2147483647, %v853
        %v856 = vcvt.s32.f32 %v849
        %v857 = vmul.f32 %v856, %v854
        %v858 = vxor.u32 %v857, 2147483648
        %v859 = vsel %vm738, %v858, %v857
        %v860 = vsub.s32 4, %v836
        %v861 = vsel %vm738, %v860, %v836
        %v862 = vsel %vm737, %v720, %v859
        %v863 = vsel %vm737, 0, %v861
        %v864 = vmul.f32 %v862, %v862
        %v865 = vmul.f32 %v864, -0.001358992
        %v866 = vadd.f32 %v865, 0.041655596
        %v867 = vmul.f32 %v864, %v866
        %v868 = vadd.f32 %v867, -0.4999988
        %v869 = vmul.f32 %v864, %v868
        %v870 = vadd.f32 1.0, %v869
        %v871 = vmul.f32 %v862, %v862
        %v872 = vmul.f32 %v871, -0.00019511016
        %v873 = vadd.f32 %v872, 0.008332121
        %v874 = vmul.f32 %v871, %v873
        %v875 = vadd.f32 %v874, -0.16666654
        %v876 = vmul.f32 %v871, %v875
        %v877 = vadd.f32 %v876, 1.0
        %v878 = vmul.f32 %v877, %v862
        %vm879 = vweird.f32 %v720
        %v880 = vand.u32 %v863, 3
        %vm881 = vcmp.lt.s32.totalorder %v880, 2
        %vm882 = vcmp.eq.s32.totalorder %v880, 0
        %v883 = vxor.u32 %v878, 2147483648
        %v884 = vsel %vm882, %v870, %v883
        %vm885 = vcmp.eq.s32.totalorder %v880, 2
        %v886 = vxor.u32 %v870, 2147483648
        %v887 = vsel %vm885, %v886, %v878
        %v888 = vsel %vm881, %v884, %v887
        %v889 = vsel %vm879, nan, %v888
        %v890 = vand.u32 2147483647, %v721
        %vm891 = vcmp.le.f32.partialorder %v890, 0.7853982
        %vm892 = vcmp.lt.s32.totalorder %v721, 0
        %v893 = vand.u32 %v721, 2139095040
        %v894 = vshrl.u32 %v893, 23
        %v895 = vsub.s32 %v894, 127
        %v896 = vand.u32 2147483647, %v721
        %v897 = vand.u32 %v896, 8388607
        %v898 = vor.u32 %v897, 8388608
        %v899 = vsub.s32 0, %v898
        %v900 = vadd.s32 %v895, 1
        %vm901 = vcmp.gt.s32.totalorder %v900, 0
        %v902 = vsel %vm901, %v900, 0
        %v903 = vshrl.u32 %v902, 5
        %v904 = vand.u32 %v902, 31
        %v905 = vsub.s32 32, %v904
        %v906 = vshrl.u32 683565275, %v905
        %v907 = vshll.u32 683565275, %v904
        %v908 = vshrl.u32 2475754826, %v905
        %v909 = vor.u32 %v907, %v908
        %v910 = vshll.u32 2475754826, %v904
        %v911 = vshrl.u32 2131351028, %v905
        %v912 = vor.u32 %v910, %v911
        %v913 = vshll.u32 2131351028, %v904
        %v914 = vshrl.u32 2102212464, %v905
        %v915 = vor.u32 %v913, %v914
        %v916 = vshll.u32 2102212464, %v904
        %v917 = vshrl.u32 920167782, %v905
        %v918 = vor.u32 %v916, %v917
        %v919 = vshll.u32 920167782, %v904
        %v920 = vshrl.u32 1326507024, %v905
        %v921 = vor.u32 %v919, %v920
        %vm922 = vcmp.lt.s32.totalorder %v903, 1
        %vm923 = vcmp.lt.s32.totalorder %v903, 2
        %vm924 = vcmp.lt.s32.totalorder %v903, 3
        %vm925 = vcmp.lt.s32.totalorder %v903, 4
        %v926 = vsel %vm922, %v906, %v909
        %v927 = vsel %vm925, %v915, 2102212464
        %v928 = vsel %vm924, %v912, %v927
        %v929 = vsel %vm923, %v926, %v928
        %v930 = vsel %vm922, %v909, %v912
        %v931 = vsel %vm925, %v918, 920167782
        %v932 = vsel %vm924, %v915, %v931
        %v933 = vsel %vm923, %v930, %v932
        %v934 = vsel %vm922, %v912, %v915
        %v935 = vsel %vm925, %v921, 1326507024
        %v936 = vsel %vm924, %v918, %v935
        %v937 = vsel %vm923, %v934, %v936
        %v938 = vshll.u32 %v898, 8
        %v939 = vand.u32 %v938, 65535
        %v940 = vshrl.u32 %v938, 16
        %v941 = vand.u32 %v937, 65535
        %v942 = vshrl.u32 %v937, 16
        %v943 = vmul.u32 %v939, %v941
        %v944 = vmul.u32 %v939, %v942
        %v945 = vmul.u32 %v940, %v941
        %v946 = vmul.u32 %v940, %v942
        %v947 = vshll.u32 %v944, 16
        %v948 = vshrl.u32 %v944, 16
        %v949 = vshll.u32 %v945, 16
        %v950 = vshrl.u32 %v945, 16
        %vm951 = vc.u32 %v943, %v947
        %v952 = vsel %vm951, 1, 0
        %v953 = vadd.s32 %v943, %v947
        %v954 = vadd.s32 %v946, %v952
        %vm955 = vc.u32 %v953, %v949
        %v956 = vsel %vm955, 1, 0
        %v957 = vadd.s32 %v953, %v949
        %v958 = vadd.s32 %v954, %v956
        %v959 = vadd.s32 %v958, %v948
        %v960 = vadd.s32 %v959, %v950
        %v961 = vand.u32 %v938, 65535
        %v962 = vshrl.u32 %v938, 16
        %v963 = vand.u32 %v933, 65535
        %v964 = vshrl.u32 %v933, 16
        %v965 = vmul.u32 %v961, %v963
        %v966 = vmul.u32 %v961, %v964
        %v967 = vmul.u32 %v962, %v963
        %v968 = vmul.u32 %v962, %v964
        %v969 = vshll.u32 %v966, 16
        %v970 = vshrl.u32 %v966, 16
        %v971 = vshll.u32 %v967, 16
        %v972 = vshrl.u32 %v967, 16
        %vm973 = vc.u32 %v965, %v969
        %v974 = vsel %vm973, 1, 0
        %v975 = vadd.s32 %v965, %v969
        %v976 = vadd.s32 %v968, %v974
        %vm977 = vc.u32 %v975, %v971
        %v978 = vsel %vm977, 1, 0
        %v979 = vadd.s32 %v975, %v971
        %v980 = vadd.s32 %v976, %v978
        %v981 = vadd.s32 %v980, %v970
        %v982 = vadd.s32 %v981, %v972
        %v983 = vmul.u32 %v938, %v929
        %v984 = vadd.s32 %v960, %v979
        %vm985 = vc.u32 %v960, %v979
        %v986 = vadd.s32 %v982, 1
        %v987 = vsel %vm985, %v986, %v982
        %v988 = vadd.s32 %v983, %v987
        %v989 = vadd.s32 %v988, 536870912
        %v990 = vshrl.u32 %v989, 30
        %v991 = vshll.u32 %v990, 30
        %v992 = vsub.s32 %v988, %v991
        %vm993 = vcmp.lt.s32.totalorder %v992, 0
        %v994 = vsub.s32 0, %v992
        %v995 = vsel %vm993, %v994, %v992
        %v996 = vclz %v995
        %v997 = vsub.s32 %v996, 2
        %vm998 = vcmp.gt.s32.totalorder 0, %v997
        %v999 = vsel %vm998, 0, %v997
        %v1000 = vsub.s32 32, %v999
        %v1001 = vshll.u32 %v992, %v999
        %v1002 = vshrl.u32 %v984, %v1000
        %v1003 = vor.u32 %v1001, %v1002
        %v1004 = vsub.s32 4294967266, %v999
        %v1005 = vadd.s32 %v1004, 127
        %v1006 = vshll.u32 %v1005, 23
        %v1007 = vor.u32 4788187, %v1006
        %v1008 = vand.u32 2147483647, %v1007
        %v1010 = vcvt.s32.f32 %v1003
        %v1011 = vmul.f32 %v1010, %v1008
        %v1012 = vxor.u32 %v1011, 2147483648
        %v1013 = vsel %vm892, %v1012, %v1011
        %v1014 = vsub.s32 4, %v990
        %v1015 = vsel %vm892, %v1014, %v990
        %v1016 = vsel %vm891, %v721, %v1013
        %v1017 = vsel %vm891, 0, %v1015
        %v1018 = vmul.f32 %v1016, %v1016
        %v1019 = vmul.f32 %v1018, -0.001358992
        %v1020 = vadd.f32 %v1019, 0.041655596
        %v1021 = vmul.f32 %v1018, %v1020
        %v1022 = vadd.f32 %v1021, -0.4999988
        %v1023 = vmul.f32 %v1018, %v1022
        %v1024 = vadd.f32 1.0, %v1023
        %v1025 = vmul.f32 %v1016, %v1016
        %v1026 = vmul.f32 %v1025, -0.00019511016
        %v1027 = vadd.f32 %v1026, 0.008332121
        %v1028 = vmul.f32 %v1025, %v1027
        %v1029 = vadd.f32 %v1028, -0.16666654
        %v1030 = vmul.f32 %v1025, %v1029
        %v1031 = vadd.f32 %v1030, 1.0
        %v1032 = vmul.f32 %v1031, %v1016
        %vm1033 = vweird.f32 %v721
        %v1034 = vand.u32 %v1017, 3
        %vm1035 = vcmp.lt.s32.totalorder %v1034, 2
        %vm1036 = vcmp.eq.s32.totalorder %v1034, 0
        %v1037 = vxor.u32 %v1032, 2147483648
        %v1038 = vsel %vm1036, %v1024, %v1037
        %vm1039 = vcmp.eq.s32.totalorder %v1034, 2
        %v1040 = vxor.u32 %v1024, 2147483648
        %v1041 = vsel %vm1039, %v1040, %v1032
        %v1042 = vsel %vm1035, %v1038, %v1041
        %v1043 = vsel %vm1033, nan, %v1042
        %v1044 = vand.u32 2147483647, %v722
        %vm1045 = vcmp.le.f32.partialorder %v1044, 0.7853982
        %vm1046 = vcmp.lt.s32.totalorder %v722, 0
        %v1047 = vand.u32 %v722, 2139095040
        %v1048 = vshrl.u32 %v1047, 23
        %v1049 = vsub.s32 %v1048, 127
        %v1050 = vand.u32 2147483647, %v722
        %v1051 = vand.u32 %v1050, 8388607
        %v1052 = vor.u32 %v1051, 8388608
        %v1053 = vsub.s32 0, %v1052
        %v1054 = vadd.s32 %v1049, 1
        %vm1055 = vcmp.gt.s32.totalorder %v1054, 0
        %v1056 = vsel %vm1055, %v1054, 0
        %v1057 = vshrl.u32 %v1056, 5
        %v1058 = vand.u32 %v1056, 31
        %v1059 = vsub.s32 32, %v1058
        %v1060 = vshrl.u32 683565275, %v1059
        %v1061 = vshll.u32 683565275, %v1058
        %v1062 = vshrl.u32 2475754826, %v1059
        %v1063 = vor.u32 %v1061, %v1062
        %v1064 = vshll.u32 2475754826, %v1058
        %v1065 = vshrl.u32 2131351028, %v1059
        %v1066 = vor.u32 %v1064, %v1065
        %v1067 = vshll.u32 2131351028, %v1058
        %v1068 = vshrl.u32 2102212464, %v1059
        %v1069 = vor.u32 %v1067, %v1068
        %v1070 = vshll.u32 2102212464, %v1058
        %v1071 = vshrl.u32 920167782, %v1059
        %v1072 = vor.u32 %v1070, %v1071
        %v1073 = vshll.u32 920167782, %v1058
        %v1074 = vshrl.u32 1326507024, %v1059
        %v1075 = vor.u32 %v1073, %v1074
        %vm1076 = vcmp.lt.s32.totalorder %v1057, 1
        %vm1077 = vcmp.lt.s32.totalorder %v1057, 2
        %vm1078 = vcmp.lt.s32.totalorder %v1057, 3
        %vm1079 = vcmp.lt.s32.totalorder %v1057, 4
        %v1080 = vsel %vm1076, %v1060, %v1063
        %v1081 = vsel %vm1079, %v1069, 2102212464
        %v1082 = vsel %vm1078, %v1066, %v1081
        %v1083 = vsel %vm1077, %v1080, %v1082
        %v1084 = vsel %vm1076, %v1063, %v1066
        %v1085 = vsel %vm1079, %v1072, 920167782
        %v1086 = vsel %vm1078, %v1069, %v1085
        %v1087 = vsel %vm1077, %v1084, %v1086
        %v1088 = vsel %vm1076, %v1066, %v1069
        %v1089 = vsel %vm1079, %v1075, 1326507024
        %v1090 = vsel %vm1078, %v1072, %v1089
        %v1091 = vsel %vm1077, %v1088, %v1090
        %v1092 = vshll.u32 %v1052, 8
        %v1093 = vand.u32 %v1092, 65535
        %v1094 = vshrl.u32 %v1092, 16
        %v1095 = vand.u32 %v1091, 65535
        %v1096 = vshrl.u32 %v1091, 16
        %v1097 = vmul.u32 %v1093, %v1095
        %v1098 = vmul.u32 %v1093, %v1096
        %v1099 = vmul.u32 %v1094, %v1095
        %v1100 = vmul.u32 %v1094, %v1096
        %v1101 = vshll.u32 %v1098, 16
        %v1102 = vshrl.u32 %v1098, 16
        %v1103 = vshll.u32 %v1099, 16
        %v1104 = vshrl.u32 %v1099, 16
        %vm1105 = vc.u32 %v1097, %v1101
        %v1106 = vsel %vm1105, 1, 0
        %v1107 = vadd.s32 %v1097, %v1101
        %v1108 = vadd.s32 %v1100, %v1106
        %vm1109 = vc.u32 %v1107, %v1103
        %v1110 = vsel %vm1109, 1, 0
        %v1111 = vadd.s32 %v1107, %v1103
        %v1112 = vadd.s32 %v1108, %v1110
        %v1113 = vadd.s32 %v1112, %v1102
        %v1114 = vadd.s32 %v1113, %v1104
        %v1115 = vand.u32 %v1092, 65535
        %v1116 = vshrl.u32 %v1092, 16
        %v1117 = vand.u32 %v1087, 65535
        %v1118 = vshrl.u32 %v1087, 16
        %v1119 = vmul.u32 %v1115, %v1117
        %v1120 = vmul.u32 %v1115, %v1118
        %v1121 = vmul.u32 %v1116, %v1117
        %v1122 = vmul.u32 %v1116, %v1118
        %v1123 = vshll.u32 %v1120, 16
        %v1124 = vshrl.u32 %v1120, 16
        %v1125 = vshll.u32 %v1121, 16
        %v1126 = vshrl.u32 %v1121, 16
        %vm1127 = vc.u32 %v1119, %v1123
        %v1128 = vsel %vm1127, 1, 0
        %v1129 = vadd.s32 %v1119, %v1123
        %v1130 = vadd.s32 %v1122, %v1128
        %vm1131 = vc.u32 %v1129, %v1125
        %v1132 = vsel %vm1131, 1, 0
        %v1133 = vadd.s32 %v1129, %v1125
        %v1134 = vadd.s32 %v1130, %v1132
        %v1135 = vadd.s32 %v1134, %v1124
        %v1136 = vadd.s32 %v1135, %v1126
        %v1137 = vmul.u32 %v1092, %v1083
        %v1138 = vadd.s32 %v1114, %v1133
        %vm1139 = vc.u32 %v1114, %v1133
        %v1140 = vadd.s32 %v1136, 1
        %v1141 = vsel %vm1139, %v1140, %v1136
        %v1142 = vadd.s32 %v1137, %v1141
        %v1143 = vadd.s32 %v1142, 536870912
        %v1144 = vshrl.u32 %v1143, 30
        %v1145 = vshll.u32 %v1144, 30
        %v1146 = vsub.s32 %v1142, %v1145
        %vm1147 = vcmp.lt.s32.totalorder %v1146, 0
        %v1148 = vsub.s32 0, %v1146
        %v1149 = vsel %vm1147, %v1148, %v1146
        %v1150 = vclz %v1149
        %v1151 = vsub.s32 %v1150, 2
        %vm1152 = vcmp.gt.s32.totalorder 0, %v1151
        %v1153 = vsel %vm1152, 0, %v1151
        %v1154 = vsub.s32 32, %v1153
        %v1155 = vshll.u32 %v1146, %v1153
        %v1156 = vshrl.u32 %v1138, %v1154
        %v1157 = vor.u32 %v1155, %v1156
        %v1158 = vsub.s32 4294967266, %v1153
        %v1159 = vadd.s32 %v1158, 127
        %v1160 = vshll.u32 %v1159, 23
        %v1161 = vor.u32 4788187, %v1160
        %v1162 = vand.u32 2147483647, %v1161
        %v1164 = vcvt.s32.f32 %v1157
        %v1165 = vmul.f32 %v1164, %v1162
        %v1166 = vxor.u32 %v1165, 2147483648
        %v1167 = vsel %vm1046, %v1166, %v1165
        %v1168 = vsub.s32 4, %v1144
        %v1169 = vsel %vm1046, %v1168, %v1144
        %v1170 = vsel %vm1045, %v722, %v1167
        %v1171 = vsel %vm1045, 0, %v1169
        %v1172 = vmul.f32 %v1170, %v1170
        %v1173 = vmul.f32 %v1172, -0.001358992
        %v1174 = vadd.f32 %v1173, 0.041655596
        %v1175 = vmul.f32 %v1172, %v1174
        %v1176 = vadd.f32 %v1175, -0.4999988
        %v1177 = vmul.f32 %v1172, %v1176
        %v1178 = vadd.f32 1.0, %v1177
        %v1179 = vmul.f32 %v1170, %v1170
        %v1180 = vmul.f32 %v1179, -0.00019511016
        %v1181 = vadd.f32 %v1180, 0.008332121
        %v1182 = vmul.f32 %v1179, %v1181
        %v1183 = vadd.f32 %v1182, -0.16666654
        %v1184 = vmul.f32 %v1179, %v1183
        %v1185 = vadd.f32 %v1184, 1.0
        %v1186 = vmul.f32 %v1185, %v1170
        %vm1187 = vweird.f32 %v722
        %v1188 = vand.u32 %v1171, 3
        %vm1189 = vcmp.lt.s32.totalorder %v1188, 2
        %vm1190 = vcmp.eq.s32.totalorder %v1188, 0
        %v1191 = vxor.u32 %v1186, 2147483648
        %v1192 = vsel %vm1190, %v1178, %v1191
        %vm1193 = vcmp.eq.s32.totalorder %v1188, 2
        %v1194 = vxor.u32 %v1178, 2147483648
        %v1195 = vsel %vm1193, %v1194, %v1186
        %v1196 = vsel %vm1189, %v1192, %v1195
        %v1197 = vsel %vm1187, nan, %v1196
        %v1198 = vand.u32 2147483647, %v723
        %vm1199 = vcmp.le.f32.partialorder %v1198, 0.7853982
        %vm1200 = vcmp.lt.s32.totalorder %v723, 0
        %v1201 = vand.u32 %v723, 2139095040
        %v1202 = vshrl.u32 %v1201, 23
        %v1203 = vsub.s32 %v1202, 127
        %v1204 = vand.u32 2147483647, %v723
        %v1205 = vand.u32 %v1204, 8388607
        %v1206 = vor.u32 %v1205, 8388608
        %v1207 = vsub.s32 0, %v1206
        %v1208 = vadd.s32 %v1203, 1
        %vm1209 = vcmp.gt.s32.totalorder %v1208, 0
        %v1210 = vsel %vm1209, %v1208, 0
        %v1211 = vshrl.u32 %v1210, 5
        %v1212 = vand.u32 %v1210, 31
        %v1213 = vsub.s32 32, %v1212
        %v1214 = vshrl.u32 683565275, %v1213
        %v1215 = vshll.u32 683565275, %v1212
        %v1216 = vshrl.u32 2475754826, %v1213
        %v1217 = vor.u32 %v1215, %v1216
        %v1218 = vshll.u32 2475754826, %v1212
        %v1219 = vshrl.u32 2131351028, %v1213
        %v1220 = vor.u32 %v1218, %v1219
        %v1221 = vshll.u32 2131351028, %v1212
        %v1222 = vshrl.u32 2102212464, %v1213
        %v1223 = vor.u32 %v1221, %v1222
        %v1224 = vshll.u32 2102212464, %v1212
        %v1225 = vshrl.u32 920167782, %v1213
        %v1226 = vor.u32 %v1224, %v1225
        %v1227 = vshll.u32 920167782, %v1212
        %v1228 = vshrl.u32 1326507024, %v1213
        %v1229 = vor.u32 %v1227, %v1228
        %vm1230 = vcmp.lt.s32.totalorder %v1211, 1
        %vm1231 = vcmp.lt.s32.totalorder %v1211, 2
        %vm1232 = vcmp.lt.s32.totalorder %v1211, 3
        %vm1233 = vcmp.lt.s32.totalorder %v1211, 4
        %v1234 = vsel %vm1230, %v1214, %v1217
        %v1235 = vsel %vm1233, %v1223, 2102212464
        %v1236 = vsel %vm1232, %v1220, %v1235
        %v1237 = vsel %vm1231, %v1234, %v1236
        %v1238 = vsel %vm1230, %v1217, %v1220
        %v1239 = vsel %vm1233, %v1226, 920167782
        %v1240 = vsel %vm1232, %v1223, %v1239
        %v1241 = vsel %vm1231, %v1238, %v1240
        %v1242 = vsel %vm1230, %v1220, %v1223
        %v1243 = vsel %vm1233, %v1229, 1326507024
        %v1244 = vsel %vm1232, %v1226, %v1243
        %v1245 = vsel %vm1231, %v1242, %v1244
        %v1246 = vshll.u32 %v1206, 8
        %v1247 = vand.u32 %v1246, 65535
        %v1248 = vshrl.u32 %v1246, 16
        %v1249 = vand.u32 %v1245, 65535
        %v1250 = vshrl.u32 %v1245, 16
        %v1251 = vmul.u32 %v1247, %v1249
        %v1252 = vmul.u32 %v1247, %v1250
        %v1253 = vmul.u32 %v1248, %v1249
        %v1254 = vmul.u32 %v1248, %v1250
        %v1255 = vshll.u32 %v1252, 16
        %v1256 = vshrl.u32 %v1252, 16
        %v1257 = vshll.u32 %v1253, 16
        %v1258 = vshrl.u32 %v1253, 16
        %vm1259 = vc.u32 %v1251, %v1255
        %v1260 = vsel %vm1259, 1, 0
        %v1261 = vadd.s32 %v1251, %v1255
        %v1262 = vadd.s32 %v1254, %v1260
        %vm1263 = vc.u32 %v1261, %v1257
        %v1264 = vsel %vm1263, 1, 0
        %v1265 = vadd.s32 %v1261, %v1257
        %v1266 = vadd.s32 %v1262, %v1264
        %v1267 = vadd.s32 %v1266, %v1256
        %v1268 = vadd.s32 %v1267, %v1258
        %v1269 = vand.u32 %v1246, 65535
        %v1270 = vshrl.u32 %v1246, 16
        %v1271 = vand.u32 %v1241, 65535
        %v1272 = vshrl.u32 %v1241, 16
        %v1273 = vmul.u32 %v1269, %v1271
        %v1274 = vmul.u32 %v1269, %v1272
        %v1275 = vmul.u32 %v1270, %v1271
        %v1276 = vmul.u32 %v1270, %v1272
        %v1277 = vshll.u32 %v1274, 16
        %v1278 = vshrl.u32 %v1274, 16
        %v1279 = vshll.u32 %v1275, 16
        %v1280 = vshrl.u32 %v1275, 16
        %vm1281 = vc.u32 %v1273, %v1277
        %v1282 = vsel %vm1281, 1, 0
        %v1283 = vadd.s32 %v1273, %v1277
        %v1284 = vadd.s32 %v1276, %v1282
        %vm1285 = vc.u32 %v1283, %v1279
        %v1286 = vsel %vm1285, 1, 0
        %v1287 = vadd.s32 %v1283, %v1279
        %v1288 = vadd.s32 %v1284, %v1286
        %v1289 = vadd.s32 %v1288, %v1278
        %v1290 = vadd.s32 %v1289, %v1280
        %v1291 = vmul.u32 %v1246, %v1237
        %v1292 = vadd.s32 %v1268, %v1287
        %vm1293 = vc.u32 %v1268, %v1287
        %v1294 = vadd.s32 %v1290, 1
        %v1295 = vsel %vm1293, %v1294, %v1290
        %v1296 = vadd.s32 %v1291, %v1295
        %v1297 = vadd.s32 %v1296, 536870912
        %v1298 = vshrl.u32 %v1297, 30
        %v1299 = vshll.u32 %v1298, 30
        %v1300 = vsub.s32 %v1296, %v1299
        %vm1301 = vcmp.lt.s32.totalorder %v1300, 0
        %v1302 = vsub.s32 0, %v1300
        %v1303 = vsel %vm1301, %v1302, %v1300
        %v1304 = vclz %v1303
        %v1305 = vsub.s32 %v1304, 2
        %vm1306 = vcmp.gt.s32.totalorder 0, %v1305
        %v1307 = vsel %vm1306, 0, %v1305
        %v1308 = vsub.s32 32, %v1307
        %v1309 = vshll.u32 %v1300, %v1307
        %v1310 = vshrl.u32 %v1292, %v1308
        %v1311 = vor.u32 %v1309, %v1310
        %v1312 = vsub.s32 4294967266, %v1307
        %v1313 = vadd.s32 %v1312, 127
        %v1314 = vshll.u32 %v1313, 23
        %v1315 = vor.u32 4788187, %v1314
        %v1316 = vand.u32 2147483647, %v1315
        %v1318 = vcvt.s32.f32 %v1311
        %v1319 = vmul.f32 %v1318, %v1316
        %v1320 = vxor.u32 %v1319, 2147483648
        %v1321 = vsel %vm1200, %v1320, %v1319
        %v1322 = vsub.s32 4, %v1298
        %v1323 = vsel %vm1200, %v1322, %v1298
        %v1324 = vsel %vm1199, %v723, %v1321
        %v1325 = vsel %vm1199, 0, %v1323
        %v1326 = vmul.f32 %v1324, %v1324
        %v1327 = vmul.f32 %v1326, -0.001358992
        %v1328 = vadd.f32 %v1327, 0.041655596
        %v1329 = vmul.f32 %v1326, %v1328
        %v1330 = vadd.f32 %v1329, -0.4999988
        %v1331 = vmul.f32 %v1326, %v1330
        %v1332 = vadd.f32 1.0, %v1331
        %v1333 = vmul.f32 %v1324, %v1324
        %v1334 = vmul.f32 %v1333, -0.00019511016
        %v1335 = vadd.f32 %v1334, 0.008332121
        %v1336 = vmul.f32 %v1333, %v1335
        %v1337 = vadd.f32 %v1336, -0.16666654
        %v1338 = vmul.f32 %v1333, %v1337
        %v1339 = vadd.f32 %v1338, 1.0
        %v1340 = vmul.f32 %v1339, %v1324
        %vm1341 = vweird.f32 %v723
        %v1342 = vand.u32 %v1325, 3
        %vm1343 = vcmp.lt.s32.totalorder %v1342, 2
        %vm1344 = vcmp.eq.s32.totalorder %v1342, 0
        %v1345 = vxor.u32 %v1340, 2147483648
        %v1346 = vsel %vm1344, %v1332, %v1345
        %vm1347 = vcmp.eq.s32.totalorder %v1342, 2
        %v1348 = vxor.u32 %v1332, 2147483648
        %v1349 = vsel %vm1347, %v1348, %v1340
        %v1350 = vsel %vm1343, %v1346, %v1349
        %v1351 = vsel %vm1341, nan, %v1350
        %v1352 = vand.u32 2147483647, %v724
        %vm1353 = vcmp.le.f32.partialorder %v1352, 0.7853982
        %vm1354 = vcmp.lt.s32.totalorder %v724, 0
        %v1355 = vand.u32 %v724, 2139095040
        %v1356 = vshrl.u32 %v1355, 23
        %v1357 = vsub.s32 %v1356, 127
        %v1358 = vand.u32 2147483647, %v724
        %v1359 = vand.u32 %v1358, 8388607
        %v1360 = vor.u32 %v1359, 8388608
        %v1361 = vsub.s32 0, %v1360
        %v1362 = vadd.s32 %v1357, 1
        %vm1363 = vcmp.gt.s32.totalorder %v1362, 0
        %v1364 = vsel %vm1363, %v1362, 0
        %v1365 = vshrl.u32 %v1364, 5
        %v1366 = vand.u32 %v1364, 31
        %v1367 = vsub.s32 32, %v1366
        %v1368 = vshrl.u32 683565275, %v1367
        %v1369 = vshll.u32 683565275, %v1366
        %v1370 = vshrl.u32 2475754826, %v1367
        %v1371 = vor.u32 %v1369, %v1370
        %v1372 = vshll.u32 2475754826, %v1366
        %v1373 = vshrl.u32 2131351028, %v1367
        %v1374 = vor.u32 %v1372, %v1373
        %v1375 = vshll.u32 2131351028, %v1366
        %v1376 = vshrl.u32 2102212464, %v1367
        %v1377 = vor.u32 %v1375, %v1376
        %v1378 = vshll.u32 2102212464, %v1366
        %v1379 = vshrl.u32 920167782, %v1367
        %v1380 = vor.u32 %v1378, %v1379
        %v1381 = vshll.u32 920167782, %v1366
        %v1382 = vshrl.u32 1326507024, %v1367
        %v1383 = vor.u32 %v1381, %v1382
        %vm1384 = vcmp.lt.s32.totalorder %v1365, 1
        %vm1385 = vcmp.lt.s32.totalorder %v1365, 2
        %vm1386 = vcmp.lt.s32.totalorder %v1365, 3
        %vm1387 = vcmp.lt.s32.totalorder %v1365, 4
        %v1388 = vsel %vm1384, %v1368, %v1371
        %v1389 = vsel %vm1387, %v1377, 2102212464
        %v1390 = vsel %vm1386, %v1374, %v1389
        %v1391 = vsel %vm1385, %v1388, %v1390
        %v1392 = vsel %vm1384, %v1371, %v1374
        %v1393 = vsel %vm1387, %v1380, 920167782
        %v1394 = vsel %vm1386, %v1377, %v1393
        %v1395 = vsel %vm1385, %v1392, %v1394
        %v1396 = vsel %vm1384, %v1374, %v1377
        %v1397 = vsel %vm1387, %v1383, 1326507024
        %v1398 = vsel %vm1386, %v1380, %v1397
        %v1399 = vsel %vm1385, %v1396, %v1398
        %v1400 = vshll.u32 %v1360, 8
        %v1401 = vand.u32 %v1400, 65535
        %v1402 = vshrl.u32 %v1400, 16
        %v1403 = vand.u32 %v1399, 65535
        %v1404 = vshrl.u32 %v1399, 16
        %v1405 = vmul.u32 %v1401, %v1403
        %v1406 = vmul.u32 %v1401, %v1404
        %v1407 = vmul.u32 %v1402, %v1403
        %v1408 = vmul.u32 %v1402, %v1404
        %v1409 = vshll.u32 %v1406, 16
        %v1410 = vshrl.u32 %v1406, 16
        %v1411 = vshll.u32 %v1407, 16
        %v1412 = vshrl.u32 %v1407, 16
        %vm1413 = vc.u32 %v1405, %v1409
        %v1414 = vsel %vm1413, 1, 0
        %v1415 = vadd.s32 %v1405, %v1409
        %v1416 = vadd.s32 %v1408, %v1414
        %vm1417 = vc.u32 %v1415, %v1411
        %v1418 = vsel %vm1417, 1, 0
        %v1419 = vadd.s32 %v1415, %v1411
        %v1420 = vadd.s32 %v1416, %v1418
        %v1421 = vadd.s32 %v1420, %v1410
        %v1422 = vadd.s32 %v1421, %v1412
        %v1423 = vand.u32 %v1400, 65535
        %v1424 = vshrl.u32 %v1400, 16
        %v1425 = vand.u32 %v1395, 65535
        %v1426 = vshrl.u32 %v1395, 16
        %v1427 = vmul.u32 %v1423, %v1425
        %v1428 = vmul.u32 %v1423, %v1426
        %v1429 = vmul.u32 %v1424, %v1425
        %v1430 = vmul.u32 %v1424, %v1426
        %v1431 = vshll.u32 %v1428, 16
        %v1432 = vshrl.u32 %v1428, 16
        %v1433 = vshll.u32 %v1429, 16
        %v1434 = vshrl.u32 %v1429, 16
        %vm1435 = vc.u32 %v1427, %v1431
        %v1436 = vsel %vm1435, 1, 0
        %v1437 = vadd.s32 %v1427, %v1431
        %v1438 = vadd.s32 %v1430, %v1436
        %vm1439 = vc.u32 %v1437, %v1433
        %v1440 = vsel %vm1439, 1, 0
        %v1441 = vadd.s32 %v1437, %v1433
        %v1442 = vadd.s32 %v1438, %v1440
        %v1443 = vadd.s32 %v1442, %v1432
        %v1444 = vadd.s32 %v1443, %v1434
        %v1445 = vmul.u32 %v1400, %v1391
        %v1446 = vadd.s32 %v1422, %v1441
        %vm1447 = vc.u32 %v1422, %v1441
        %v1448 = vadd.s32 %v1444, 1
        %v1449 = vsel %vm1447, %v1448, %v1444
        %v1450 = vadd.s32 %v1445, %v1449
        %v1451 = vadd.s32 %v1450, 536870912
        %v1452 = vshrl.u32 %v1451, 30
        %v1453 = vshll.u32 %v1452, 30
        %v1454 = vsub.s32 %v1450, %v1453
        %vm1455 = vcmp.lt.s32.totalorder %v1454, 0
        %v1456 = vsub.s32 0, %v1454
        %v1457 = vsel %vm1455, %v1456, %v1454
        %v1458 = vclz %v1457
        %v1459 = vsub.s32 %v1458, 2
        %vm1460 = vcmp.gt.s32.totalorder 0, %v1459
        %v1461 = vsel %vm1460, 0, %v1459
        %v1462 = vsub.s32 32, %v1461
        %v1463 = vshll.u32 %v1454, %v1461
        %v1464 = vshrl.u32 %v1446, %v1462
        %v1465 = vor.u32 %v1463, %v1464
        %v1466 = vsub.s32 4294967266, %v1461
        %v1467 = vadd.s32 %v1466, 127
        %v1468 = vshll.u32 %v1467, 23
        %v1469 = vor.u32 4788187, %v1468
        %v1470 = vand.u32 2147483647, %v1469
        %v1472 = vcvt.s32.f32 %v1465
        %v1473 = vmul.f32 %v1472, %v1470
        %v1474 = vxor.u32 %v1473, 2147483648
        %v1475 = vsel %vm1354, %v1474, %v1473
        %v1476 = vsub.s32 4, %v1452
        %v1477 = vsel %vm1354, %v1476, %v1452
        %v1478 = vsel %vm1353, %v724, %v1475
        %v1479 = vsel %vm1353, 0, %v1477
        %v1480 = vmul.f32 %v1478, %v1478
        %v1481 = vmul.f32 %v1480, -0.001358992
        %v1482 = vadd.f32 %v1481, 0.041655596
        %v1483 = vmul.f32 %v1480, %v1482
        %v1484 = vadd.f32 %v1483, -0.4999988
        %v1485 = vmul.f32 %v1480, %v1484
        %v1486 = vadd.f32 1.0, %v1485
        %v1487 = vmul.f32 %v1478, %v1478
        %v1488 = vmul.f32 %v1487, -0.00019511016
        %v1489 = vadd.f32 %v1488, 0.008332121
        %v1490 = vmul.f32 %v1487, %v1489
        %v1491 = vadd.f32 %v1490, -0.16666654
        %v1492 = vmul.f32 %v1487, %v1491
        %v1493 = vadd.f32 %v1492, 1.0
        %v1494 = vmul.f32 %v1493, %v1478
        %vm1495 = vweird.f32 %v724
        %v1496 = vand.u32 %v1479, 3
        %vm1497 = vcmp.lt.s32.totalorder %v1496, 2
        %vm1498 = vcmp.eq.s32.totalorder %v1496, 0
        %v1499 = vxor.u32 %v1494, 2147483648
        %v1500 = vsel %vm1498, %v1486, %v1499
        %vm1501 = vcmp.eq.s32.totalorder %v1496, 2
        %v1502 = vxor.u32 %v1486, 2147483648
        %v1503 = vsel %vm1501, %v1502, %v1494
        %v1504 = vsel %vm1497, %v1500, %v1503
        %v1505 = vsel %vm1495, nan, %v1504
        %v1506 = vand.u32 2147483647, %v725
        %vm1507 = vcmp.le.f32.partialorder %v1506, 0.7853982
        %vm1508 = vcmp.lt.s32.totalorder %v725, 0
        %v1509 = vand.u32 %v725, 2139095040
        %v1510 = vshrl.u32 %v1509, 23
        %v1511 = vsub.s32 %v1510, 127
        %v1512 = vand.u32 2147483647, %v725
        %v1513 = vand.u32 %v1512, 8388607
        %v1514 = vor.u32 %v1513, 8388608
        %v1515 = vsub.s32 0, %v1514
        %v1516 = vadd.s32 %v1511, 1
        %vm1517 = vcmp.gt.s32.totalorder %v1516, 0
        %v1518 = vsel %vm1517, %v1516, 0
        %v1519 = vshrl.u32 %v1518, 5
        %v1520 = vand.u32 %v1518, 31
        %v1521 = vsub.s32 32, %v1520
        %v1522 = vshrl.u32 683565275, %v1521
        %v1523 = vshll.u32 683565275, %v1520
        %v1524 = vshrl.u32 2475754826, %v1521
        %v1525 = vor.u32 %v1523, %v1524
        %v1526 = vshll.u32 2475754826, %v1520
        %v1527 = vshrl.u32 2131351028, %v1521
        %v1528 = vor.u32 %v1526, %v1527
        %v1529 = vshll.u32 2131351028, %v1520
        %v1530 = vshrl.u32 2102212464, %v1521
        %v1531 = vor.u32 %v1529, %v1530
        %v1532 = vshll.u32 2102212464, %v1520
        %v1533 = vshrl.u32 920167782, %v1521
        %v1534 = vor.u32 %v1532, %v1533
        %v1535 = vshll.u32 920167782, %v1520
        %v1536 = vshrl.u32 1326507024, %v1521
        %v1537 = vor.u32 %v1535, %v1536
        %vm1538 = vcmp.lt.s32.totalorder %v1519, 1
        %vm1539 = vcmp.lt.s32.totalorder %v1519, 2
        %vm1540 = vcmp.lt.s32.totalorder %v1519, 3
        %vm1541 = vcmp.lt.s32.totalorder %v1519, 4
        %v1542 = vsel %vm1538, %v1522, %v1525
        %v1543 = vsel %vm1541, %v1531, 2102212464
        %v1544 = vsel %vm1540, %v1528, %v1543
        %v1545 = vsel %vm1539, %v1542, %v1544
        %v1546 = vsel %vm1538, %v1525, %v1528
        %v1547 = vsel %vm1541, %v1534, 920167782
        %v1548 = vsel %vm1540, %v1531, %v1547
        %v1549 = vsel %vm1539, %v1546, %v1548
        %v1550 = vsel %vm1538, %v1528, %v1531
        %v1551 = vsel %vm1541, %v1537, 1326507024
        %v1552 = vsel %vm1540, %v1534, %v1551
        %v1553 = vsel %vm1539, %v1550, %v1552
        %v1554 = vshll.u32 %v1514, 8
        %v1555 = vand.u32 %v1554, 65535
        %v1556 = vshrl.u32 %v1554, 16
        %v1557 = vand.u32 %v1553, 65535
        %v1558 = vshrl.u32 %v1553, 16
        %v1559 = vmul.u32 %v1555, %v1557
        %v1560 = vmul.u32 %v1555, %v1558
        %v1561 = vmul.u32 %v1556, %v1557
        %v1562 = vmul.u32 %v1556, %v1558
        %v1563 = vshll.u32 %v1560, 16
        %v1564 = vshrl.u32 %v1560, 16
        %v1565 = vshll.u32 %v1561, 16
        %v1566 = vshrl.u32 %v1561, 16
        %vm1567 = vc.u32 %v1559, %v1563
        %v1568 = vsel %vm1567, 1, 0
        %v1569 = vadd.s32 %v1559, %v1563
        %v1570 = vadd.s32 %v1562, %v1568
        %vm1571 = vc.u32 %v1569, %v1565
        %v1572 = vsel %vm1571, 1, 0
        %v1573 = vadd.s32 %v1569, %v1565
        %v1574 = vadd.s32 %v1570, %v1572
        %v1575 = vadd.s32 %v1574, %v1564
        %v1576 = vadd.s32 %v1575, %v1566
        %v1577 = vand.u32 %v1554, 65535
        %v1578 = vshrl.u32 %v1554, 16
        %v1579 = vand.u32 %v1549, 65535
        %v1580 = vshrl.u32 %v1549, 16
        %v1581 = vmul.u32 %v1577, %v1579
        %v1582 = vmul.u32 %v1577, %v1580
        %v1583 = vmul.u32 %v1578, %v1579
        %v1584 = vmul.u32 %v1578, %v1580
        %v1585 = vshll.u32 %v1582, 16
        %v1586 = vshrl.u32 %v1582, 16
        %v1587 = vshll.u32 %v1583, 16
        %v1588 = vshrl.u32 %v1583, 16
        %vm1589 = vc.u32 %v1581, %v1585
        %v1590 = vsel %vm1589, 1, 0
        %v1591 = vadd.s32 %v1581, %v1585
        %v1592 = vadd.s32 %v1584, %v1590
        %vm1593 = vc.u32 %v1591, %v1587
        %v1594 = vsel %vm1593, 1, 0
        %v1595 = vadd.s32 %v1591, %v1587
        %v1596 = vadd.s32 %v1592, %v1594
        %v1597 = vadd.s32 %v1596, %v1586
        %v1598 = vadd.s32 %v1597, %v1588
        %v1599 = vmul.u32 %v1554, %v1545
        %v1600 = vadd.s32 %v1576, %v1595
        %vm1601 = vc.u32 %v1576, %v1595
        %v1602 = vadd.s32 %v1598, 1
        %v1603 = vsel %vm1601, %v1602, %v1598
        %v1604 = vadd.s32 %v1599, %v1603
        %v1605 = vadd.s32 %v1604, 536870912
        %v1606 = vshrl.u32 %v1605, 30
        %v1607 = vshll.u32 %v1606, 30
        %v1608 = vsub.s32 %v1604, %v1607
        %vm1609 = vcmp.lt.s32.totalorder %v1608, 0
        %v1610 = vsub.s32 0, %v1608
        %v1611 = vsel %vm1609, %v1610, %v1608
        %v1612 = vclz %v1611
        %v1613 = vsub.s32 %v1612, 2
        %vm1614 = vcmp.gt.s32.totalorder 0, %v1613
        %v1615 = vsel %vm1614, 0, %v1613
        %v1616 = vsub.s32 32, %v1615
        %v1617 = vshll.u32 %v1608, %v1615
        %v1618 = vshrl.u32 %v1600, %v1616
        %v1619 = vor.u32 %v1617, %v1618
        %v1620 = vsub.s32 4294967266, %v1615
        %v1621 = vadd.s32 %v1620, 127
        %v1622 = vshll.u32 %v1621, 23
        %v1623 = vor.u32 4788187, %v1622
        %v1624 = vand.u32 2147483647, %v1623
        %v1626 = vcvt.s32.f32 %v1619
        %v1627 = vmul.f32 %v1626, %v1624
        %v1628 = vxor.u32 %v1627, 2147483648
        %v1629 = vsel %vm1508, %v1628, %v1627
        %v1630 = vsub.s32 4, %v1606
        %v1631 = vsel %vm1508, %v1630, %v1606
        %v1632 = vsel %vm1507, %v725, %v1629
        %v1633 = vsel %vm1507, 0, %v1631
        %v1634 = vmul.f32 %v1632, %v1632
        %v1635 = vmul.f32 %v1634, -0.001358992
        %v1636 = vadd.f32 %v1635, 0.041655596
        %v1637 = vmul.f32 %v1634, %v1636
        %v1638 = vadd.f32 %v1637, -0.4999988
        %v1639 = vmul.f32 %v1634, %v1638
        %v1640 = vadd.f32 1.0, %v1639
        %v1641 = vmul.f32 %v1632, %v1632
        %v1642 = vmul.f32 %v1641, -0.00019511016
        %v1643 = vadd.f32 %v1642, 0.008332121
        %v1644 = vmul.f32 %v1641, %v1643
        %v1645 = vadd.f32 %v1644, -0.16666654
        %v1646 = vmul.f32 %v1641, %v1645
        %v1647 = vadd.f32 %v1646, 1.0
        %v1648 = vmul.f32 %v1647, %v1632
        %vm1649 = vweird.f32 %v725
        %v1650 = vand.u32 %v1633, 3
        %vm1651 = vcmp.lt.s32.totalorder %v1650, 2
        %vm1652 = vcmp.eq.s32.totalorder %v1650, 0
        %v1653 = vxor.u32 %v1648, 2147483648
        %v1654 = vsel %vm1652, %v1640, %v1653
        %vm1655 = vcmp.eq.s32.totalorder %v1650, 2
        %v1656 = vxor.u32 %v1640, 2147483648
        %v1657 = vsel %vm1655, %v1656, %v1648
        %v1658 = vsel %vm1651, %v1654, %v1657
        %v1659 = vsel %vm1649, nan, %v1658
        %v1660 = vand.u32 2147483647, %v726
        %vm1661 = vcmp.le.f32.partialorder %v1660, 0.7853982
        %vm1662 = vcmp.lt.s32.totalorder %v726, 0
        %v1663 = vand.u32 %v726, 2139095040
        %v1664 = vshrl.u32 %v1663, 23
        %v1665 = vsub.s32 %v1664, 127
        %v1666 = vand.u32 2147483647, %v726
        %v1667 = vand.u32 %v1666, 8388607
        %v1668 = vor.u32 %v1667, 8388608
        %v1669 = vsub.s32 0, %v1668
        %v1670 = vadd.s32 %v1665, 1
        %vm1671 = vcmp.gt.s32.totalorder %v1670, 0
        %v1672 = vsel %vm1671, %v1670, 0
        %v1673 = vshrl.u32 %v1672, 5
        %v1674 = vand.u32 %v1672, 31
        %v1675 = vsub.s32 32, %v1674
        %v1676 = vshrl.u32 683565275, %v1675
        %v1677 = vshll.u32 683565275, %v1674
        %v1678 = vshrl.u32 2475754826, %v1675
        %v1679 = vor.u32 %v1677, %v1678
        %v1680 = vshll.u32 2475754826, %v1674
        %v1681 = vshrl.u32 2131351028, %v1675
        %v1682 = vor.u32 %v1680, %v1681
        %v1683 = vshll.u32 2131351028, %v1674
        %v1684 = vshrl.u32 2102212464, %v1675
        %v1685 = vor.u32 %v1683, %v1684
        %v1686 = vshll.u32 2102212464, %v1674
        %v1687 = vshrl.u32 920167782, %v1675
        %v1688 = vor.u32 %v1686, %v1687
        %v1689 = vshll.u32 920167782, %v1674
        %v1690 = vshrl.u32 1326507024, %v1675
        %v1691 = vor.u32 %v1689, %v1690
        %vm1692 = vcmp.lt.s32.totalorder %v1673, 1
        %vm1693 = vcmp.lt.s32.totalorder %v1673, 2
        %vm1694 = vcmp.lt.s32.totalorder %v1673, 3
        %vm1695 = vcmp.lt.s32.totalorder %v1673, 4
        %v1696 = vsel %vm1692, %v1676, %v1679
        %v1697 = vsel %vm1695, %v1685, 2102212464
        %v1698 = vsel %vm1694, %v1682, %v1697
        %v1699 = vsel %vm1693, %v1696, %v1698
        %v1700 = vsel %vm1692, %v1679, %v1682
        %v1701 = vsel %vm1695, %v1688, 920167782
        %v1702 = vsel %vm1694, %v1685, %v1701
        %v1703 = vsel %vm1693, %v1700, %v1702
        %v1704 = vsel %vm1692, %v1682, %v1685
        %v1705 = vsel %vm1695, %v1691, 1326507024
        %v1706 = vsel %vm1694, %v1688, %v1705
        %v1707 = vsel %vm1693, %v1704, %v1706
        %v1708 = vshll.u32 %v1668, 8
        %v1709 = vand.u32 %v1708, 65535
        %v1710 = vshrl.u32 %v1708, 16
        %v1711 = vand.u32 %v1707, 65535
        %v1712 = vshrl.u32 %v1707, 16
        %v1713 = vmul.u32 %v1709, %v1711
        %v1714 = vmul.u32 %v1709, %v1712
        %v1715 = vmul.u32 %v1710, %v1711
        %v1716 = vmul.u32 %v1710, %v1712
        %v1717 = vshll.u32 %v1714, 16
        %v1718 = vshrl.u32 %v1714, 16
        %v1719 = vshll.u32 %v1715, 16
        %v1720 = vshrl.u32 %v1715, 16
        %vm1721 = vc.u32 %v1713, %v1717
        %v1722 = vsel %vm1721, 1, 0
        %v1723 = vadd.s32 %v1713, %v1717
        %v1724 = vadd.s32 %v1716, %v1722
        %vm1725 = vc.u32 %v1723, %v1719
        %v1726 = vsel %vm1725, 1, 0
        %v1727 = vadd.s32 %v1723, %v1719
        %v1728 = vadd.s32 %v1724, %v1726
        %v1729 = vadd.s32 %v1728, %v1718
        %v1730 = vadd.s32 %v1729, %v1720
        %v1731 = vand.u32 %v1708, 65535
        %v1732 = vshrl.u32 %v1708, 16
        %v1733 = vand.u32 %v1703, 65535
        %v1734 = vshrl.u32 %v1703, 16
        %v1735 = vmul.u32 %v1731, %v1733
        %v1736 = vmul.u32 %v1731, %v1734
        %v1737 = vmul.u32 %v1732, %v1733
        %v1738 = vmul.u32 %v1732, %v1734
        %v1739 = vshll.u32 %v1736, 16
        %v1740 = vshrl.u32 %v1736, 16
        %v1741 = vshll.u32 %v1737, 16
        %v1742 = vshrl.u32 %v1737, 16
        %vm1743 = vc.u32 %v1735, %v1739
        %v1744 = vsel %vm1743, 1, 0
        %v1745 = vadd.s32 %v1735, %v1739
        %v1746 = vadd.s32 %v1738, %v1744
        %vm1747 = vc.u32 %v1745, %v1741
        %v1748 = vsel %vm1747, 1, 0
        %v1749 = vadd.s32 %v1745, %v1741
        %v1750 = vadd.s32 %v1746, %v1748
        %v1751 = vadd.s32 %v1750, %v1740
        %v1752 = vadd.s32 %v1751, %v1742
        %v1753 = vmul.u32 %v1708, %v1699
        %v1754 = vadd.s32 %v1730, %v1749
        %vm1755 = vc.u32 %v1730, %v1749
        %v1756 = vadd.s32 %v1752, 1
        %v1757 = vsel %vm1755, %v1756, %v1752
        %v1758 = vadd.s32 %v1753, %v1757
        %v1759 = vadd.s32 %v1758, 536870912
        %v1760 = vshrl.u32 %v1759, 30
        %v1761 = vshll.u32 %v1760, 30
        %v1762 = vsub.s32 %v1758, %v1761
        %vm1763 = vcmp.lt.s32.totalorder %v1762, 0
        %v1764 = vsub.s32 0, %v1762
        %v1765 = vsel %vm1763, %v1764, %v1762
        %v1766 = vclz %v1765
        %v1767 = vsub.s32 %v1766, 2
        %vm1768 = vcmp.gt.s32.totalorder 0, %v1767
        %v1769 = vsel %vm1768, 0, %v1767
        %v1770 = vsub.s32 32, %v1769
        %v1771 = vshll.u32 %v1762, %v1769
        %v1772 = vshrl.u32 %v1754, %v1770
        %v1773 = vor.u32 %v1771, %v1772
        %v1774 = vsub.s32 4294967266, %v1769
        %v1775 = vadd.s32 %v1774, 127
        %v1776 = vshll.u32 %v1775, 23
        %v1777 = vor.u32 4788187, %v1776
        %v1778 = vand.u32 2147483647, %v1777
        %v1780 = vcvt.s32.f32 %v1773
        %v1781 = vmul.f32 %v1780, %v1778
        %v1782 = vxor.u32 %v1781, 2147483648
        %v1783 = vsel %vm1662, %v1782, %v1781
        %v1784 = vsub.s32 4, %v1760
        %v1785 = vsel %vm1662, %v1784, %v1760
        %v1786 = vsel %vm1661, %v726, %v1783
        %v1787 = vsel %vm1661, 0, %v1785
        %v1788 = vmul.f32 %v1786, %v1786
        %v1789 = vmul.f32 %v1788, -0.001358992
        %v1790 = vadd.f32 %v1789, 0.041655596
        %v1791 = vmul.f32 %v1788, %v1790
        %v1792 = vadd.f32 %v1791, -0.4999988
        %v1793 = vmul.f32 %v1788, %v1792
        %v1794 = vadd.f32 1.0, %v1793
        %v1795 = vmul.f32 %v1786, %v1786
        %v1796 = vmul.f32 %v1795, -0.00019511016
        %v1797 = vadd.f32 %v1796, 0.008332121
        %v1798 = vmul.f32 %v1795, %v1797
        %v1799 = vadd.f32 %v1798, -0.16666654
        %v1800 = vmul.f32 %v1795, %v1799
        %v1801 = vadd.f32 %v1800, 1.0
        %v1802 = vmul.f32 %v1801, %v1786
        %vm1803 = vweird.f32 %v726
        %v1804 = vand.u32 %v1787, 3
        %vm1805 = vcmp.lt.s32.totalorder %v1804, 2
        %vm1806 = vcmp.eq.s32.totalorder %v1804, 0
        %v1807 = vxor.u32 %v1802, 2147483648
        %v1808 = vsel %vm1806, %v1794, %v1807
        %vm1809 = vcmp.eq.s32.totalorder %v1804, 2
        %v1810 = vxor.u32 %v1794, 2147483648
        %v1811 = vsel %vm1809, %v1810, %v1802
        %v1812 = vsel %vm1805, %v1808, %v1811
        %v1813 = vsel %vm1803, nan, %v1812
        %v1814 = vand.u32 2147483647, %v727
        %vm1815 = vcmp.le.f32.partialorder %v1814, 0.7853982
        %vm1816 = vcmp.lt.s32.totalorder %v727, 0
        %v1817 = vand.u32 %v727, 2139095040
        %v1818 = vshrl.u32 %v1817, 23
        %v1819 = vsub.s32 %v1818, 127
        %v1820 = vand.u32 2147483647, %v727
        %v1821 = vand.u32 %v1820, 8388607
        %v1822 = vor.u32 %v1821, 8388608
        %v1823 = vsub.s32 0, %v1822
        %v1824 = vadd.s32 %v1819, 1
        %vm1825 = vcmp.gt.s32.totalorder %v1824, 0
        %v1826 = vsel %vm1825, %v1824, 0
        %v1827 = vshrl.u32 %v1826, 5
        %v1828 = vand.u32 %v1826, 31
        %v1829 = vsub.s32 32, %v1828
        %v1830 = vshrl.u32 683565275, %v1829
        %v1831 = vshll.u32 683565275, %v1828
        %v1832 = vshrl.u32 2475754826, %v1829
        %v1833 = vor.u32 %v1831, %v1832
        %v1834 = vshll.u32 2475754826, %v1828
        %v1835 = vshrl.u32 2131351028, %v1829
        %v1836 = vor.u32 %v1834, %v1835
        %v1837 = vshll.u32 2131351028, %v1828
        %v1838 = vshrl.u32 2102212464, %v1829
        %v1839 = vor.u32 %v1837, %v1838
        %v1840 = vshll.u32 2102212464, %v1828
        %v1841 = vshrl.u32 920167782, %v1829
        %v1842 = vor.u32 %v1840, %v1841
        %v1843 = vshll.u32 920167782, %v1828
        %v1844 = vshrl.u32 1326507024, %v1829
        %v1845 = vor.u32 %v1843, %v1844
        %vm1846 = vcmp.lt.s32.totalorder %v1827, 1
        %vm1847 = vcmp.lt.s32.totalorder %v1827, 2
        %vm1848 = vcmp.lt.s32.totalorder %v1827, 3
        %vm1849 = vcmp.lt.s32.totalorder %v1827, 4
        %v1850 = vsel %vm1846, %v1830, %v1833
        %v1851 = vsel %vm1849, %v1839, 2102212464
        %v1852 = vsel %vm1848, %v1836, %v1851
        %v1853 = vsel %vm1847, %v1850, %v1852
        %v1854 = vsel %vm1846, %v1833, %v1836
        %v1855 = vsel %vm1849, %v1842, 920167782
        %v1856 = vsel %vm1848, %v1839, %v1855
        %v1857 = vsel %vm1847, %v1854, %v1856
        %v1858 = vsel %vm1846, %v1836, %v1839
        %v1859 = vsel %vm1849, %v1845, 1326507024
        %v1860 = vsel %vm1848, %v1842, %v1859
        %v1861 = vsel %vm1847, %v1858, %v1860
        %v1862 = vshll.u32 %v1822, 8
        %v1863 = vand.u32 %v1862, 65535
        %v1864 = vshrl.u32 %v1862, 16
        %v1865 = vand.u32 %v1861, 65535
        %v1866 = vshrl.u32 %v1861, 16
        %v1867 = vmul.u32 %v1863, %v1865
        %v1868 = vmul.u32 %v1863, %v1866
        %v1869 = vmul.u32 %v1864, %v1865
        %v1870 = vmul.u32 %v1864, %v1866
        %v1871 = vshll.u32 %v1868, 16
        %v1872 = vshrl.u32 %v1868, 16
        %v1873 = vshll.u32 %v1869, 16
        %v1874 = vshrl.u32 %v1869, 16
        %vm1875 = vc.u32 %v1867, %v1871
        %v1876 = vsel %vm1875, 1, 0
        %v1877 = vadd.s32 %v1867, %v1871
        %v1878 = vadd.s32 %v1870, %v1876
        %vm1879 = vc.u32 %v1877, %v1873
        %v1880 = vsel %vm1879, 1, 0
        %v1881 = vadd.s32 %v1877, %v1873
        %v1882 = vadd.s32 %v1878, %v1880
        %v1883 = vadd.s32 %v1882, %v1872
        %v1884 = vadd.s32 %v1883, %v1874
        %v1885 = vand.u32 %v1862, 65535
        %v1886 = vshrl.u32 %v1862, 16
        %v1887 = vand.u32 %v1857, 65535
        %v1888 = vshrl.u32 %v1857, 16
        %v1889 = vmul.u32 %v1885, %v1887
        %v1890 = vmul.u32 %v1885, %v1888
        %v1891 = vmul.u32 %v1886, %v1887
        %v1892 = vmul.u32 %v1886, %v1888
        %v1893 = vshll.u32 %v1890, 16
        %v1894 = vshrl.u32 %v1890, 16
        %v1895 = vshll.u32 %v1891, 16
        %v1896 = vshrl.u32 %v1891, 16
        %vm1897 = vc.u32 %v1889, %v1893
        %v1898 = vsel %vm1897, 1, 0
        %v1899 = vadd.s32 %v1889, %v1893
        %v1900 = vadd.s32 %v1892, %v1898
        %vm1901 = vc.u32 %v1899, %v1895
        %v1902 = vsel %vm1901, 1, 0
        %v1903 = vadd.s32 %v1899, %v1895
        %v1904 = vadd.s32 %v1900, %v1902
        %v1905 = vadd.s32 %v1904, %v1894
        %v1906 = vadd.s32 %v1905, %v1896
        %v1907 = vmul.u32 %v1862, %v1853
        %v1908 = vadd.s32 %v1884, %v1903
        %vm1909 = vc.u32 %v1884, %v1903
        %v1910 = vadd.s32 %v1906, 1
        %v1911 = vsel %vm1909, %v1910, %v1906
        %v1912 = vadd.s32 %v1907, %v1911
        %v1913 = vadd.s32 %v1912, 536870912
        %v1914 = vshrl.u32 %v1913, 30
        %v1915 = vshll.u32 %v1914, 30
        %v1916 = vsub.s32 %v1912, %v1915
        %vm1917 = vcmp.lt.s32.totalorder %v1916, 0
        %v1918 = vsub.s32 0, %v1916
        %v1919 = vsel %vm1917, %v1918, %v1916
        %v1920 = vclz %v1919
        %v1921 = vsub.s32 %v1920, 2
        %vm1922 = vcmp.gt.s32.totalorder 0, %v1921
        %v1923 = vsel %vm1922, 0, %v1921
        %v1924 = vsub.s32 32, %v1923
        %v1925 = vshll.u32 %v1916, %v1923
        %v1926 = vshrl.u32 %v1908, %v1924
        %v1927 = vor.u32 %v1925, %v1926
        %v1928 = vsub.s32 4294967266, %v1923
        %v1929 = vadd.s32 %v1928, 127
        %v1930 = vshll.u32 %v1929, 23
        %v1931 = vor.u32 4788187, %v1930
        %v1932 = vand.u32 2147483647, %v1931
        %v1934 = vcvt.s32.f32 %v1927
        %v1935 = vmul.f32 %v1934, %v1932
        %v1936 = vxor.u32 %v1935, 2147483648
        %v1937 = vsel %vm1816, %v1936, %v1935
        %v1938 = vsub.s32 4, %v1914
        %v1939 = vsel %vm1816, %v1938, %v1914
        %v1940 = vsel %vm1815, %v727, %v1937
        %v1941 = vsel %vm1815, 0, %v1939
        %v1942 = vmul.f32 %v1940, %v1940
        %v1943 = vmul.f32 %v1942, -0.001358992
        %v1944 = vadd.f32 %v1943, 0.041655596
        %v1945 = vmul.f32 %v1942, %v1944
        %v1946 = vadd.f32 %v1945, -0.4999988
        %v1947 = vmul.f32 %v1942, %v1946
        %v1948 = vadd.f32 1.0, %v1947
        %v1949 = vmul.f32 %v1940, %v1940
        %v1950 = vmul.f32 %v1949, -0.00019511016
        %v1951 = vadd.f32 %v1950, 0.008332121
        %v1952 = vmul.f32 %v1949, %v1951
        %v1953 = vadd.f32 %v1952, -0.16666654
        %v1954 = vmul.f32 %v1949, %v1953
        %v1955 = vadd.f32 %v1954, 1.0
        %v1956 = vmul.f32 %v1955, %v1940
        %vm1957 = vweird.f32 %v727
        %v1958 = vand.u32 %v1941, 3
        %vm1959 = vcmp.lt.s32.totalorder %v1958, 2
        %vm1960 = vcmp.eq.s32.totalorder %v1958, 0
        %v1961 = vxor.u32 %v1956, 2147483648
        %v1962 = vsel %vm1960, %v1948, %v1961
        %vm1963 = vcmp.eq.s32.totalorder %v1958, 2
        %v1964 = vxor.u32 %v1948, 2147483648
        %v1965 = vsel %vm1963, %v1964, %v1956
        %v1966 = vsel %vm1959, %v1962, %v1965
        %v1967 = vsel %vm1957, nan, %v1966
        %v1968 = vand.u32 2147483647, %v728
        %vm1969 = vcmp.le.f32.partialorder %v1968, 0.7853982
        %vm1970 = vcmp.lt.s32.totalorder %v728, 0
        %v1971 = vand.u32 %v728, 2139095040
        %v1972 = vshrl.u32 %v1971, 23
        %v1973 = vsub.s32 %v1972, 127
        %v1974 = vand.u32 2147483647, %v728
        %v1975 = vand.u32 %v1974, 8388607
        %v1976 = vor.u32 %v1975, 8388608
        %v1977 = vsub.s32 0, %v1976
        %v1978 = vadd.s32 %v1973, 1
        %vm1979 = vcmp.gt.s32.totalorder %v1978, 0
        %v1980 = vsel %vm1979, %v1978, 0
        %v1981 = vshrl.u32 %v1980, 5
        %v1982 = vand.u32 %v1980, 31
        %v1983 = vsub.s32 32, %v1982
        %v1984 = vshrl.u32 683565275, %v1983
        %v1985 = vshll.u32 683565275, %v1982
        %v1986 = vshrl.u32 2475754826, %v1983
        %v1987 = vor.u32 %v1985, %v1986
        %v1988 = vshll.u32 2475754826, %v1982
        %v1989 = vshrl.u32 2131351028, %v1983
        %v1990 = vor.u32 %v1988, %v1989
        %v1991 = vshll.u32 2131351028, %v1982
        %v1992 = vshrl.u32 2102212464, %v1983
        %v1993 = vor.u32 %v1991, %v1992
        %v1994 = vshll.u32 2102212464, %v1982
        %v1995 = vshrl.u32 920167782, %v1983
        %v1996 = vor.u32 %v1994, %v1995
        %v1997 = vshll.u32 920167782, %v1982
        %v1998 = vshrl.u32 1326507024, %v1983
        %v1999 = vor.u32 %v1997, %v1998
        %vm2000 = vcmp.lt.s32.totalorder %v1981, 1
        %vm2001 = vcmp.lt.s32.totalorder %v1981, 2
        %vm2002 = vcmp.lt.s32.totalorder %v1981, 3
        %vm2003 = vcmp.lt.s32.totalorder %v1981, 4
        %v2004 = vsel %vm2000, %v1984, %v1987
        %v2005 = vsel %vm2003, %v1993, 2102212464
        %v2006 = vsel %vm2002, %v1990, %v2005
        %v2007 = vsel %vm2001, %v2004, %v2006
        %v2008 = vsel %vm2000, %v1987, %v1990
        %v2009 = vsel %vm2003, %v1996, 920167782
        %v2010 = vsel %vm2002, %v1993, %v2009
        %v2011 = vsel %vm2001, %v2008, %v2010
        %v2012 = vsel %vm2000, %v1990, %v1993
        %v2013 = vsel %vm2003, %v1999, 1326507024
        %v2014 = vsel %vm2002, %v1996, %v2013
        %v2015 = vsel %vm2001, %v2012, %v2014
        %v2016 = vshll.u32 %v1976, 8
        %v2017 = vand.u32 %v2016, 65535
        %v2018 = vshrl.u32 %v2016, 16
        %v2019 = vand.u32 %v2015, 65535
        %v2020 = vshrl.u32 %v2015, 16
        %v2021 = vmul.u32 %v2017, %v2019
        %v2022 = vmul.u32 %v2017, %v2020
        %v2023 = vmul.u32 %v2018, %v2019
        %v2024 = vmul.u32 %v2018, %v2020
        %v2025 = vshll.u32 %v2022, 16
        %v2026 = vshrl.u32 %v2022, 16
        %v2027 = vshll.u32 %v2023, 16
        %v2028 = vshrl.u32 %v2023, 16
        %vm2029 = vc.u32 %v2021, %v2025
        %v2030 = vsel %vm2029, 1, 0
        %v2031 = vadd.s32 %v2021, %v2025
        %v2032 = vadd.s32 %v2024, %v2030
        %vm2033 = vc.u32 %v2031, %v2027
        %v2034 = vsel %vm2033, 1, 0
        %v2035 = vadd.s32 %v2031, %v2027
        %v2036 = vadd.s32 %v2032, %v2034
        %v2037 = vadd.s32 %v2036, %v2026
        %v2038 = vadd.s32 %v2037, %v2028
        %v2039 = vand.u32 %v2016, 65535
        %v2040 = vshrl.u32 %v2016, 16
        %v2041 = vand.u32 %v2011, 65535
        %v2042 = vshrl.u32 %v2011, 16
        %v2043 = vmul.u32 %v2039, %v2041
        %v2044 = vmul.u32 %v2039, %v2042
        %v2045 = vmul.u32 %v2040, %v2041
        %v2046 = vmul.u32 %v2040, %v2042
        %v2047 = vshll.u32 %v2044, 16
        %v2048 = vshrl.u32 %v2044, 16
        %v2049 = vshll.u32 %v2045, 16
        %v2050 = vshrl.u32 %v2045, 16
        %vm2051 = vc.u32 %v2043, %v2047
        %v2052 = vsel %vm2051, 1, 0
        %v2053 = vadd.s32 %v2043, %v2047
        %v2054 = vadd.s32 %v2046, %v2052
        %vm2055 = vc.u32 %v2053, %v2049
        %v2056 = vsel %vm2055, 1, 0
        %v2057 = vadd.s32 %v2053, %v2049
        %v2058 = vadd.s32 %v2054, %v2056
        %v2059 = vadd.s32 %v2058, %v2048
        %v2060 = vadd.s32 %v2059, %v2050
        %v2061 = vmul.u32 %v2016, %v2007
        %v2062 = vadd.s32 %v2038, %v2057
        %vm2063 = vc.u32 %v2038, %v2057
        %v2064 = vadd.s32 %v2060, 1
        %v2065 = vsel %vm2063, %v2064, %v2060
        %v2066 = vadd.s32 %v2061, %v2065
        %v2067 = vadd.s32 %v2066, 536870912
        %v2068 = vshrl.u32 %v2067, 30
        %v2069 = vshll.u32 %v2068, 30
        %v2070 = vsub.s32 %v2066, %v2069
        %vm2071 = vcmp.lt.s32.totalorder %v2070, 0
        %v2072 = vsub.s32 0, %v2070
        %v2073 = vsel %vm2071, %v2072, %v2070
        %v2074 = vclz %v2073
        %v2075 = vsub.s32 %v2074, 2
        %vm2076 = vcmp.gt.s32.totalorder 0, %v2075
        %v2077 = vsel %vm2076, 0, %v2075
        %v2078 = vsub.s32 32, %v2077
        %v2079 = vshll.u32 %v2070, %v2077
        %v2080 = vshrl.u32 %v2062, %v2078
        %v2081 = vor.u32 %v2079, %v2080
        %v2082 = vsub.s32 4294967266, %v2077
        %v2083 = vadd.s32 %v2082, 127
        %v2084 = vshll.u32 %v2083, 23
        %v2085 = vor.u32 4788187, %v2084
        %v2086 = vand.u32 2147483647, %v2085
        %v2088 = vcvt.s32.f32 %v2081
        %v2089 = vmul.f32 %v2088, %v2086
        %v2090 = vxor.u32 %v2089, 2147483648
        %v2091 = vsel %vm1970, %v2090, %v2089
        %v2092 = vsub.s32 4, %v2068
        %v2093 = vsel %vm1970, %v2092, %v2068
        %v2094 = vsel %vm1969, %v728, %v2091
        %v2095 = vsel %vm1969, 0, %v2093
        %v2096 = vmul.f32 %v2094, %v2094
        %v2097 = vmul.f32 %v2096, -0.001358992
        %v2098 = vadd.f32 %v2097, 0.041655596
        %v2099 = vmul.f32 %v2096, %v2098
        %v2100 = vadd.f32 %v2099, -0.4999988
        %v2101 = vmul.f32 %v2096, %v2100
        %v2102 = vadd.f32 1.0, %v2101
        %v2103 = vmul.f32 %v2094, %v2094
        %v2104 = vmul.f32 %v2103, -0.00019511016
        %v2105 = vadd.f32 %v2104, 0.008332121
        %v2106 = vmul.f32 %v2103, %v2105
        %v2107 = vadd.f32 %v2106, -0.16666654
        %v2108 = vmul.f32 %v2103, %v2107
        %v2109 = vadd.f32 %v2108, 1.0
        %v2110 = vmul.f32 %v2109, %v2094
        %vm2111 = vweird.f32 %v728
        %v2112 = vand.u32 %v2095, 3
        %vm2113 = vcmp.lt.s32.totalorder %v2112, 2
        %vm2114 = vcmp.eq.s32.totalorder %v2112, 0
        %v2115 = vxor.u32 %v2110, 2147483648
        %v2116 = vsel %vm2114, %v2102, %v2115
        %vm2117 = vcmp.eq.s32.totalorder %v2112, 2
        %v2118 = vxor.u32 %v2102, 2147483648
        %v2119 = vsel %vm2117, %v2118, %v2110
        %v2120 = vsel %vm2113, %v2116, %v2119
        %v2121 = vsel %vm2111, nan, %v2120
        %v2122 = vand.u32 2147483647, %v729
        %vm2123 = vcmp.le.f32.partialorder %v2122, 0.7853982
        %vm2124 = vcmp.lt.s32.totalorder %v729, 0
        %v2125 = vand.u32 %v729, 2139095040
        %v2126 = vshrl.u32 %v2125, 23
        %v2127 = vsub.s32 %v2126, 127
        %v2128 = vand.u32 2147483647, %v729
        %v2129 = vand.u32 %v2128, 8388607
        %v2130 = vor.u32 %v2129, 8388608
        %v2131 = vsub.s32 0, %v2130
        %v2132 = vadd.s32 %v2127, 1
        %vm2133 = vcmp.gt.s32.totalorder %v2132, 0
        %v2134 = vsel %vm2133, %v2132, 0
        %v2135 = vshrl.u32 %v2134, 5
        %v2136 = vand.u32 %v2134, 31
        %v2137 = vsub.s32 32, %v2136
        %v2138 = vshrl.u32 683565275, %v2137
        %v2139 = vshll.u32 683565275, %v2136
        %v2140 = vshrl.u32 2475754826, %v2137
        %v2141 = vor.u32 %v2139, %v2140
        %v2142 = vshll.u32 2475754826, %v2136
        %v2143 = vshrl.u32 2131351028, %v2137
        %v2144 = vor.u32 %v2142, %v2143
        %v2145 = vshll.u32 2131351028, %v2136
        %v2146 = vshrl.u32 2102212464, %v2137
        %v2147 = vor.u32 %v2145, %v2146
        %v2148 = vshll.u32 2102212464, %v2136
        %v2149 = vshrl.u32 920167782, %v2137
        %v2150 = vor.u32 %v2148, %v2149
        %v2151 = vshll.u32 920167782, %v2136
        %v2152 = vshrl.u32 1326507024, %v2137
        %v2153 = vor.u32 %v2151, %v2152
        %vm2154 = vcmp.lt.s32.totalorder %v2135, 1
        %vm2155 = vcmp.lt.s32.totalorder %v2135, 2
        %vm2156 = vcmp.lt.s32.totalorder %v2135, 3
        %vm2157 = vcmp.lt.s32.totalorder %v2135, 4
        %v2158 = vsel %vm2154, %v2138, %v2141
        %v2159 = vsel %vm2157, %v2147, 2102212464
        %v2160 = vsel %vm2156, %v2144, %v2159
        %v2161 = vsel %vm2155, %v2158, %v2160
        %v2162 = vsel %vm2154, %v2141, %v2144
        %v2163 = vsel %vm2157, %v2150, 920167782
        %v2164 = vsel %vm2156, %v2147, %v2163
        %v2165 = vsel %vm2155, %v2162, %v2164
        %v2166 = vsel %vm2154, %v2144, %v2147
        %v2167 = vsel %vm2157, %v2153, 1326507024
        %v2168 = vsel %vm2156, %v2150, %v2167
        %v2169 = vsel %vm2155, %v2166, %v2168
        %v2170 = vshll.u32 %v2130, 8
        %v2171 = vand.u32 %v2170, 65535
        %v2172 = vshrl.u32 %v2170, 16
        %v2173 = vand.u32 %v2169, 65535
        %v2174 = vshrl.u32 %v2169, 16
        %v2175 = vmul.u32 %v2171, %v2173
        %v2176 = vmul.u32 %v2171, %v2174
        %v2177 = vmul.u32 %v2172, %v2173
        %v2178 = vmul.u32 %v2172, %v2174
        %v2179 = vshll.u32 %v2176, 16
        %v2180 = vshrl.u32 %v2176, 16
        %v2181 = vshll.u32 %v2177, 16
        %v2182 = vshrl.u32 %v2177, 16
        %vm2183 = vc.u32 %v2175, %v2179
        %v2184 = vsel %vm2183, 1, 0
        %v2185 = vadd.s32 %v2175, %v2179
        %v2186 = vadd.s32 %v2178, %v2184
        %vm2187 = vc.u32 %v2185, %v2181
        %v2188 = vsel %vm2187, 1, 0
        %v2189 = vadd.s32 %v2185, %v2181
        %v2190 = vadd.s32 %v2186, %v2188
        %v2191 = vadd.s32 %v2190, %v2180
        %v2192 = vadd.s32 %v2191, %v2182
        %v2193 = vand.u32 %v2170, 65535
        %v2194 = vshrl.u32 %v2170, 16
        %v2195 = vand.u32 %v2165, 65535
        %v2196 = vshrl.u32 %v2165, 16
        %v2197 = vmul.u32 %v2193, %v2195
        %v2198 = vmul.u32 %v2193, %v2196
        %v2199 = vmul.u32 %v2194, %v2195
        %v2200 = vmul.u32 %v2194, %v2196
        %v2201 = vshll.u32 %v2198, 16
        %v2202 = vshrl.u32 %v2198, 16
        %v2203 = vshll.u32 %v2199, 16
        %v2204 = vshrl.u32 %v2199, 16
        %vm2205 = vc.u32 %v2197, %v2201
        %v2206 = vsel %vm2205, 1, 0
        %v2207 = vadd.s32 %v2197, %v2201
        %v2208 = vadd.s32 %v2200, %v2206
        %vm2209 = vc.u32 %v2207, %v2203
        %v2210 = vsel %vm2209, 1, 0
        %v2211 = vadd.s32 %v2207, %v2203
        %v2212 = vadd.s32 %v2208, %v2210
        %v2213 = vadd.s32 %v2212, %v2202
        %v2214 = vadd.s32 %v2213, %v2204
        %v2215 = vmul.u32 %v2170, %v2161
        %v2216 = vadd.s32 %v2192, %v2211
        %vm2217 = vc.u32 %v2192, %v2211
        %v2218 = vadd.s32 %v2214, 1
        %v2219 = vsel %vm2217, %v2218, %v2214
        %v2220 = vadd.s32 %v2215, %v2219
        %v2221 = vadd.s32 %v2220, 536870912
        %v2222 = vshrl.u32 %v2221, 30
        %v2223 = vshll.u32 %v2222, 30
        %v2224 = vsub.s32 %v2220, %v2223
        %vm2225 = vcmp.lt.s32.totalorder %v2224, 0
        %v2226 = vsub.s32 0, %v2224
        %v2227 = vsel %vm2225, %v2226, %v2224
        %v2228 = vclz %v2227
        %v2229 = vsub.s32 %v2228, 2
        %vm2230 = vcmp.gt.s32.totalorder 0, %v2229
        %v2231 = vsel %vm2230, 0, %v2229
        %v2232 = vsub.s32 32, %v2231
        %v2233 = vshll.u32 %v2224, %v2231
        %v2234 = vshrl.u32 %v2216, %v2232
        %v2235 = vor.u32 %v2233, %v2234
        %v2236 = vsub.s32 4294967266, %v2231
        %v2237 = vadd.s32 %v2236, 127
        %v2238 = vshll.u32 %v2237, 23
        %v2239 = vor.u32 4788187, %v2238
        %v2240 = vand.u32 2147483647, %v2239
        %v2242 = vcvt.s32.f32 %v2235
        %v2243 = vmul.f32 %v2242, %v2240
        %v2244 = vxor.u32 %v2243, 2147483648
        %v2245 = vsel %vm2124, %v2244, %v2243
        %v2246 = vsub.s32 4, %v2222
        %v2247 = vsel %vm2124, %v2246, %v2222
        %v2248 = vsel %vm2123, %v729, %v2245
        %v2249 = vsel %vm2123, 0, %v2247
        %v2250 = vmul.f32 %v2248, %v2248
        %v2251 = vmul.f32 %v2250, -0.001358992
        %v2252 = vadd.f32 %v2251, 0.041655596
        %v2253 = vmul.f32 %v2250, %v2252
        %v2254 = vadd.f32 %v2253, -0.4999988
        %v2255 = vmul.f32 %v2250, %v2254
        %v2256 = vadd.f32 1.0, %v2255
        %v2257 = vmul.f32 %v2248, %v2248
        %v2258 = vmul.f32 %v2257, -0.00019511016
        %v2259 = vadd.f32 %v2258, 0.008332121
        %v2260 = vmul.f32 %v2257, %v2259
        %v2261 = vadd.f32 %v2260, -0.16666654
        %v2262 = vmul.f32 %v2257, %v2261
        %v2263 = vadd.f32 %v2262, 1.0
        %v2264 = vmul.f32 %v2263, %v2248
        %vm2265 = vweird.f32 %v729
        %v2266 = vand.u32 %v2249, 3
        %vm2267 = vcmp.lt.s32.totalorder %v2266, 2
        %vm2268 = vcmp.eq.s32.totalorder %v2266, 0
        %v2269 = vxor.u32 %v2264, 2147483648
        %v2270 = vsel %vm2268, %v2256, %v2269
        %vm2271 = vcmp.eq.s32.totalorder %v2266, 2
        %v2272 = vxor.u32 %v2256, 2147483648
        %v2273 = vsel %vm2271, %v2272, %v2264
        %v2274 = vsel %vm2267, %v2270, %v2273
        %v2275 = vsel %vm2265, nan, %v2274
        %v2276 = vand.u32 2147483647, %v730
        %vm2277 = vcmp.le.f32.partialorder %v2276, 0.7853982
        %vm2278 = vcmp.lt.s32.totalorder %v730, 0
        %v2279 = vand.u32 %v730, 2139095040
        %v2280 = vshrl.u32 %v2279, 23
        %v2281 = vsub.s32 %v2280, 127
        %v2282 = vand.u32 2147483647, %v730
        %v2283 = vand.u32 %v2282, 8388607
        %v2284 = vor.u32 %v2283, 8388608
        %v2285 = vsub.s32 0, %v2284
        %v2286 = vadd.s32 %v2281, 1
        %vm2287 = vcmp.gt.s32.totalorder %v2286, 0
        %v2288 = vsel %vm2287, %v2286, 0
        %v2289 = vshrl.u32 %v2288, 5
        %v2290 = vand.u32 %v2288, 31
        %v2291 = vsub.s32 32, %v2290
        %v2292 = vshrl.u32 683565275, %v2291
        %v2293 = vshll.u32 683565275, %v2290
        %v2294 = vshrl.u32 2475754826, %v2291
        %v2295 = vor.u32 %v2293, %v2294
        %v2296 = vshll.u32 2475754826, %v2290
        %v2297 = vshrl.u32 2131351028, %v2291
        %v2298 = vor.u32 %v2296, %v2297
        %v2299 = vshll.u32 2131351028, %v2290
        %v2300 = vshrl.u32 2102212464, %v2291
        %v2301 = vor.u32 %v2299, %v2300
        %v2302 = vshll.u32 2102212464, %v2290
        %v2303 = vshrl.u32 920167782, %v2291
        %v2304 = vor.u32 %v2302, %v2303
        %v2305 = vshll.u32 920167782, %v2290
        %v2306 = vshrl.u32 1326507024, %v2291
        %v2307 = vor.u32 %v2305, %v2306
        %vm2308 = vcmp.lt.s32.totalorder %v2289, 1
        %vm2309 = vcmp.lt.s32.totalorder %v2289, 2
        %vm2310 = vcmp.lt.s32.totalorder %v2289, 3
        %vm2311 = vcmp.lt.s32.totalorder %v2289, 4
        %v2312 = vsel %vm2308, %v2292, %v2295
        %v2313 = vsel %vm2311, %v2301, 2102212464
        %v2314 = vsel %vm2310, %v2298, %v2313
        %v2315 = vsel %vm2309, %v2312, %v2314
        %v2316 = vsel %vm2308, %v2295, %v2298
        %v2317 = vsel %vm2311, %v2304, 920167782
        %v2318 = vsel %vm2310, %v2301, %v2317
        %v2319 = vsel %vm2309, %v2316, %v2318
        %v2320 = vsel %vm2308, %v2298, %v2301
        %v2321 = vsel %vm2311, %v2307, 1326507024
        %v2322 = vsel %vm2310, %v2304, %v2321
        %v2323 = vsel %vm2309, %v2320, %v2322
        %v2324 = vshll.u32 %v2284, 8
        %v2325 = vand.u32 %v2324, 65535
        %v2326 = vshrl.u32 %v2324, 16
        %v2327 = vand.u32 %v2323, 65535
        %v2328 = vshrl.u32 %v2323, 16
        %v2329 = vmul.u32 %v2325, %v2327
        %v2330 = vmul.u32 %v2325, %v2328
        %v2331 = vmul.u32 %v2326, %v2327
        %v2332 = vmul.u32 %v2326, %v2328
        %v2333 = vshll.u32 %v2330, 16
        %v2334 = vshrl.u32 %v2330, 16
        %v2335 = vshll.u32 %v2331, 16
        %v2336 = vshrl.u32 %v2331, 16
        %vm2337 = vc.u32 %v2329, %v2333
        %v2338 = vsel %vm2337, 1, 0
        %v2339 = vadd.s32 %v2329, %v2333
        %v2340 = vadd.s32 %v2332, %v2338
        %vm2341 = vc.u32 %v2339, %v2335
        %v2342 = vsel %vm2341, 1, 0
        %v2343 = vadd.s32 %v2339, %v2335
        %v2344 = vadd.s32 %v2340, %v2342
        %v2345 = vadd.s32 %v2344, %v2334
        %v2346 = vadd.s32 %v2345, %v2336
        %v2347 = vand.u32 %v2324, 65535
        %v2348 = vshrl.u32 %v2324, 16
        %v2349 = vand.u32 %v2319, 65535
        %v2350 = vshrl.u32 %v2319, 16
        %v2351 = vmul.u32 %v2347, %v2349
        %v2352 = vmul.u32 %v2347, %v2350
        %v2353 = vmul.u32 %v2348, %v2349
        %v2354 = vmul.u32 %v2348, %v2350
        %v2355 = vshll.u32 %v2352, 16
        %v2356 = vshrl.u32 %v2352, 16
        %v2357 = vshll.u32 %v2353, 16
        %v2358 = vshrl.u32 %v2353, 16
        %vm2359 = vc.u32 %v2351, %v2355
        %v2360 = vsel %vm2359, 1, 0
        %v2361 = vadd.s32 %v2351, %v2355
        %v2362 = vadd.s32 %v2354, %v2360
        %vm2363 = vc.u32 %v2361, %v2357
        %v2364 = vsel %vm2363, 1, 0
        %v2365 = vadd.s32 %v2361, %v2357
        %v2366 = vadd.s32 %v2362, %v2364
        %v2367 = vadd.s32 %v2366, %v2356
        %v2368 = vadd.s32 %v2367, %v2358
        %v2369 = vmul.u32 %v2324, %v2315
        %v2370 = vadd.s32 %v2346, %v2365
        %vm2371 = vc.u32 %v2346, %v2365
        %v2372 = vadd.s32 %v2368, 1
        %v2373 = vsel %vm2371, %v2372, %v2368
        %v2374 = vadd.s32 %v2369, %v2373
        %v2375 = vadd.s32 %v2374, 536870912
        %v2376 = vshrl.u32 %v2375, 30
        %v2377 = vshll.u32 %v2376, 30
        %v2378 = vsub.s32 %v2374, %v2377
        %vm2379 = vcmp.lt.s32.totalorder %v2378, 0
        %v2380 = vsub.s32 0, %v2378
        %v2381 = vsel %vm2379, %v2380, %v2378
        %v2382 = vclz %v2381
        %v2383 = vsub.s32 %v2382, 2
        %vm2384 = vcmp.gt.s32.totalorder 0, %v2383
        %v2385 = vsel %vm2384, 0, %v2383
        %v2386 = vsub.s32 32, %v2385
        %v2387 = vshll.u32 %v2378, %v2385
        %v2388 = vshrl.u32 %v2370, %v2386
        %v2389 = vor.u32 %v2387, %v2388
        %v2390 = vsub.s32 4294967266, %v2385
        %v2391 = vadd.s32 %v2390, 127
        %v2392 = vshll.u32 %v2391, 23
        %v2393 = vor.u32 4788187, %v2392
        %v2394 = vand.u32 2147483647, %v2393
        %v2396 = vcvt.s32.f32 %v2389
        %v2397 = vmul.f32 %v2396, %v2394
        %v2398 = vxor.u32 %v2397, 2147483648
        %v2399 = vsel %vm2278, %v2398, %v2397
        %v2400 = vsub.s32 4, %v2376
        %v2401 = vsel %vm2278, %v2400, %v2376
        %v2402 = vsel %vm2277, %v730, %v2399
        %v2403 = vsel %vm2277, 0, %v2401
        %v2404 = vmul.f32 %v2402, %v2402
        %v2405 = vmul.f32 %v2404, -0.001358992
        %v2406 = vadd.f32 %v2405, 0.041655596
        %v2407 = vmul.f32 %v2404, %v2406
        %v2408 = vadd.f32 %v2407, -0.4999988
        %v2409 = vmul.f32 %v2404, %v2408
        %v2410 = vadd.f32 1.0, %v2409
        %v2411 = vmul.f32 %v2402, %v2402
        %v2412 = vmul.f32 %v2411, -0.00019511016
        %v2413 = vadd.f32 %v2412, 0.008332121
        %v2414 = vmul.f32 %v2411, %v2413
        %v2415 = vadd.f32 %v2414, -0.16666654
        %v2416 = vmul.f32 %v2411, %v2415
        %v2417 = vadd.f32 %v2416, 1.0
        %v2418 = vmul.f32 %v2417, %v2402
        %vm2419 = vweird.f32 %v730
        %v2420 = vand.u32 %v2403, 3
        %vm2421 = vcmp.lt.s32.totalorder %v2420, 2
        %vm2422 = vcmp.eq.s32.totalorder %v2420, 0
        %v2423 = vxor.u32 %v2418, 2147483648
        %v2424 = vsel %vm2422, %v2410, %v2423
        %vm2425 = vcmp.eq.s32.totalorder %v2420, 2
        %v2426 = vxor.u32 %v2410, 2147483648
        %v2427 = vsel %vm2425, %v2426, %v2418
        %v2428 = vsel %vm2421, %v2424, %v2427
        %v2429 = vsel %vm2419, nan, %v2428
        %v2430 = vand.u32 2147483647, %v731
        %vm2431 = vcmp.le.f32.partialorder %v2430, 0.7853982
        %vm2432 = vcmp.lt.s32.totalorder %v731, 0
        %v2433 = vand.u32 %v731, 2139095040
        %v2434 = vshrl.u32 %v2433, 23
        %v2435 = vsub.s32 %v2434, 127
        %v2436 = vand.u32 2147483647, %v731
        %v2437 = vand.u32 %v2436, 8388607
        %v2438 = vor.u32 %v2437, 8388608
        %v2439 = vsub.s32 0, %v2438
        %v2440 = vadd.s32 %v2435, 1
        %vm2441 = vcmp.gt.s32.totalorder %v2440, 0
        %v2442 = vsel %vm2441, %v2440, 0
        %v2443 = vshrl.u32 %v2442, 5
        %v2444 = vand.u32 %v2442, 31
        %v2445 = vsub.s32 32, %v2444
        %v2446 = vshrl.u32 683565275, %v2445
        %v2447 = vshll.u32 683565275, %v2444
        %v2448 = vshrl.u32 2475754826, %v2445
        %v2449 = vor.u32 %v2447, %v2448
        %v2450 = vshll.u32 2475754826, %v2444
        %v2451 = vshrl.u32 2131351028, %v2445
        %v2452 = vor.u32 %v2450, %v2451
        %v2453 = vshll.u32 2131351028, %v2444
        %v2454 = vshrl.u32 2102212464, %v2445
        %v2455 = vor.u32 %v2453, %v2454
        %v2456 = vshll.u32 2102212464, %v2444
        %v2457 = vshrl.u32 920167782, %v2445
        %v2458 = vor.u32 %v2456, %v2457
        %v2459 = vshll.u32 920167782, %v2444
        %v2460 = vshrl.u32 1326507024, %v2445
        %v2461 = vor.u32 %v2459, %v2460
        %vm2462 = vcmp.lt.s32.totalorder %v2443, 1
        %vm2463 = vcmp.lt.s32.totalorder %v2443, 2
        %vm2464 = vcmp.lt.s32.totalorder %v2443, 3
        %vm2465 = vcmp.lt.s32.totalorder %v2443, 4
        %v2466 = vsel %vm2462, %v2446, %v2449
        %v2467 = vsel %vm2465, %v2455, 2102212464
        %v2468 = vsel %vm2464, %v2452, %v2467
        %v2469 = vsel %vm2463, %v2466, %v2468
        %v2470 = vsel %vm2462, %v2449, %v2452
        %v2471 = vsel %vm2465, %v2458, 920167782
        %v2472 = vsel %vm2464, %v2455, %v2471
        %v2473 = vsel %vm2463, %v2470, %v2472
        %v2474 = vsel %vm2462, %v2452, %v2455
        %v2475 = vsel %vm2465, %v2461, 1326507024
        %v2476 = vsel %vm2464, %v2458, %v2475
        %v2477 = vsel %vm2463, %v2474, %v2476
        %v2478 = vshll.u32 %v2438, 8
        %v2479 = vand.u32 %v2478, 65535
        %v2480 = vshrl.u32 %v2478, 16
        %v2481 = vand.u32 %v2477, 65535
        %v2482 = vshrl.u32 %v2477, 16
        %v2483 = vmul.u32 %v2479, %v2481
        %v2484 = vmul.u32 %v2479, %v2482
        %v2485 = vmul.u32 %v2480, %v2481
        %v2486 = vmul.u32 %v2480, %v2482
        %v2487 = vshll.u32 %v2484, 16
        %v2488 = vshrl.u32 %v2484, 16
        %v2489 = vshll.u32 %v2485, 16
        %v2490 = vshrl.u32 %v2485, 16
        %vm2491 = vc.u32 %v2483, %v2487
        %v2492 = vsel %vm2491, 1, 0
        %v2493 = vadd.s32 %v2483, %v2487
        %v2494 = vadd.s32 %v2486, %v2492
        %vm2495 = vc.u32 %v2493, %v2489
        %v2496 = vsel %vm2495, 1, 0
        %v2497 = vadd.s32 %v2493, %v2489
        %v2498 = vadd.s32 %v2494, %v2496
        %v2499 = vadd.s32 %v2498, %v2488
        %v2500 = vadd.s32 %v2499, %v2490
        %v2501 = vand.u32 %v2478, 65535
        %v2502 = vshrl.u32 %v2478, 16
        %v2503 = vand.u32 %v2473, 65535
        %v2504 = vshrl.u32 %v2473, 16
        %v2505 = vmul.u32 %v2501, %v2503
        %v2506 = vmul.u32 %v2501, %v2504
        %v2507 = vmul.u32 %v2502, %v2503
        %v2508 = vmul.u32 %v2502, %v2504
        %v2509 = vshll.u32 %v2506, 16
        %v2510 = vshrl.u32 %v2506, 16
        %v2511 = vshll.u32 %v2507, 16
        %v2512 = vshrl.u32 %v2507, 16
        %vm2513 = vc.u32 %v2505, %v2509
        %v2514 = vsel %vm2513, 1, 0
        %v2515 = vadd.s32 %v2505, %v2509
        %v2516 = vadd.s32 %v2508, %v2514
        %vm2517 = vc.u32 %v2515, %v2511
        %v2518 = vsel %vm2517, 1, 0
        %v2519 = vadd.s32 %v2515, %v2511
        %v2520 = vadd.s32 %v2516, %v2518
        %v2521 = vadd.s32 %v2520, %v2510
        %v2522 = vadd.s32 %v2521, %v2512
        %v2523 = vmul.u32 %v2478, %v2469
        %v2524 = vadd.s32 %v2500, %v2519
        %vm2525 = vc.u32 %v2500, %v2519
        %v2526 = vadd.s32 %v2522, 1
        %v2527 = vsel %vm2525, %v2526, %v2522
        %v2528 = vadd.s32 %v2523, %v2527
        %v2529 = vadd.s32 %v2528, 536870912
        %v2530 = vshrl.u32 %v2529, 30
        %v2531 = vshll.u32 %v2530, 30
        %v2532 = vsub.s32 %v2528, %v2531
        %vm2533 = vcmp.lt.s32.totalorder %v2532, 0
        %v2534 = vsub.s32 0, %v2532
        %v2535 = vsel %vm2533, %v2534, %v2532
        %v2536 = vclz %v2535
        %v2537 = vsub.s32 %v2536, 2
        %vm2538 = vcmp.gt.s32.totalorder 0, %v2537
        %v2539 = vsel %vm2538, 0, %v2537
        %v2540 = vsub.s32 32, %v2539
        %v2541 = vshll.u32 %v2532, %v2539
        %v2542 = vshrl.u32 %v2524, %v2540
        %v2543 = vor.u32 %v2541, %v2542
        %v2544 = vsub.s32 4294967266, %v2539
        %v2545 = vadd.s32 %v2544, 127
        %v2546 = vshll.u32 %v2545, 23
        %v2547 = vor.u32 4788187, %v2546
        %v2548 = vand.u32 2147483647, %v2547
        %v2550 = vcvt.s32.f32 %v2543
        %v2551 = vmul.f32 %v2550, %v2548
        %v2552 = vxor.u32 %v2551, 2147483648
        %v2553 = vsel %vm2432, %v2552, %v2551
        %v2554 = vsub.s32 4, %v2530
        %v2555 = vsel %vm2432, %v2554, %v2530
        %v2556 = vsel %vm2431, %v731, %v2553
        %v2557 = vsel %vm2431, 0, %v2555
        %v2558 = vmul.f32 %v2556, %v2556
        %v2559 = vmul.f32 %v2558, -0.001358992
        %v2560 = vadd.f32 %v2559, 0.041655596
        %v2561 = vmul.f32 %v2558, %v2560
        %v2562 = vadd.f32 %v2561, -0.4999988
        %v2563 = vmul.f32 %v2558, %v2562
        %v2564 = vadd.f32 1.0, %v2563
        %v2565 = vmul.f32 %v2556, %v2556
        %v2566 = vmul.f32 %v2565, -0.00019511016
        %v2567 = vadd.f32 %v2566, 0.008332121
        %v2568 = vmul.f32 %v2565, %v2567
        %v2569 = vadd.f32 %v2568, -0.16666654
        %v2570 = vmul.f32 %v2565, %v2569
        %v2571 = vadd.f32 %v2570, 1.0
        %v2572 = vmul.f32 %v2571, %v2556
        %vm2573 = vweird.f32 %v731
        %v2574 = vand.u32 %v2557, 3
        %vm2575 = vcmp.lt.s32.totalorder %v2574, 2
        %vm2576 = vcmp.eq.s32.totalorder %v2574, 0
        %v2577 = vxor.u32 %v2572, 2147483648
        %v2578 = vsel %vm2576, %v2564, %v2577
        %vm2579 = vcmp.eq.s32.totalorder %v2574, 2
        %v2580 = vxor.u32 %v2564, 2147483648
        %v2581 = vsel %vm2579, %v2580, %v2572
        %v2582 = vsel %vm2575, %v2578, %v2581
        %v2583 = vsel %vm2573, nan, %v2582
        %v2584 = vand.u32 2147483647, %v732
        %vm2585 = vcmp.le.f32.partialorder %v2584, 0.7853982
        %vm2586 = vcmp.lt.s32.totalorder %v732, 0
        %v2587 = vand.u32 %v732, 2139095040
        %v2588 = vshrl.u32 %v2587, 23
        %v2589 = vsub.s32 %v2588, 127
        %v2590 = vand.u32 2147483647, %v732
        %v2591 = vand.u32 %v2590, 8388607
        %v2592 = vor.u32 %v2591, 8388608
        %v2593 = vsub.s32 0, %v2592
        %v2594 = vadd.s32 %v2589, 1
        %vm2595 = vcmp.gt.s32.totalorder %v2594, 0
        %v2596 = vsel %vm2595, %v2594, 0
        %v2597 = vshrl.u32 %v2596, 5
        %v2598 = vand.u32 %v2596, 31
        %v2599 = vsub.s32 32, %v2598
        %v2600 = vshrl.u32 683565275, %v2599
        %v2601 = vshll.u32 683565275, %v2598
        %v2602 = vshrl.u32 2475754826, %v2599
        %v2603 = vor.u32 %v2601, %v2602
        %v2604 = vshll.u32 2475754826, %v2598
        %v2605 = vshrl.u32 2131351028, %v2599
        %v2606 = vor.u32 %v2604, %v2605
        %v2607 = vshll.u32 2131351028, %v2598
        %v2608 = vshrl.u32 2102212464, %v2599
        %v2609 = vor.u32 %v2607, %v2608
        %v2610 = vshll.u32 2102212464, %v2598
        %v2611 = vshrl.u32 920167782, %v2599
        %v2612 = vor.u32 %v2610, %v2611
        %v2613 = vshll.u32 920167782, %v2598
        %v2614 = vshrl.u32 1326507024, %v2599
        %v2615 = vor.u32 %v2613, %v2614
        %vm2616 = vcmp.lt.s32.totalorder %v2597, 1
        %vm2617 = vcmp.lt.s32.totalorder %v2597, 2
        %vm2618 = vcmp.lt.s32.totalorder %v2597, 3
        %vm2619 = vcmp.lt.s32.totalorder %v2597, 4
        %v2620 = vsel %vm2616, %v2600, %v2603
        %v2621 = vsel %vm2619, %v2609, 2102212464
        %v2622 = vsel %vm2618, %v2606, %v2621
        %v2623 = vsel %vm2617, %v2620, %v2622
        %v2624 = vsel %vm2616, %v2603, %v2606
        %v2625 = vsel %vm2619, %v2612, 920167782
        %v2626 = vsel %vm2618, %v2609, %v2625
        %v2627 = vsel %vm2617, %v2624, %v2626
        %v2628 = vsel %vm2616, %v2606, %v2609
        %v2629 = vsel %vm2619, %v2615, 1326507024
        %v2630 = vsel %vm2618, %v2612, %v2629
        %v2631 = vsel %vm2617, %v2628, %v2630
        %v2632 = vshll.u32 %v2592, 8
        %v2633 = vand.u32 %v2632, 65535
        %v2634 = vshrl.u32 %v2632, 16
        %v2635 = vand.u32 %v2631, 65535
        %v2636 = vshrl.u32 %v2631, 16
        %v2637 = vmul.u32 %v2633, %v2635
        %v2638 = vmul.u32 %v2633, %v2636
        %v2639 = vmul.u32 %v2634, %v2635
        %v2640 = vmul.u32 %v2634, %v2636
        %v2641 = vshll.u32 %v2638, 16
        %v2642 = vshrl.u32 %v2638, 16
        %v2643 = vshll.u32 %v2639, 16
        %v2644 = vshrl.u32 %v2639, 16
        %vm2645 = vc.u32 %v2637, %v2641
        %v2646 = vsel %vm2645, 1, 0
        %v2647 = vadd.s32 %v2637, %v2641
        %v2648 = vadd.s32 %v2640, %v2646
        %vm2649 = vc.u32 %v2647, %v2643
        %v2650 = vsel %vm2649, 1, 0
        %v2651 = vadd.s32 %v2647, %v2643
        %v2652 = vadd.s32 %v2648, %v2650
        %v2653 = vadd.s32 %v2652, %v2642
        %v2654 = vadd.s32 %v2653, %v2644
        %v2655 = vand.u32 %v2632, 65535
        %v2656 = vshrl.u32 %v2632, 16
        %v2657 = vand.u32 %v2627, 65535
        %v2658 = vshrl.u32 %v2627, 16
        %v2659 = vmul.u32 %v2655, %v2657
        %v2660 = vmul.u32 %v2655, %v2658
        %v2661 = vmul.u32 %v2656, %v2657
        %v2662 = vmul.u32 %v2656, %v2658
        %v2663 = vshll.u32 %v2660, 16
        %v2664 = vshrl.u32 %v2660, 16
        %v2665 = vshll.u32 %v2661, 16
        %v2666 = vshrl.u32 %v2661, 16
        %vm2667 = vc.u32 %v2659, %v2663
        %v2668 = vsel %vm2667, 1, 0
        %v2669 = vadd.s32 %v2659, %v2663
        %v2670 = vadd.s32 %v2662, %v2668
        %vm2671 = vc.u32 %v2669, %v2665
        %v2672 = vsel %vm2671, 1, 0
        %v2673 = vadd.s32 %v2669, %v2665
        %v2674 = vadd.s32 %v2670, %v2672
        %v2675 = vadd.s32 %v2674, %v2664
        %v2676 = vadd.s32 %v2675, %v2666
        %v2677 = vmul.u32 %v2632, %v2623
        %v2678 = vadd.s32 %v2654, %v2673
        %vm2679 = vc.u32 %v2654, %v2673
        %v2680 = vadd.s32 %v2676, 1
        %v2681 = vsel %vm2679, %v2680, %v2676
        %v2682 = vadd.s32 %v2677, %v2681
        %v2683 = vadd.s32 %v2682, 536870912
        %v2684 = vshrl.u32 %v2683, 30
        %v2685 = vshll.u32 %v2684, 30
        %v2686 = vsub.s32 %v2682, %v2685
        %vm2687 = vcmp.lt.s32.totalorder %v2686, 0
        %v2688 = vsub.s32 0, %v2686
        %v2689 = vsel %vm2687, %v2688, %v2686
        %v2690 = vclz %v2689
        %v2691 = vsub.s32 %v2690, 2
        %vm2692 = vcmp.gt.s32.totalorder 0, %v2691
        %v2693 = vsel %vm2692, 0, %v2691
        %v2694 = vsub.s32 32, %v2693
        %v2695 = vshll.u32 %v2686, %v2693
        %v2696 = vshrl.u32 %v2678, %v2694
        %v2697 = vor.u32 %v2695, %v2696
        %v2698 = vsub.s32 4294967266, %v2693
        %v2699 = vadd.s32 %v2698, 127
        %v2700 = vshll.u32 %v2699, 23
        %v2701 = vor.u32 4788187, %v2700
        %v2702 = vand.u32 2147483647, %v2701
        %v2704 = vcvt.s32.f32 %v2697
        %v2705 = vmul.f32 %v2704, %v2702
        %v2706 = vxor.u32 %v2705, 2147483648
        %v2707 = vsel %vm2586, %v2706, %v2705
        %v2708 = vsub.s32 4, %v2684
        %v2709 = vsel %vm2586, %v2708, %v2684
        %v2710 = vsel %vm2585, %v732, %v2707
        %v2711 = vsel %vm2585, 0, %v2709
        %v2712 = vmul.f32 %v2710, %v2710
        %v2713 = vmul.f32 %v2712, -0.001358992
        %v2714 = vadd.f32 %v2713, 0.041655596
        %v2715 = vmul.f32 %v2712, %v2714
        %v2716 = vadd.f32 %v2715, -0.4999988
        %v2717 = vmul.f32 %v2712, %v2716
        %v2718 = vadd.f32 1.0, %v2717
        %v2719 = vmul.f32 %v2710, %v2710
        %v2720 = vmul.f32 %v2719, -0.00019511016
        %v2721 = vadd.f32 %v2720, 0.008332121
        %v2722 = vmul.f32 %v2719, %v2721
        %v2723 = vadd.f32 %v2722, -0.16666654
        %v2724 = vmul.f32 %v2719, %v2723
        %v2725 = vadd.f32 %v2724, 1.0
        %v2726 = vmul.f32 %v2725, %v2710
        %vm2727 = vweird.f32 %v732
        %v2728 = vand.u32 %v2711, 3
        %vm2729 = vcmp.lt.s32.totalorder %v2728, 2
        %vm2730 = vcmp.eq.s32.totalorder %v2728, 0
        %v2731 = vxor.u32 %v2726, 2147483648
        %v2732 = vsel %vm2730, %v2718, %v2731
        %vm2733 = vcmp.eq.s32.totalorder %v2728, 2
        %v2734 = vxor.u32 %v2718, 2147483648
        %v2735 = vsel %vm2733, %v2734, %v2726
        %v2736 = vsel %vm2729, %v2732, %v2735
        %v2737 = vsel %vm2727, nan, %v2736
        %v2738 = vand.u32 2147483647, %v733
        %vm2739 = vcmp.le.f32.partialorder %v2738, 0.7853982
        %vm2740 = vcmp.lt.s32.totalorder %v733, 0
        %v2741 = vand.u32 %v733, 2139095040
        %v2742 = vshrl.u32 %v2741, 23
        %v2743 = vsub.s32 %v2742, 127
        %v2744 = vand.u32 2147483647, %v733
        %v2745 = vand.u32 %v2744, 8388607
        %v2746 = vor.u32 %v2745, 8388608
        %v2747 = vsub.s32 0, %v2746
        %v2748 = vadd.s32 %v2743, 1
        %vm2749 = vcmp.gt.s32.totalorder %v2748, 0
        %v2750 = vsel %vm2749, %v2748, 0
        %v2751 = vshrl.u32 %v2750, 5
        %v2752 = vand.u32 %v2750, 31
        %v2753 = vsub.s32 32, %v2752
        %v2754 = vshrl.u32 683565275, %v2753
        %v2755 = vshll.u32 683565275, %v2752
        %v2756 = vshrl.u32 2475754826, %v2753
        %v2757 = vor.u32 %v2755, %v2756
        %v2758 = vshll.u32 2475754826, %v2752
        %v2759 = vshrl.u32 2131351028, %v2753
        %v2760 = vor.u32 %v2758, %v2759
        %v2761 = vshll.u32 2131351028, %v2752
        %v2762 = vshrl.u32 2102212464, %v2753
        %v2763 = vor.u32 %v2761, %v2762
        %v2764 = vshll.u32 2102212464, %v2752
        %v2765 = vshrl.u32 920167782, %v2753
        %v2766 = vor.u32 %v2764, %v2765
        %v2767 = vshll.u32 920167782, %v2752
        %v2768 = vshrl.u32 1326507024, %v2753
        %v2769 = vor.u32 %v2767, %v2768
        %vm2770 = vcmp.lt.s32.totalorder %v2751, 1
        %vm2771 = vcmp.lt.s32.totalorder %v2751, 2
        %vm2772 = vcmp.lt.s32.totalorder %v2751, 3
        %vm2773 = vcmp.lt.s32.totalorder %v2751, 4
        %v2774 = vsel %vm2770, %v2754, %v2757
        %v2775 = vsel %vm2773, %v2763, 2102212464
        %v2776 = vsel %vm2772, %v2760, %v2775
        %v2777 = vsel %vm2771, %v2774, %v2776
        %v2778 = vsel %vm2770, %v2757, %v2760
        %v2779 = vsel %vm2773, %v2766, 920167782
        %v2780 = vsel %vm2772, %v2763, %v2779
        %v2781 = vsel %vm2771, %v2778, %v2780
        %v2782 = vsel %vm2770, %v2760, %v2763
        %v2783 = vsel %vm2773, %v2769, 1326507024
        %v2784 = vsel %vm2772, %v2766, %v2783
        %v2785 = vsel %vm2771, %v2782, %v2784
        %v2786 = vshll.u32 %v2746, 8
        %v2787 = vand.u32 %v2786, 65535
        %v2788 = vshrl.u32 %v2786, 16
        %v2789 = vand.u32 %v2785, 65535
        %v2790 = vshrl.u32 %v2785, 16
        %v2791 = vmul.u32 %v2787, %v2789
        %v2792 = vmul.u32 %v2787, %v2790
        %v2793 = vmul.u32 %v2788, %v2789
        %v2794 = vmul.u32 %v2788, %v2790
        %v2795 = vshll.u32 %v2792, 16
        %v2796 = vshrl.u32 %v2792, 16
        %v2797 = vshll.u32 %v2793, 16
        %v2798 = vshrl.u32 %v2793, 16
        %vm2799 = vc.u32 %v2791, %v2795
        %v2800 = vsel %vm2799, 1, 0
        %v2801 = vadd.s32 %v2791, %v2795
        %v2802 = vadd.s32 %v2794, %v2800
        %vm2803 = vc.u32 %v2801, %v2797
        %v2804 = vsel %vm2803, 1, 0
        %v2805 = vadd.s32 %v2801, %v2797
        %v2806 = vadd.s32 %v2802, %v2804
        %v2807 = vadd.s32 %v2806, %v2796
        %v2808 = vadd.s32 %v2807, %v2798
        %v2809 = vand.u32 %v2786, 65535
        %v2810 = vshrl.u32 %v2786, 16
        %v2811 = vand.u32 %v2781, 65535
        %v2812 = vshrl.u32 %v2781, 16
        %v2813 = vmul.u32 %v2809, %v2811
        %v2814 = vmul.u32 %v2809, %v2812
        %v2815 = vmul.u32 %v2810, %v2811
        %v2816 = vmul.u32 %v2810, %v2812
        %v2817 = vshll.u32 %v2814, 16
        %v2818 = vshrl.u32 %v2814, 16
        %v2819 = vshll.u32 %v2815, 16
        %v2820 = vshrl.u32 %v2815, 16
        %vm2821 = vc.u32 %v2813, %v2817
        %v2822 = vsel %vm2821, 1, 0
        %v2823 = vadd.s32 %v2813, %v2817
        %v2824 = vadd.s32 %v2816, %v2822
        %vm2825 = vc.u32 %v2823, %v2819
        %v2826 = vsel %vm2825, 1, 0
        %v2827 = vadd.s32 %v2823, %v2819
        %v2828 = vadd.s32 %v2824, %v2826
        %v2829 = vadd.s32 %v2828, %v2818
        %v2830 = vadd.s32 %v2829, %v2820
        %v2831 = vmul.u32 %v2786, %v2777
        %v2832 = vadd.s32 %v2808, %v2827
        %vm2833 = vc.u32 %v2808, %v2827
        %v2834 = vadd.s32 %v2830, 1
        %v2835 = vsel %vm2833, %v2834, %v2830
        %v2836 = vadd.s32 %v2831, %v2835
        %v2837 = vadd.s32 %v2836, 536870912
        %v2838 = vshrl.u32 %v2837, 30
        %v2839 = vshll.u32 %v2838, 30
        %v2840 = vsub.s32 %v2836, %v2839
        %vm2841 = vcmp.lt.s32.totalorder %v2840, 0
        %v2842 = vsub.s32 0, %v2840
        %v2843 = vsel %vm2841, %v2842, %v2840
        %v2844 = vclz %v2843
        %v2845 = vsub.s32 %v2844, 2
        %vm2846 = vcmp.gt.s32.totalorder 0, %v2845
        %v2847 = vsel %vm2846, 0, %v2845
        %v2848 = vsub.s32 32, %v2847
        %v2849 = vshll.u32 %v2840, %v2847
        %v2850 = vshrl.u32 %v2832, %v2848
        %v2851 = vor.u32 %v2849, %v2850
        %v2852 = vsub.s32 4294967266, %v2847
        %v2853 = vadd.s32 %v2852, 127
        %v2854 = vshll.u32 %v2853, 23
        %v2855 = vor.u32 4788187, %v2854
        %v2856 = vand.u32 2147483647, %v2855
        %v2858 = vcvt.s32.f32 %v2851
        %v2859 = vmul.f32 %v2858, %v2856
        %v2860 = vxor.u32 %v2859, 2147483648
        %v2861 = vsel %vm2740, %v2860, %v2859
        %v2862 = vsub.s32 4, %v2838
        %v2863 = vsel %vm2740, %v2862, %v2838
        %v2864 = vsel %vm2739, %v733, %v2861
        %v2865 = vsel %vm2739, 0, %v2863
        %v2866 = vmul.f32 %v2864, %v2864
        %v2867 = vmul.f32 %v2866, -0.001358992
        %v2868 = vadd.f32 %v2867, 0.041655596
        %v2869 = vmul.f32 %v2866, %v2868
        %v2870 = vadd.f32 %v2869, -0.4999988
        %v2871 = vmul.f32 %v2866, %v2870
        %v2872 = vadd.f32 1.0, %v2871
        %v2873 = vmul.f32 %v2864, %v2864
        %v2874 = vmul.f32 %v2873, -0.00019511016
        %v2875 = vadd.f32 %v2874, 0.008332121
        %v2876 = vmul.f32 %v2873, %v2875
        %v2877 = vadd.f32 %v2876, -0.16666654
        %v2878 = vmul.f32 %v2873, %v2877
        %v2879 = vadd.f32 %v2878, 1.0
        %v2880 = vmul.f32 %v2879, %v2864
        %vm2881 = vweird.f32 %v733
        %v2882 = vand.u32 %v2865, 3
        %vm2883 = vcmp.lt.s32.totalorder %v2882, 2
        %vm2884 = vcmp.eq.s32.totalorder %v2882, 0
        %v2885 = vxor.u32 %v2880, 2147483648
        %v2886 = vsel %vm2884, %v2872, %v2885
        %vm2887 = vcmp.eq.s32.totalorder %v2882, 2
        %v2888 = vxor.u32 %v2872, 2147483648
        %v2889 = vsel %vm2887, %v2888, %v2880
        %v2890 = vsel %vm2883, %v2886, %v2889
        %v2891 = vsel %vm2881, nan, %v2890
        %v2892 = vand.u32 2147483647, %v734
        %vm2893 = vcmp.le.f32.partialorder %v2892, 0.7853982
        %vm2894 = vcmp.lt.s32.totalorder %v734, 0
        %v2895 = vand.u32 %v734, 2139095040
        %v2896 = vshrl.u32 %v2895, 23
        %v2897 = vsub.s32 %v2896, 127
        %v2898 = vand.u32 2147483647, %v734
        %v2899 = vand.u32 %v2898, 8388607
        %v2900 = vor.u32 %v2899, 8388608
        %v2901 = vsub.s32 0, %v2900
        %v2902 = vadd.s32 %v2897, 1
        %vm2903 = vcmp.gt.s32.totalorder %v2902, 0
        %v2904 = vsel %vm2903, %v2902, 0
        %v2905 = vshrl.u32 %v2904, 5
        %v2906 = vand.u32 %v2904, 31
        %v2907 = vsub.s32 32, %v2906
        %v2908 = vshrl.u32 683565275, %v2907
        %v2909 = vshll.u32 683565275, %v2906
        %v2910 = vshrl.u32 2475754826, %v2907
        %v2911 = vor.u32 %v2909, %v2910
        %v2912 = vshll.u32 2475754826, %v2906
        %v2913 = vshrl.u32 2131351028, %v2907
        %v2914 = vor.u32 %v2912, %v2913
        %v2915 = vshll.u32 2131351028, %v2906
        %v2916 = vshrl.u32 2102212464, %v2907
        %v2917 = vor.u32 %v2915, %v2916
        %v2918 = vshll.u32 2102212464, %v2906
        %v2919 = vshrl.u32 920167782, %v2907
        %v2920 = vor.u32 %v2918, %v2919
        %v2921 = vshll.u32 920167782, %v2906
        %v2922 = vshrl.u32 1326507024, %v2907
        %v2923 = vor.u32 %v2921, %v2922
        %vm2924 = vcmp.lt.s32.totalorder %v2905, 1
        %vm2925 = vcmp.lt.s32.totalorder %v2905, 2
        %vm2926 = vcmp.lt.s32.totalorder %v2905, 3
        %vm2927 = vcmp.lt.s32.totalorder %v2905, 4
        %v2928 = vsel %vm2924, %v2908, %v2911
        %v2929 = vsel %vm2927, %v2917, 2102212464
        %v2930 = vsel %vm2926, %v2914, %v2929
        %v2931 = vsel %vm2925, %v2928, %v2930
        %v2932 = vsel %vm2924, %v2911, %v2914
        %v2933 = vsel %vm2927, %v2920, 920167782
        %v2934 = vsel %vm2926, %v2917, %v2933
        %v2935 = vsel %vm2925, %v2932, %v2934
        %v2936 = vsel %vm2924, %v2914, %v2917
        %v2937 = vsel %vm2927, %v2923, 1326507024
        %v2938 = vsel %vm2926, %v2920, %v2937
        %v2939 = vsel %vm2925, %v2936, %v2938
        %v2940 = vshll.u32 %v2900, 8
        %v2941 = vand.u32 %v2940, 65535
        %v2942 = vshrl.u32 %v2940, 16
        %v2943 = vand.u32 %v2939, 65535
        %v2944 = vshrl.u32 %v2939, 16
        %v2945 = vmul.u32 %v2941, %v2943
        %v2946 = vmul.u32 %v2941, %v2944
        %v2947 = vmul.u32 %v2942, %v2943
        %v2948 = vmul.u32 %v2942, %v2944
        %v2949 = vshll.u32 %v2946, 16
        %v2950 = vshrl.u32 %v2946, 16
        %v2951 = vshll.u32 %v2947, 16
        %v2952 = vshrl.u32 %v2947, 16
        %vm2953 = vc.u32 %v2945, %v2949
        %v2954 = vsel %vm2953, 1, 0
        %v2955 = vadd.s32 %v2945, %v2949
        %v2956 = vadd.s32 %v2948, %v2954
        %vm2957 = vc.u32 %v2955, %v2951
        %v2958 = vsel %vm2957, 1, 0
        %v2959 = vadd.s32 %v2955, %v2951
        %v2960 = vadd.s32 %v2956, %v2958
        %v2961 = vadd.s32 %v2960, %v2950
        %v2962 = vadd.s32 %v2961, %v2952
        %v2963 = vand.u32 %v2940, 65535
        %v2964 = vshrl.u32 %v2940, 16
        %v2965 = vand.u32 %v2935, 65535
        %v2966 = vshrl.u32 %v2935, 16
        %v2967 = vmul.u32 %v2963, %v2965
        %v2968 = vmul.u32 %v2963, %v2966
        %v2969 = vmul.u32 %v2964, %v2965
        %v2970 = vmul.u32 %v2964, %v2966
        %v2971 = vshll.u32 %v2968, 16
        %v2972 = vshrl.u32 %v2968, 16
        %v2973 = vshll.u32 %v2969, 16
        %v2974 = vshrl.u32 %v2969, 16
        %vm2975 = vc.u32 %v2967, %v2971
        %v2976 = vsel %vm2975, 1, 0
        %v2977 = vadd.s32 %v2967, %v2971
        %v2978 = vadd.s32 %v2970, %v2976
        %vm2979 = vc.u32 %v2977, %v2973
        %v2980 = vsel %vm2979, 1, 0
        %v2981 = vadd.s32 %v2977, %v2973
        %v2982 = vadd.s32 %v2978, %v2980
        %v2983 = vadd.s32 %v2982, %v2972
        %v2984 = vadd.s32 %v2983, %v2974
        %v2985 = vmul.u32 %v2940, %v2931
        %v2986 = vadd.s32 %v2962, %v2981
        %vm2987 = vc.u32 %v2962, %v2981
        %v2988 = vadd.s32 %v2984, 1
        %v2989 = vsel %vm2987, %v2988, %v2984
        %v2990 = vadd.s32 %v2985, %v2989
        %v2991 = vadd.s32 %v2990, 536870912
        %v2992 = vshrl.u32 %v2991, 30
        %v2993 = vshll.u32 %v2992, 30
        %v2994 = vsub.s32 %v2990, %v2993
        %vm2995 = vcmp.lt.s32.totalorder %v2994, 0
        %v2996 = vsub.s32 0, %v2994
        %v2997 = vsel %vm2995, %v2996, %v2994
        %v2998 = vclz %v2997
        %v2999 = vsub.s32 %v2998, 2
        %vm3000 = vcmp.gt.s32.totalorder 0, %v2999
        %v3001 = vsel %vm3000, 0, %v2999
        %v3002 = vsub.s32 32, %v3001
        %v3003 = vshll.u32 %v2994, %v3001
        %v3004 = vshrl.u32 %v2986, %v3002
        %v3005 = vor.u32 %v3003, %v3004
        %v3006 = vsub.s32 4294967266, %v3001
        %v3007 = vadd.s32 %v3006, 127
        %v3008 = vshll.u32 %v3007, 23
        %v3009 = vor.u32 4788187, %v3008
        %v3010 = vand.u32 2147483647, %v3009
        %v3012 = vcvt.s32.f32 %v3005
        %v3013 = vmul.f32 %v3012, %v3010
        %v3014 = vxor.u32 %v3013, 2147483648
        %v3015 = vsel %vm2894, %v3014, %v3013
        %v3016 = vsub.s32 4, %v2992
        %v3017 = vsel %vm2894, %v3016, %v2992
        %v3018 = vsel %vm2893, %v734, %v3015
        %v3019 = vsel %vm2893, 0, %v3017
        %v3020 = vmul.f32 %v3018, %v3018
        %v3021 = vmul.f32 %v3020, -0.001358992
        %v3022 = vadd.f32 %v3021, 0.041655596
        %v3023 = vmul.f32 %v3020, %v3022
        %v3024 = vadd.f32 %v3023, -0.4999988
        %v3025 = vmul.f32 %v3020, %v3024
        %v3026 = vadd.f32 1.0, %v3025
        %v3027 = vmul.f32 %v3018, %v3018
        %v3028 = vmul.f32 %v3027, -0.00019511016
        %v3029 = vadd.f32 %v3028, 0.008332121
        %v3030 = vmul.f32 %v3027, %v3029
        %v3031 = vadd.f32 %v3030, -0.16666654
        %v3032 = vmul.f32 %v3027, %v3031
        %v3033 = vadd.f32 %v3032, 1.0
        %v3034 = vmul.f32 %v3033, %v3018
        %vm3035 = vweird.f32 %v734
        %v3036 = vand.u32 %v3019, 3
        %vm3037 = vcmp.lt.s32.totalorder %v3036, 2
        %vm3038 = vcmp.eq.s32.totalorder %v3036, 0
        %v3039 = vxor.u32 %v3034, 2147483648
        %v3040 = vsel %vm3038, %v3026, %v3039
        %vm3041 = vcmp.eq.s32.totalorder %v3036, 2
        %v3042 = vxor.u32 %v3026, 2147483648
        %v3043 = vsel %vm3041, %v3042, %v3034
        %v3044 = vsel %vm3037, %v3040, %v3043
        %v3045 = vsel %vm3035, nan, %v3044
        %v3046 = vand.u32 2147483647, %v735
        %vm3047 = vcmp.le.f32.partialorder %v3046, 0.7853982
        %vm3048 = vcmp.lt.s32.totalorder %v735, 0
        %v3049 = vand.u32 %v735, 2139095040
        %v3050 = vshrl.u32 %v3049, 23
        %v3051 = vsub.s32 %v3050, 127
        %v3052 = vand.u32 2147483647, %v735
        %v3053 = vand.u32 %v3052, 8388607
        %v3054 = vor.u32 %v3053, 8388608
        %v3055 = vsub.s32 0, %v3054
        %v3056 = vadd.s32 %v3051, 1
        %vm3057 = vcmp.gt.s32.totalorder %v3056, 0
        %v3058 = vsel %vm3057, %v3056, 0
        %v3059 = vshrl.u32 %v3058, 5
        %v3060 = vand.u32 %v3058, 31
        %v3061 = vsub.s32 32, %v3060
        %v3062 = vshrl.u32 683565275, %v3061
        %v3063 = vshll.u32 683565275, %v3060
        %v3064 = vshrl.u32 2475754826, %v3061
        %v3065 = vor.u32 %v3063, %v3064
        %v3066 = vshll.u32 2475754826, %v3060
        %v3067 = vshrl.u32 2131351028, %v3061
        %v3068 = vor.u32 %v3066, %v3067
        %v3069 = vshll.u32 2131351028, %v3060
        %v3070 = vshrl.u32 2102212464, %v3061
        %v3071 = vor.u32 %v3069, %v3070
        %v3072 = vshll.u32 2102212464, %v3060
        %v3073 = vshrl.u32 920167782, %v3061
        %v3074 = vor.u32 %v3072, %v3073
        %v3075 = vshll.u32 920167782, %v3060
        %v3076 = vshrl.u32 1326507024, %v3061
        %v3077 = vor.u32 %v3075, %v3076
        %vm3078 = vcmp.lt.s32.totalorder %v3059, 1
        %vm3079 = vcmp.lt.s32.totalorder %v3059, 2
        %vm3080 = vcmp.lt.s32.totalorder %v3059, 3
        %vm3081 = vcmp.lt.s32.totalorder %v3059, 4
        %v3082 = vsel %vm3078, %v3062, %v3065
        %v3083 = vsel %vm3081, %v3071, 2102212464
        %v3084 = vsel %vm3080, %v3068, %v3083
        %v3085 = vsel %vm3079, %v3082, %v3084
        %v3086 = vsel %vm3078, %v3065, %v3068
        %v3087 = vsel %vm3081, %v3074, 920167782
        %v3088 = vsel %vm3080, %v3071, %v3087
        %v3089 = vsel %vm3079, %v3086, %v3088
        %v3090 = vsel %vm3078, %v3068, %v3071
        %v3091 = vsel %vm3081, %v3077, 1326507024
        %v3092 = vsel %vm3080, %v3074, %v3091
        %v3093 = vsel %vm3079, %v3090, %v3092
        %v3094 = vshll.u32 %v3054, 8
        %v3095 = vand.u32 %v3094, 65535
        %v3096 = vshrl.u32 %v3094, 16
        %v3097 = vand.u32 %v3093, 65535
        %v3098 = vshrl.u32 %v3093, 16
        %v3099 = vmul.u32 %v3095, %v3097
        %v3100 = vmul.u32 %v3095, %v3098
        %v3101 = vmul.u32 %v3096, %v3097
        %v3102 = vmul.u32 %v3096, %v3098
        %v3103 = vshll.u32 %v3100, 16
        %v3104 = vshrl.u32 %v3100, 16
        %v3105 = vshll.u32 %v3101, 16
        %v3106 = vshrl.u32 %v3101, 16
        %vm3107 = vc.u32 %v3099, %v3103
        %v3108 = vsel %vm3107, 1, 0
        %v3109 = vadd.s32 %v3099, %v3103
        %v3110 = vadd.s32 %v3102, %v3108
        %vm3111 = vc.u32 %v3109, %v3105
        %v3112 = vsel %vm3111, 1, 0
        %v3113 = vadd.s32 %v3109, %v3105
        %v3114 = vadd.s32 %v3110, %v3112
        %v3115 = vadd.s32 %v3114, %v3104
        %v3116 = vadd.s32 %v3115, %v3106
        %v3117 = vand.u32 %v3094, 65535
        %v3118 = vshrl.u32 %v3094, 16
        %v3119 = vand.u32 %v3089, 65535
        %v3120 = vshrl.u32 %v3089, 16
        %v3121 = vmul.u32 %v3117, %v3119
        %v3122 = vmul.u32 %v3117, %v3120
        %v3123 = vmul.u32 %v3118, %v3119
        %v3124 = vmul.u32 %v3118, %v3120
        %v3125 = vshll.u32 %v3122, 16
        %v3126 = vshrl.u32 %v3122, 16
        %v3127 = vshll.u32 %v3123, 16
        %v3128 = vshrl.u32 %v3123, 16
        %vm3129 = vc.u32 %v3121, %v3125
        %v3130 = vsel %vm3129, 1, 0
        %v3131 = vadd.s32 %v3121, %v3125
        %v3132 = vadd.s32 %v3124, %v3130
        %vm3133 = vc.u32 %v3131, %v3127
        %v3134 = vsel %vm3133, 1, 0
        %v3135 = vadd.s32 %v3131, %v3127
        %v3136 = vadd.s32 %v3132, %v3134
        %v3137 = vadd.s32 %v3136, %v3126
        %v3138 = vadd.s32 %v3137, %v3128
        %v3139 = vmul.u32 %v3094, %v3085
        %v3140 = vadd.s32 %v3116, %v3135
        %vm3141 = vc.u32 %v3116, %v3135
        %v3142 = vadd.s32 %v3138, 1
        %v3143 = vsel %vm3141, %v3142, %v3138
        %v3144 = vadd.s32 %v3139, %v3143
        %v3145 = vadd.s32 %v3144, 536870912
        %v3146 = vshrl.u32 %v3145, 30
        %v3147 = vshll.u32 %v3146, 30
        %v3148 = vsub.s32 %v3144, %v3147
        %vm3149 = vcmp.lt.s32.totalorder %v3148, 0
        %v3150 = vsub.s32 0, %v3148
        %v3151 = vsel %vm3149, %v3150, %v3148
        %v3152 = vclz %v3151
        %v3153 = vsub.s32 %v3152, 2
        %vm3154 = vcmp.gt.s32.totalorder 0, %v3153
        %v3155 = vsel %vm3154, 0, %v3153
        %v3156 = vsub.s32 32, %v3155
        %v3157 = vshll.u32 %v3148, %v3155
        %v3158 = vshrl.u32 %v3140, %v3156
        %v3159 = vor.u32 %v3157, %v3158
        %v3160 = vsub.s32 4294967266, %v3155
        %v3161 = vadd.s32 %v3160, 127
        %v3162 = vshll.u32 %v3161, 23
        %v3163 = vor.u32 4788187, %v3162
        %v3164 = vand.u32 2147483647, %v3163
        %v3166 = vcvt.s32.f32 %v3159
        %v3167 = vmul.f32 %v3166, %v3164
        %v3168 = vxor.u32 %v3167, 2147483648
        %v3169 = vsel %vm3048, %v3168, %v3167
        %v3170 = vsub.s32 4, %v3146
        %v3171 = vsel %vm3048, %v3170, %v3146
        %v3172 = vsel %vm3047, %v735, %v3169
        %v3173 = vsel %vm3047, 0, %v3171
        %v3174 = vmul.f32 %v3172, %v3172
        %v3175 = vmul.f32 %v3174, -0.001358992
        %v3176 = vadd.f32 %v3175, 0.041655596
        %v3177 = vmul.f32 %v3174, %v3176
        %v3178 = vadd.f32 %v3177, -0.4999988
        %v3179 = vmul.f32 %v3174, %v3178
        %v3180 = vadd.f32 1.0, %v3179
        %v3181 = vmul.f32 %v3172, %v3172
        %v3182 = vmul.f32 %v3181, -0.00019511016
        %v3183 = vadd.f32 %v3182, 0.008332121
        %v3184 = vmul.f32 %v3181, %v3183
        %v3185 = vadd.f32 %v3184, -0.16666654
        %v3186 = vmul.f32 %v3181, %v3185
        %v3187 = vadd.f32 %v3186, 1.0
        %v3188 = vmul.f32 %v3187, %v3172
        %vm3189 = vweird.f32 %v735
        %v3190 = vand.u32 %v3173, 3
        %vm3191 = vcmp.lt.s32.totalorder %v3190, 2
        %vm3192 = vcmp.eq.s32.totalorder %v3190, 0
        %v3193 = vxor.u32 %v3188, 2147483648
        %v3194 = vsel %vm3192, %v3180, %v3193
        %vm3195 = vcmp.eq.s32.totalorder %v3190, 2
        %v3196 = vxor.u32 %v3180, 2147483648
        %v3197 = vsel %vm3195, %v3196, %v3188
        %v3198 = vsel %vm3191, %v3194, %v3197
        %v3199 = vsel %vm3189, nan, %v3198
        %v3200 = vand.u32 2147483647, %v720
        %vm3201 = vcmp.le.f32.partialorder %v3200, 0.7853982
        %vm3202 = vcmp.lt.s32.totalorder %v720, 0
        %v3203 = vand.u32 %v720, 2139095040
        %v3204 = vshrl.u32 %v3203, 23
        %v3205 = vsub.s32 %v3204, 127
        %v3206 = vand.u32 2147483647, %v720
        %v3207 = vand.u32 %v3206, 8388607
        %v3208 = vor.u32 %v3207, 8388608
        %v3209 = vsub.s32 0, %v3208
        %v3210 = vadd.s32 %v3205, 1
        %vm3211 = vcmp.gt.s32.totalorder %v3210, 0
        %v3212 = vsel %vm3211, %v3210, 0
        %v3213 = vshrl.u32 %v3212, 5
        %v3214 = vand.u32 %v3212, 31
        %v3215 = vsub.s32 32, %v3214
        %v3216 = vshrl.u32 683565275, %v3215
        %v3217 = vshll.u32 683565275, %v3214
        %v3218 = vshrl.u32 2475754826, %v3215
        %v3219 = vor.u32 %v3217, %v3218
        %v3220 = vshll.u32 2475754826, %v3214
        %v3221 = vshrl.u32 2131351028, %v3215
        %v3222 = vor.u32 %v3220, %v3221
        %v3223 = vshll.u32 2131351028, %v3214
        %v3224 = vshrl.u32 2102212464, %v3215
        %v3225 = vor.u32 %v3223, %v3224
        %v3226 = vshll.u32 2102212464, %v3214
        %v3227 = vshrl.u32 920167782, %v3215
        %v3228 = vor.u32 %v3226, %v3227
        %v3229 = vshll.u32 920167782, %v3214
        %v3230 = vshrl.u32 1326507024, %v3215
        %v3231 = vor.u32 %v3229, %v3230
        %vm3232 = vcmp.lt.s32.totalorder %v3213, 1
        %vm3233 = vcmp.lt.s32.totalorder %v3213, 2
        %vm3234 = vcmp.lt.s32.totalorder %v3213, 3
        %vm3235 = vcmp.lt.s32.totalorder %v3213, 4
        %v3236 = vsel %vm3232, %v3216, %v3219
        %v3237 = vsel %vm3235, %v3225, 2102212464
        %v3238 = vsel %vm3234, %v3222, %v3237
        %v3239 = vsel %vm3233, %v3236, %v3238
        %v3240 = vsel %vm3232, %v3219, %v3222
        %v3241 = vsel %vm3235, %v3228, 920167782
        %v3242 = vsel %vm3234, %v3225, %v3241
        %v3243 = vsel %vm3233, %v3240, %v3242
        %v3244 = vsel %vm3232, %v3222, %v3225
        %v3245 = vsel %vm3235, %v3231, 1326507024
        %v3246 = vsel %vm3234, %v3228, %v3245
        %v3247 = vsel %vm3233, %v3244, %v3246
        %v3248 = vshll.u32 %v3208, 8
        %v3249 = vand.u32 %v3248, 65535
        %v3250 = vshrl.u32 %v3248, 16
        %v3251 = vand.u32 %v3247, 65535
        %v3252 = vshrl.u32 %v3247, 16
        %v3253 = vmul.u32 %v3249, %v3251
        %v3254 = vmul.u32 %v3249, %v3252
        %v3255 = vmul.u32 %v3250, %v3251
        %v3256 = vmul.u32 %v3250, %v3252
        %v3257 = vshll.u32 %v3254, 16
        %v3258 = vshrl.u32 %v3254, 16
        %v3259 = vshll.u32 %v3255, 16
        %v3260 = vshrl.u32 %v3255, 16
        %vm3261 = vc.u32 %v3253, %v3257
        %v3262 = vsel %vm3261, 1, 0
        %v3263 = vadd.s32 %v3253, %v3257
        %v3264 = vadd.s32 %v3256, %v3262
        %vm3265 = vc.u32 %v3263, %v3259
        %v3266 = vsel %vm3265, 1, 0
        %v3267 = vadd.s32 %v3263, %v3259
        %v3268 = vadd.s32 %v3264, %v3266
        %v3269 = vadd.s32 %v3268, %v3258
        %v3270 = vadd.s32 %v3269, %v3260
        %v3271 = vand.u32 %v3248, 65535
        %v3272 = vshrl.u32 %v3248, 16
        %v3273 = vand.u32 %v3243, 65535
        %v3274 = vshrl.u32 %v3243, 16
        %v3275 = vmul.u32 %v3271, %v3273
        %v3276 = vmul.u32 %v3271, %v3274
        %v3277 = vmul.u32 %v3272, %v3273
        %v3278 = vmul.u32 %v3272, %v3274
        %v3279 = vshll.u32 %v3276, 16
        %v3280 = vshrl.u32 %v3276, 16
        %v3281 = vshll.u32 %v3277, 16
        %v3282 = vshrl.u32 %v3277, 16
        %vm3283 = vc.u32 %v3275, %v3279
        %v3284 = vsel %vm3283, 1, 0
        %v3285 = vadd.s32 %v3275, %v3279
        %v3286 = vadd.s32 %v3278, %v3284
        %vm3287 = vc.u32 %v3285, %v3281
        %v3288 = vsel %vm3287, 1, 0
        %v3289 = vadd.s32 %v3285, %v3281
        %v3290 = vadd.s32 %v3286, %v3288
        %v3291 = vadd.s32 %v3290, %v3280
        %v3292 = vadd.s32 %v3291, %v3282
        %v3293 = vmul.u32 %v3248, %v3239
        %v3294 = vadd.s32 %v3270, %v3289
        %vm3295 = vc.u32 %v3270, %v3289
        %v3296 = vadd.s32 %v3292, 1
        %v3297 = vsel %vm3295, %v3296, %v3292
        %v3298 = vadd.s32 %v3293, %v3297
        %v3299 = vadd.s32 %v3298, 536870912
        %v3300 = vshrl.u32 %v3299, 30
        %v3301 = vshll.u32 %v3300, 30
        %v3302 = vsub.s32 %v3298, %v3301
        %vm3303 = vcmp.lt.s32.totalorder %v3302, 0
        %v3304 = vsub.s32 0, %v3302
        %v3305 = vsel %vm3303, %v3304, %v3302
        %v3306 = vclz %v3305
        %v3307 = vsub.s32 %v3306, 2
        %vm3308 = vcmp.gt.s32.totalorder 0, %v3307
        %v3309 = vsel %vm3308, 0, %v3307
        %v3310 = vsub.s32 32, %v3309
        %v3311 = vshll.u32 %v3302, %v3309
        %v3312 = vshrl.u32 %v3294, %v3310
        %v3313 = vor.u32 %v3311, %v3312
        %v3314 = vsub.s32 4294967266, %v3309
        %v3315 = vadd.s32 %v3314, 127
        %v3316 = vshll.u32 %v3315, 23
        %v3317 = vor.u32 4788187, %v3316
        %v3318 = vand.u32 2147483647, %v3317
        %v3320 = vcvt.s32.f32 %v3313
        %v3321 = vmul.f32 %v3320, %v3318
        %v3322 = vxor.u32 %v3321, 2147483648
        %v3323 = vsel %vm3202, %v3322, %v3321
        %v3324 = vsub.s32 4, %v3300
        %v3325 = vsel %vm3202, %v3324, %v3300
        %v3326 = vsel %vm3201, %v720, %v3323
        %v3327 = vsel %vm3201, 0, %v3325
        %v3328 = vmul.f32 %v3326, %v3326
        %v3329 = vmul.f32 %v3328, -0.001358992
        %v3330 = vadd.f32 %v3329, 0.041655596
        %v3331 = vmul.f32 %v3328, %v3330
        %v3332 = vadd.f32 %v3331, -0.4999988
        %v3333 = vmul.f32 %v3328, %v3332
        %v3334 = vadd.f32 1.0, %v3333
        %v3335 = vmul.f32 %v3326, %v3326
        %v3336 = vmul.f32 %v3335, -0.00019511016
        %v3337 = vadd.f32 %v3336, 0.008332121
        %v3338 = vmul.f32 %v3335, %v3337
        %v3339 = vadd.f32 %v3338, -0.16666654
        %v3340 = vmul.f32 %v3335, %v3339
        %v3341 = vadd.f32 %v3340, 1.0
        %v3342 = vmul.f32 %v3341, %v3326
        %vm3343 = vweird.f32 %v720
        %v3344 = vadd.s32 %v3327, 3
        %v3345 = vand.u32 %v3344, 3
        %vm3346 = vcmp.lt.s32.totalorder %v3345, 2
        %vm3347 = vcmp.eq.s32.totalorder %v3345, 0
        %v3348 = vxor.u32 %v3342, 2147483648
        %v3349 = vsel %vm3347, %v3334, %v3348
        %vm3350 = vcmp.eq.s32.totalorder %v3345, 2
        %v3351 = vxor.u32 %v3334, 2147483648
        %v3352 = vsel %vm3350, %v3351, %v3342
        %v3353 = vsel %vm3346, %v3349, %v3352
        %v3354 = vsel %vm3343, nan, %v3353
        %v3355 = vand.u32 2147483647, %v721
        %vm3356 = vcmp.le.f32.partialorder %v3355, 0.7853982
        %vm3357 = vcmp.lt.s32.totalorder %v721, 0
        %v3358 = vand.u32 %v721, 2139095040
        %v3359 = vshrl.u32 %v3358, 23
        %v3360 = vsub.s32 %v3359, 127
        %v3361 = vand.u32 2147483647, %v721
        %v3362 = vand.u32 %v3361, 8388607
        %v3363 = vor.u32 %v3362, 8388608
        %v3364 = vsub.s32 0, %v3363
        %v3365 = vadd.s32 %v3360, 1
        %vm3366 = vcmp.gt.s32.totalorder %v3365, 0
        %v3367 = vsel %vm3366, %v3365, 0
        %v3368 = vshrl.u32 %v3367, 5
        %v3369 = vand.u32 %v3367, 31
        %v3370 = vsub.s32 32, %v3369
        %v3371 = vshrl.u32 683565275, %v3370
        %v3372 = vshll.u32 683565275, %v3369
        %v3373 = vshrl.u32 2475754826, %v3370
        %v3374 = vor.u32 %v3372, %v3373
        %v3375 = vshll.u32 2475754826, %v3369
        %v3376 = vshrl.u32 2131351028, %v3370
        %v3377 = vor.u32 %v3375, %v3376
        %v3378 = vshll.u32 2131351028, %v3369
        %v3379 = vshrl.u32 2102212464, %v3370
        %v3380 = vor.u32 %v3378, %v3379
        %v3381 = vshll.u32 2102212464, %v3369
        %v3382 = vshrl.u32 920167782, %v3370
        %v3383 = vor.u32 %v3381, %v3382
        %v3384 = vshll.u32 920167782, %v3369
        %v3385 = vshrl.u32 1326507024, %v3370
        %v3386 = vor.u32 %v3384, %v3385
        %vm3387 = vcmp.lt.s32.totalorder %v3368, 1
        %vm3388 = vcmp.lt.s32.totalorder %v3368, 2
        %vm3389 = vcmp.lt.s32.totalorder %v3368, 3
        %vm3390 = vcmp.lt.s32.totalorder %v3368, 4
        %v3391 = vsel %vm3387, %v3371, %v3374
        %v3392 = vsel %vm3390, %v3380, 2102212464
        %v3393 = vsel %vm3389, %v3377, %v3392
        %v3394 = vsel %vm3388, %v3391, %v3393
        %v3395 = vsel %vm3387, %v3374, %v3377
        %v3396 = vsel %vm3390, %v3383, 920167782
        %v3397 = vsel %vm3389, %v3380, %v3396
        %v3398 = vsel %vm3388, %v3395, %v3397
        %v3399 = vsel %vm3387, %v3377, %v3380
        %v3400 = vsel %vm3390, %v3386, 1326507024
        %v3401 = vsel %vm3389, %v3383, %v3400
        %v3402 = vsel %vm3388, %v3399, %v3401
        %v3403 = vshll.u32 %v3363, 8
        %v3404 = vand.u32 %v3403, 65535
        %v3405 = vshrl.u32 %v3403, 16
        %v3406 = vand.u32 %v3402, 65535
        %v3407 = vshrl.u32 %v3402, 16
        %v3408 = vmul.u32 %v3404, %v3406
        %v3409 = vmul.u32 %v3404, %v3407
        %v3410 = vmul.u32 %v3405, %v3406
        %v3411 = vmul.u32 %v3405, %v3407
        %v3412 = vshll.u32 %v3409, 16
        %v3413 = vshrl.u32 %v3409, 16
        %v3414 = vshll.u32 %v3410, 16
        %v3415 = vshrl.u32 %v3410, 16
        %vm3416 = vc.u32 %v3408, %v3412
        %v3417 = vsel %vm3416, 1, 0
        %v3418 = vadd.s32 %v3408, %v3412
        %v3419 = vadd.s32 %v3411, %v3417
        %vm3420 = vc.u32 %v3418, %v3414
        %v3421 = vsel %vm3420, 1, 0
        %v3422 = vadd.s32 %v3418, %v3414
        %v3423 = vadd.s32 %v3419, %v3421
        %v3424 = vadd.s32 %v3423, %v3413
        %v3425 = vadd.s32 %v3424, %v3415
        %v3426 = vand.u32 %v3403, 65535
        %v3427 = vshrl.u32 %v3403, 16
        %v3428 = vand.u32 %v3398, 65535
        %v3429 = vshrl.u32 %v3398, 16
        %v3430 = vmul.u32 %v3426, %v3428
        %v3431 = vmul.u32 %v3426, %v3429
        %v3432 = vmul.u32 %v3427, %v3428
        %v3433 = vmul.u32 %v3427, %v3429
        %v3434 = vshll.u32 %v3431, 16
        %v3435 = vshrl.u32 %v3431, 16
        %v3436 = vshll.u32 %v3432, 16
        %v3437 = vshrl.u32 %v3432, 16
        %vm3438 = vc.u32 %v3430, %v3434
        %v3439 = vsel %vm3438, 1, 0
        %v3440 = vadd.s32 %v3430, %v3434
        %v3441 = vadd.s32 %v3433, %v3439
        %vm3442 = vc.u32 %v3440, %v3436
        %v3443 = vsel %vm3442, 1, 0
        %v3444 = vadd.s32 %v3440, %v3436
        %v3445 = vadd.s32 %v3441, %v3443
        %v3446 = vadd.s32 %v3445, %v3435
        %v3447 = vadd.s32 %v3446, %v3437
        %v3448 = vmul.u32 %v3403, %v3394
        %v3449 = vadd.s32 %v3425, %v3444
        %vm3450 = vc.u32 %v3425, %v3444
        %v3451 = vadd.s32 %v3447, 1
        %v3452 = vsel %vm3450, %v3451, %v3447
        %v3453 = vadd.s32 %v3448, %v3452
        %v3454 = vadd.s32 %v3453, 536870912
        %v3455 = vshrl.u32 %v3454, 30
        %v3456 = vshll.u32 %v3455, 30
        %v3457 = vsub.s32 %v3453, %v3456
        %vm3458 = vcmp.lt.s32.totalorder %v3457, 0
        %v3459 = vsub.s32 0, %v3457
        %v3460 = vsel %vm3458, %v3459, %v3457
        %v3461 = vclz %v3460
        %v3462 = vsub.s32 %v3461, 2
        %vm3463 = vcmp.gt.s32.totalorder 0, %v3462
        %v3464 = vsel %vm3463, 0, %v3462
        %v3465 = vsub.s32 32, %v3464
        %v3466 = vshll.u32 %v3457, %v3464
        %v3467 = vshrl.u32 %v3449, %v3465
        %v3468 = vor.u32 %v3466, %v3467
        %v3469 = vsub.s32 4294967266, %v3464
        %v3470 = vadd.s32 %v3469, 127
        %v3471 = vshll.u32 %v3470, 23
        %v3472 = vor.u32 4788187, %v3471
        %v3473 = vand.u32 2147483647, %v3472
        %v3475 = vcvt.s32.f32 %v3468
        %v3476 = vmul.f32 %v3475, %v3473
        %v3477 = vxor.u32 %v3476, 2147483648
        %v3478 = vsel %vm3357, %v3477, %v3476
        %v3479 = vsub.s32 4, %v3455
        %v3480 = vsel %vm3357, %v3479, %v3455
        %v3481 = vsel %vm3356, %v721, %v3478
        %v3482 = vsel %vm3356, 0, %v3480
        %v3483 = vmul.f32 %v3481, %v3481
        %v3484 = vmul.f32 %v3483, -0.001358992
        %v3485 = vadd.f32 %v3484, 0.041655596
        %v3486 = vmul.f32 %v3483, %v3485
        %v3487 = vadd.f32 %v3486, -0.4999988
        %v3488 = vmul.f32 %v3483, %v3487
        %v3489 = vadd.f32 1.0, %v3488
        %v3490 = vmul.f32 %v3481, %v3481
        %v3491 = vmul.f32 %v3490, -0.00019511016
        %v3492 = vadd.f32 %v3491, 0.008332121
        %v3493 = vmul.f32 %v3490, %v3492
        %v3494 = vadd.f32 %v3493, -0.16666654
        %v3495 = vmul.f32 %v3490, %v3494
        %v3496 = vadd.f32 %v3495, 1.0
        %v3497 = vmul.f32 %v3496, %v3481
        %vm3498 = vweird.f32 %v721
        %v3499 = vadd.s32 %v3482, 3
        %v3500 = vand.u32 %v3499, 3
        %vm3501 = vcmp.lt.s32.totalorder %v3500, 2
        %vm3502 = vcmp.eq.s32.totalorder %v3500, 0
        %v3503 = vxor.u32 %v3497, 2147483648
        %v3504 = vsel %vm3502, %v3489, %v3503
        %vm3505 = vcmp.eq.s32.totalorder %v3500, 2
        %v3506 = vxor.u32 %v3489, 2147483648
        %v3507 = vsel %vm3505, %v3506, %v3497
        %v3508 = vsel %vm3501, %v3504, %v3507
        %v3509 = vsel %vm3498, nan, %v3508
        %v3510 = vand.u32 2147483647, %v722
        %vm3511 = vcmp.le.f32.partialorder %v3510, 0.7853982
        %vm3512 = vcmp.lt.s32.totalorder %v722, 0
        %v3513 = vand.u32 %v722, 2139095040
        %v3514 = vshrl.u32 %v3513, 23
        %v3515 = vsub.s32 %v3514, 127
        %v3516 = vand.u32 2147483647, %v722
        %v3517 = vand.u32 %v3516, 8388607
        %v3518 = vor.u32 %v3517, 8388608
        %v3519 = vsub.s32 0, %v3518
        %v3520 = vadd.s32 %v3515, 1
        %vm3521 = vcmp.gt.s32.totalorder %v3520, 0
        %v3522 = vsel %vm3521, %v3520, 0
        %v3523 = vshrl.u32 %v3522, 5
        %v3524 = vand.u32 %v3522, 31
        %v3525 = vsub.s32 32, %v3524
        %v3526 = vshrl.u32 683565275, %v3525
        %v3527 = vshll.u32 683565275, %v3524
        %v3528 = vshrl.u32 2475754826, %v3525
        %v3529 = vor.u32 %v3527, %v3528
        %v3530 = vshll.u32 2475754826, %v3524
        %v3531 = vshrl.u32 2131351028, %v3525
        %v3532 = vor.u32 %v3530, %v3531
        %v3533 = vshll.u32 2131351028, %v3524
        %v3534 = vshrl.u32 2102212464, %v3525
        %v3535 = vor.u32 %v3533, %v3534
        %v3536 = vshll.u32 2102212464, %v3524
        %v3537 = vshrl.u32 920167782, %v3525
        %v3538 = vor.u32 %v3536, %v3537
        %v3539 = vshll.u32 920167782, %v3524
        %v3540 = vshrl.u32 1326507024, %v3525
        %v3541 = vor.u32 %v3539, %v3540
        %vm3542 = vcmp.lt.s32.totalorder %v3523, 1
        %vm3543 = vcmp.lt.s32.totalorder %v3523, 2
        %vm3544 = vcmp.lt.s32.totalorder %v3523, 3
        %vm3545 = vcmp.lt.s32.totalorder %v3523, 4
        %v3546 = vsel %vm3542, %v3526, %v3529
        %v3547 = vsel %vm3545, %v3535, 2102212464
        %v3548 = vsel %vm3544, %v3532, %v3547
        %v3549 = vsel %vm3543, %v3546, %v3548
        %v3550 = vsel %vm3542, %v3529, %v3532
        %v3551 = vsel %vm3545, %v3538, 920167782
        %v3552 = vsel %vm3544, %v3535, %v3551
        %v3553 = vsel %vm3543, %v3550, %v3552
        %v3554 = vsel %vm3542, %v3532, %v3535
        %v3555 = vsel %vm3545, %v3541, 1326507024
        %v3556 = vsel %vm3544, %v3538, %v3555
        %v3557 = vsel %vm3543, %v3554, %v3556
        %v3558 = vshll.u32 %v3518, 8
        %v3559 = vand.u32 %v3558, 65535
        %v3560 = vshrl.u32 %v3558, 16
        %v3561 = vand.u32 %v3557, 65535
        %v3562 = vshrl.u32 %v3557, 16
        %v3563 = vmul.u32 %v3559, %v3561
        %v3564 = vmul.u32 %v3559, %v3562
        %v3565 = vmul.u32 %v3560, %v3561
        %v3566 = vmul.u32 %v3560, %v3562
        %v3567 = vshll.u32 %v3564, 16
        %v3568 = vshrl.u32 %v3564, 16
        %v3569 = vshll.u32 %v3565, 16
        %v3570 = vshrl.u32 %v3565, 16
        %vm3571 = vc.u32 %v3563, %v3567
        %v3572 = vsel %vm3571, 1, 0
        %v3573 = vadd.s32 %v3563, %v3567
        %v3574 = vadd.s32 %v3566, %v3572
        %vm3575 = vc.u32 %v3573, %v3569
        %v3576 = vsel %vm3575, 1, 0
        %v3577 = vadd.s32 %v3573, %v3569
        %v3578 = vadd.s32 %v3574, %v3576
        %v3579 = vadd.s32 %v3578, %v3568
        %v3580 = vadd.s32 %v3579, %v3570
        %v3581 = vand.u32 %v3558, 65535
        %v3582 = vshrl.u32 %v3558, 16
        %v3583 = vand.u32 %v3553, 65535
        %v3584 = vshrl.u32 %v3553, 16
        %v3585 = vmul.u32 %v3581, %v3583
        %v3586 = vmul.u32 %v3581, %v3584
        %v3587 = vmul.u32 %v3582, %v3583
        %v3588 = vmul.u32 %v3582, %v3584
        %v3589 = vshll.u32 %v3586, 16
        %v3590 = vshrl.u32 %v3586, 16
        %v3591 = vshll.u32 %v3587, 16
        %v3592 = vshrl.u32 %v3587, 16
        %vm3593 = vc.u32 %v3585, %v3589
        %v3594 = vsel %vm3593, 1, 0
        %v3595 = vadd.s32 %v3585, %v3589
        %v3596 = vadd.s32 %v3588, %v3594
        %vm3597 = vc.u32 %v3595, %v3591
        %v3598 = vsel %vm3597, 1, 0
        %v3599 = vadd.s32 %v3595, %v3591
        %v3600 = vadd.s32 %v3596, %v3598
        %v3601 = vadd.s32 %v3600, %v3590
        %v3602 = vadd.s32 %v3601, %v3592
        %v3603 = vmul.u32 %v3558, %v3549
        %v3604 = vadd.s32 %v3580, %v3599
        %vm3605 = vc.u32 %v3580, %v3599
        %v3606 = vadd.s32 %v3602, 1
        %v3607 = vsel %vm3605, %v3606, %v3602
        %v3608 = vadd.s32 %v3603, %v3607
        %v3609 = vadd.s32 %v3608, 536870912
        %v3610 = vshrl.u32 %v3609, 30
        %v3611 = vshll.u32 %v3610, 30
        %v3612 = vsub.s32 %v3608, %v3611
        %vm3613 = vcmp.lt.s32.totalorder %v3612, 0
        %v3614 = vsub.s32 0, %v3612
        %v3615 = vsel %vm3613, %v3614, %v3612
        %v3616 = vclz %v3615
        %v3617 = vsub.s32 %v3616, 2
        %vm3618 = vcmp.gt.s32.totalorder 0, %v3617
        %v3619 = vsel %vm3618, 0, %v3617
        %v3620 = vsub.s32 32, %v3619
        %v3621 = vshll.u32 %v3612, %v3619
        %v3622 = vshrl.u32 %v3604, %v3620
        %v3623 = vor.u32 %v3621, %v3622
        %v3624 = vsub.s32 4294967266, %v3619
        %v3625 = vadd.s32 %v3624, 127
        %v3626 = vshll.u32 %v3625, 23
        %v3627 = vor.u32 4788187, %v3626
        %v3628 = vand.u32 2147483647, %v3627
        %v3630 = vcvt.s32.f32 %v3623
        %v3631 = vmul.f32 %v3630, %v3628
        %v3632 = vxor.u32 %v3631, 2147483648
        %v3633 = vsel %vm3512, %v3632, %v3631
        %v3634 = vsub.s32 4, %v3610
        %v3635 = vsel %vm3512, %v3634, %v3610
        %v3636 = vsel %vm3511, %v722, %v3633
        %v3637 = vsel %vm3511, 0, %v3635
        %v3638 = vmul.f32 %v3636, %v3636
        %v3639 = vmul.f32 %v3638, -0.001358992
        %v3640 = vadd.f32 %v3639, 0.041655596
        %v3641 = vmul.f32 %v3638, %v3640
        %v3642 = vadd.f32 %v3641, -0.4999988
        %v3643 = vmul.f32 %v3638, %v3642
        %v3644 = vadd.f32 1.0, %v3643
        %v3645 = vmul.f32 %v3636, %v3636
        %v3646 = vmul.f32 %v3645, -0.00019511016
        %v3647 = vadd.f32 %v3646, 0.008332121
        %v3648 = vmul.f32 %v3645, %v3647
        %v3649 = vadd.f32 %v3648, -0.16666654
        %v3650 = vmul.f32 %v3645, %v3649
        %v3651 = vadd.f32 %v3650, 1.0
        %v3652 = vmul.f32 %v3651, %v3636
        %vm3653 = vweird.f32 %v722
        %v3654 = vadd.s32 %v3637, 3
        %v3655 = vand.u32 %v3654, 3
        %vm3656 = vcmp.lt.s32.totalorder %v3655, 2
        %vm3657 = vcmp.eq.s32.totalorder %v3655, 0
        %v3658 = vxor.u32 %v3652, 2147483648
        %v3659 = vsel %vm3657, %v3644, %v3658
        %vm3660 = vcmp.eq.s32.totalorder %v3655, 2
        %v3661 = vxor.u32 %v3644, 2147483648
        %v3662 = vsel %vm3660, %v3661, %v3652
        %v3663 = vsel %vm3656, %v3659, %v3662
        %v3664 = vsel %vm3653, nan, %v3663
        %v3665 = vand.u32 2147483647, %v723
        %vm3666 = vcmp.le.f32.partialorder %v3665, 0.7853982
        %vm3667 = vcmp.lt.s32.totalorder %v723, 0
        %v3668 = vand.u32 %v723, 2139095040
        %v3669 = vshrl.u32 %v3668, 23
        %v3670 = vsub.s32 %v3669, 127
        %v3671 = vand.u32 2147483647, %v723
        %v3672 = vand.u32 %v3671, 8388607
        %v3673 = vor.u32 %v3672, 8388608
        %v3674 = vsub.s32 0, %v3673
        %v3675 = vadd.s32 %v3670, 1
        %vm3676 = vcmp.gt.s32.totalorder %v3675, 0
        %v3677 = vsel %vm3676, %v3675, 0
        %v3678 = vshrl.u32 %v3677, 5
        %v3679 = vand.u32 %v3677, 31
        %v3680 = vsub.s32 32, %v3679
        %v3681 = vshrl.u32 683565275, %v3680
        %v3682 = vshll.u32 683565275, %v3679
        %v3683 = vshrl.u32 2475754826, %v3680
        %v3684 = vor.u32 %v3682, %v3683
        %v3685 = vshll.u32 2475754826, %v3679
        %v3686 = vshrl.u32 2131351028, %v3680
        %v3687 = vor.u32 %v3685, %v3686
        %v3688 = vshll.u32 2131351028, %v3679
        %v3689 = vshrl.u32 2102212464, %v3680
        %v3690 = vor.u32 %v3688, %v3689
        %v3691 = vshll.u32 2102212464, %v3679
        %v3692 = vshrl.u32 920167782, %v3680
        %v3693 = vor.u32 %v3691, %v3692
        %v3694 = vshll.u32 920167782, %v3679
        %v3695 = vshrl.u32 1326507024, %v3680
        %v3696 = vor.u32 %v3694, %v3695
        %vm3697 = vcmp.lt.s32.totalorder %v3678, 1
        %vm3698 = vcmp.lt.s32.totalorder %v3678, 2
        %vm3699 = vcmp.lt.s32.totalorder %v3678, 3
        %vm3700 = vcmp.lt.s32.totalorder %v3678, 4
        %v3701 = vsel %vm3697, %v3681, %v3684
        %v3702 = vsel %vm3700, %v3690, 2102212464
        %v3703 = vsel %vm3699, %v3687, %v3702
        %v3704 = vsel %vm3698, %v3701, %v3703
        %v3705 = vsel %vm3697, %v3684, %v3687
        %v3706 = vsel %vm3700, %v3693, 920167782
        %v3707 = vsel %vm3699, %v3690, %v3706
        %v3708 = vsel %vm3698, %v3705, %v3707
        %v3709 = vsel %vm3697, %v3687, %v3690
        %v3710 = vsel %vm3700, %v3696, 1326507024
        %v3711 = vsel %vm3699, %v3693, %v3710
        %v3712 = vsel %vm3698, %v3709, %v3711
        %v3713 = vshll.u32 %v3673, 8
        %v3714 = vand.u32 %v3713, 65535
        %v3715 = vshrl.u32 %v3713, 16
        %v3716 = vand.u32 %v3712, 65535
        %v3717 = vshrl.u32 %v3712, 16
        %v3718 = vmul.u32 %v3714, %v3716
        %v3719 = vmul.u32 %v3714, %v3717
        %v3720 = vmul.u32 %v3715, %v3716
        %v3721 = vmul.u32 %v3715, %v3717
        %v3722 = vshll.u32 %v3719, 16
        %v3723 = vshrl.u32 %v3719, 16
        %v3724 = vshll.u32 %v3720, 16
        %v3725 = vshrl.u32 %v3720, 16
        %vm3726 = vc.u32 %v3718, %v3722
        %v3727 = vsel %vm3726, 1, 0
        %v3728 = vadd.s32 %v3718, %v3722
        %v3729 = vadd.s32 %v3721, %v3727
        %vm3730 = vc.u32 %v3728, %v3724
        %v3731 = vsel %vm3730, 1, 0
        %v3732 = vadd.s32 %v3728, %v3724
        %v3733 = vadd.s32 %v3729, %v3731
        %v3734 = vadd.s32 %v3733, %v3723
        %v3735 = vadd.s32 %v3734, %v3725
        %v3736 = vand.u32 %v3713, 65535
        %v3737 = vshrl.u32 %v3713, 16
        %v3738 = vand.u32 %v3708, 65535
        %v3739 = vshrl.u32 %v3708, 16
        %v3740 = vmul.u32 %v3736, %v3738
        %v3741 = vmul.u32 %v3736, %v3739
        %v3742 = vmul.u32 %v3737, %v3738
        %v3743 = vmul.u32 %v3737, %v3739
        %v3744 = vshll.u32 %v3741, 16
        %v3745 = vshrl.u32 %v3741, 16
        %v3746 = vshll.u32 %v3742, 16
        %v3747 = vshrl.u32 %v3742, 16
        %vm3748 = vc.u32 %v3740, %v3744
        %v3749 = vsel %vm3748, 1, 0
        %v3750 = vadd.s32 %v3740, %v3744
        %v3751 = vadd.s32 %v3743, %v3749
        %vm3752 = vc.u32 %v3750, %v3746
        %v3753 = vsel %vm3752, 1, 0
        %v3754 = vadd.s32 %v3750, %v3746
        %v3755 = vadd.s32 %v3751, %v3753
        %v3756 = vadd.s32 %v3755, %v3745
        %v3757 = vadd.s32 %v3756, %v3747
        %v3758 = vmul.u32 %v3713, %v3704
        %v3759 = vadd.s32 %v3735, %v3754
        %vm3760 = vc.u32 %v3735, %v3754
        %v3761 = vadd.s32 %v3757, 1
        %v3762 = vsel %vm3760, %v3761, %v3757
        %v3763 = vadd.s32 %v3758, %v3762
        %v3764 = vadd.s32 %v3763, 536870912
        %v3765 = vshrl.u32 %v3764, 30
        %v3766 = vshll.u32 %v3765, 30
        %v3767 = vsub.s32 %v3763, %v3766
        %vm3768 = vcmp.lt.s32.totalorder %v3767, 0
        %v3769 = vsub.s32 0, %v3767
        %v3770 = vsel %vm3768, %v3769, %v3767
        %v3771 = vclz %v3770
        %v3772 = vsub.s32 %v3771, 2
        %vm3773 = vcmp.gt.s32.totalorder 0, %v3772
        %v3774 = vsel %vm3773, 0, %v3772
        %v3775 = vsub.s32 32, %v3774
        %v3776 = vshll.u32 %v3767, %v3774
        %v3777 = vshrl.u32 %v3759, %v3775
        %v3778 = vor.u32 %v3776, %v3777
        %v3779 = vsub.s32 4294967266, %v3774
        %v3780 = vadd.s32 %v3779, 127
        %v3781 = vshll.u32 %v3780, 23
        %v3782 = vor.u32 4788187, %v3781
        %v3783 = vand.u32 2147483647, %v3782
        %v3785 = vcvt.s32.f32 %v3778
        %v3786 = vmul.f32 %v3785, %v3783
        %v3787 = vxor.u32 %v3786, 2147483648
        %v3788 = vsel %vm3667, %v3787, %v3786
        %v3789 = vsub.s32 4, %v3765
        %v3790 = vsel %vm3667, %v3789, %v3765
        %v3791 = vsel %vm3666, %v723, %v3788
        %v3792 = vsel %vm3666, 0, %v3790
        %v3793 = vmul.f32 %v3791, %v3791
        %v3794 = vmul.f32 %v3793, -0.001358992
        %v3795 = vadd.f32 %v3794, 0.041655596
        %v3796 = vmul.f32 %v3793, %v3795
        %v3797 = vadd.f32 %v3796, -0.4999988
        %v3798 = vmul.f32 %v3793, %v3797
        %v3799 = vadd.f32 1.0, %v3798
        %v3800 = vmul.f32 %v3791, %v3791
        %v3801 = vmul.f32 %v3800, -0.00019511016
        %v3802 = vadd.f32 %v3801, 0.008332121
        %v3803 = vmul.f32 %v3800, %v3802
        %v3804 = vadd.f32 %v3803, -0.16666654
        %v3805 = vmul.f32 %v3800, %v3804
        %v3806 = vadd.f32 %v3805, 1.0
        %v3807 = vmul.f32 %v3806, %v3791
        %vm3808 = vweird.f32 %v723
        %v3809 = vadd.s32 %v3792, 3
        %v3810 = vand.u32 %v3809, 3
        %vm3811 = vcmp.lt.s32.totalorder %v3810, 2
        %vm3812 = vcmp.eq.s32.totalorder %v3810, 0
        %v3813 = vxor.u32 %v3807, 2147483648
        %v3814 = vsel %vm3812, %v3799, %v3813
        %vm3815 = vcmp.eq.s32.totalorder %v3810, 2
        %v3816 = vxor.u32 %v3799, 2147483648
        %v3817 = vsel %vm3815, %v3816, %v3807
        %v3818 = vsel %vm3811, %v3814, %v3817
        %v3819 = vsel %vm3808, nan, %v3818
        %v3820 = vand.u32 2147483647, %v724
        %vm3821 = vcmp.le.f32.partialorder %v3820, 0.7853982
        %vm3822 = vcmp.lt.s32.totalorder %v724, 0
        %v3823 = vand.u32 %v724, 2139095040
        %v3824 = vshrl.u32 %v3823, 23
        %v3825 = vsub.s32 %v3824, 127
        %v3826 = vand.u32 2147483647, %v724
        %v3827 = vand.u32 %v3826, 8388607
        %v3828 = vor.u32 %v3827, 8388608
        %v3829 = vsub.s32 0, %v3828
        %v3830 = vadd.s32 %v3825, 1
        %vm3831 = vcmp.gt.s32.totalorder %v3830, 0
        %v3832 = vsel %vm3831, %v3830, 0
        %v3833 = vshrl.u32 %v3832, 5
        %v3834 = vand.u32 %v3832, 31
        %v3835 = vsub.s32 32, %v3834
        %v3836 = vshrl.u32 683565275, %v3835
        %v3837 = vshll.u32 683565275, %v3834
        %v3838 = vshrl.u32 2475754826, %v3835
        %v3839 = vor.u32 %v3837, %v3838
        %v3840 = vshll.u32 2475754826, %v3834
        %v3841 = vshrl.u32 2131351028, %v3835
        %v3842 = vor.u32 %v3840, %v3841
        %v3843 = vshll.u32 2131351028, %v3834
        %v3844 = vshrl.u32 2102212464, %v3835
        %v3845 = vor.u32 %v3843, %v3844
        %v3846 = vshll.u32 2102212464, %v3834
        %v3847 = vshrl.u32 920167782, %v3835
        %v3848 = vor.u32 %v3846, %v3847
        %v3849 = vshll.u32 920167782, %v3834
        %v3850 = vshrl.u32 1326507024, %v3835
        %v3851 = vor.u32 %v3849, %v3850
        %vm3852 = vcmp.lt.s32.totalorder %v3833, 1
        %vm3853 = vcmp.lt.s32.totalorder %v3833, 2
        %vm3854 = vcmp.lt.s32.totalorder %v3833, 3
        %vm3855 = vcmp.lt.s32.totalorder %v3833, 4
        %v3856 = vsel %vm3852, %v3836, %v3839
        %v3857 = vsel %vm3855, %v3845, 2102212464
        %v3858 = vsel %vm3854, %v3842, %v3857
        %v3859 = vsel %vm3853, %v3856, %v3858
        %v3860 = vsel %vm3852, %v3839, %v3842
        %v3861 = vsel %vm3855, %v3848, 920167782
        %v3862 = vsel %vm3854, %v3845, %v3861
        %v3863 = vsel %vm3853, %v3860, %v3862
        %v3864 = vsel %vm3852, %v3842, %v3845
        %v3865 = vsel %vm3855, %v3851, 1326507024
        %v3866 = vsel %vm3854, %v3848, %v3865
        %v3867 = vsel %vm3853, %v3864, %v3866
        %v3868 = vshll.u32 %v3828, 8
        %v3869 = vand.u32 %v3868, 65535
        %v3870 = vshrl.u32 %v3868, 16
        %v3871 = vand.u32 %v3867, 65535
        %v3872 = vshrl.u32 %v3867, 16
        %v3873 = vmul.u32 %v3869, %v3871
        %v3874 = vmul.u32 %v3869, %v3872
        %v3875 = vmul.u32 %v3870, %v3871
        %v3876 = vmul.u32 %v3870, %v3872
        %v3877 = vshll.u32 %v3874, 16
        %v3878 = vshrl.u32 %v3874, 16
        %v3879 = vshll.u32 %v3875, 16
        %v3880 = vshrl.u32 %v3875, 16
        %vm3881 = vc.u32 %v3873, %v3877
        %v3882 = vsel %vm3881, 1, 0
        %v3883 = vadd.s32 %v3873, %v3877
        %v3884 = vadd.s32 %v3876, %v3882
        %vm3885 = vc.u32 %v3883, %v3879
        %v3886 = vsel %vm3885, 1, 0
        %v3887 = vadd.s32 %v3883, %v3879
        %v3888 = vadd.s32 %v3884, %v3886
        %v3889 = vadd.s32 %v3888, %v3878
        %v3890 = vadd.s32 %v3889, %v3880
        %v3891 = vand.u32 %v3868, 65535
        %v3892 = vshrl.u32 %v3868, 16
        %v3893 = vand.u32 %v3863, 65535
        %v3894 = vshrl.u32 %v3863, 16
        %v3895 = vmul.u32 %v3891, %v3893
        %v3896 = vmul.u32 %v3891, %v3894
        %v3897 = vmul.u32 %v3892, %v3893
        %v3898 = vmul.u32 %v3892, %v3894
        %v3899 = vshll.u32 %v3896, 16
        %v3900 = vshrl.u32 %v3896, 16
        %v3901 = vshll.u32 %v3897, 16
        %v3902 = vshrl.u32 %v3897, 16
        %vm3903 = vc.u32 %v3895, %v3899
        %v3904 = vsel %vm3903, 1, 0
        %v3905 = vadd.s32 %v3895, %v3899
        %v3906 = vadd.s32 %v3898, %v3904
        %vm3907 = vc.u32 %v3905, %v3901
        %v3908 = vsel %vm3907, 1, 0
        %v3909 = vadd.s32 %v3905, %v3901
        %v3910 = vadd.s32 %v3906, %v3908
        %v3911 = vadd.s32 %v3910, %v3900
        %v3912 = vadd.s32 %v3911, %v3902
        %v3913 = vmul.u32 %v3868, %v3859
        %v3914 = vadd.s32 %v3890, %v3909
        %vm3915 = vc.u32 %v3890, %v3909
        %v3916 = vadd.s32 %v3912, 1
        %v3917 = vsel %vm3915, %v3916, %v3912
        %v3918 = vadd.s32 %v3913, %v3917
        %v3919 = vadd.s32 %v3918, 536870912
        %v3920 = vshrl.u32 %v3919, 30
        %v3921 = vshll.u32 %v3920, 30
        %v3922 = vsub.s32 %v3918, %v3921
        %vm3923 = vcmp.lt.s32.totalorder %v3922, 0
        %v3924 = vsub.s32 0, %v3922
        %v3925 = vsel %vm3923, %v3924, %v3922
        %v3926 = vclz %v3925
        %v3927 = vsub.s32 %v3926, 2
        %vm3928 = vcmp.gt.s32.totalorder 0, %v3927
        %v3929 = vsel %vm3928, 0, %v3927
        %v3930 = vsub.s32 32, %v3929
        %v3931 = vshll.u32 %v3922, %v3929
        %v3932 = vshrl.u32 %v3914, %v3930
        %v3933 = vor.u32 %v3931, %v3932
        %v3934 = vsub.s32 4294967266, %v3929
        %v3935 = vadd.s32 %v3934, 127
        %v3936 = vshll.u32 %v3935, 23
        %v3937 = vor.u32 4788187, %v3936
        %v3938 = vand.u32 2147483647, %v3937
        %v3940 = vcvt.s32.f32 %v3933
        %v3941 = vmul.f32 %v3940, %v3938
        %v3942 = vxor.u32 %v3941, 2147483648
        %v3943 = vsel %vm3822, %v3942, %v3941
        %v3944 = vsub.s32 4, %v3920
        %v3945 = vsel %vm3822, %v3944, %v3920
        %v3946 = vsel %vm3821, %v724, %v3943
        %v3947 = vsel %vm3821, 0, %v3945
        %v3948 = vmul.f32 %v3946, %v3946
        %v3949 = vmul.f32 %v3948, -0.001358992
        %v3950 = vadd.f32 %v3949, 0.041655596
        %v3951 = vmul.f32 %v3948, %v3950
        %v3952 = vadd.f32 %v3951, -0.4999988
        %v3953 = vmul.f32 %v3948, %v3952
        %v3954 = vadd.f32 1.0, %v3953
        %v3955 = vmul.f32 %v3946, %v3946
        %v3956 = vmul.f32 %v3955, -0.00019511016
        %v3957 = vadd.f32 %v3956, 0.008332121
        %v3958 = vmul.f32 %v3955, %v3957
        %v3959 = vadd.f32 %v3958, -0.16666654
        %v3960 = vmul.f32 %v3955, %v3959
        %v3961 = vadd.f32 %v3960, 1.0
        %v3962 = vmul.f32 %v3961, %v3946
        %vm3963 = vweird.f32 %v724
        %v3964 = vadd.s32 %v3947, 3
        %v3965 = vand.u32 %v3964, 3
        %vm3966 = vcmp.lt.s32.totalorder %v3965, 2
        %vm3967 = vcmp.eq.s32.totalorder %v3965, 0
        %v3968 = vxor.u32 %v3962, 2147483648
        %v3969 = vsel %vm3967, %v3954, %v3968
        %vm3970 = vcmp.eq.s32.totalorder %v3965, 2
        %v3971 = vxor.u32 %v3954, 2147483648
        %v3972 = vsel %vm3970, %v3971, %v3962
        %v3973 = vsel %vm3966, %v3969, %v3972
        %v3974 = vsel %vm3963, nan, %v3973
        %v3975 = vand.u32 2147483647, %v725
        %vm3976 = vcmp.le.f32.partialorder %v3975, 0.7853982
        %vm3977 = vcmp.lt.s32.totalorder %v725, 0
        %v3978 = vand.u32 %v725, 2139095040
        %v3979 = vshrl.u32 %v3978, 23
        %v3980 = vsub.s32 %v3979, 127
        %v3981 = vand.u32 2147483647, %v725
        %v3982 = vand.u32 %v3981, 8388607
        %v3983 = vor.u32 %v3982, 8388608
        %v3984 = vsub.s32 0, %v3983
        %v3985 = vadd.s32 %v3980, 1
        %vm3986 = vcmp.gt.s32.totalorder %v3985, 0
        %v3987 = vsel %vm3986, %v3985, 0
        %v3988 = vshrl.u32 %v3987, 5
        %v3989 = vand.u32 %v3987, 31
        %v3990 = vsub.s32 32, %v3989
        %v3991 = vshrl.u32 683565275, %v3990
        %v3992 = vshll.u32 683565275, %v3989
        %v3993 = vshrl.u32 2475754826, %v3990
        %v3994 = vor.u32 %v3992, %v3993
        %v3995 = vshll.u32 2475754826, %v3989
        %v3996 = vshrl.u32 2131351028, %v3990
        %v3997 = vor.u32 %v3995, %v3996
        %v3998 = vshll.u32 2131351028, %v3989
        %v3999 = vshrl.u32 2102212464, %v3990
        %v4000 = vor.u32 %v3998, %v3999
        %v4001 = vshll.u32 2102212464, %v3989
        %v4002 = vshrl.u32 920167782, %v3990
        %v4003 = vor.u32 %v4001, %v4002
        %v4004 = vshll.u32 920167782, %v3989
        %v4005 = vshrl.u32 1326507024, %v3990
        %v4006 = vor.u32 %v4004, %v4005
        %vm4007 = vcmp.lt.s32.totalorder %v3988, 1
        %vm4008 = vcmp.lt.s32.totalorder %v3988, 2
        %vm4009 = vcmp.lt.s32.totalorder %v3988, 3
        %vm4010 = vcmp.lt.s32.totalorder %v3988, 4
        %v4011 = vsel %vm4007, %v3991, %v3994
        %v4012 = vsel %vm4010, %v4000, 2102212464
        %v4013 = vsel %vm4009, %v3997, %v4012
        %v4014 = vsel %vm4008, %v4011, %v4013
        %v4015 = vsel %vm4007, %v3994, %v3997
        %v4016 = vsel %vm4010, %v4003, 920167782
        %v4017 = vsel %vm4009, %v4000, %v4016
        %v4018 = vsel %vm4008, %v4015, %v4017
        %v4019 = vsel %vm4007, %v3997, %v4000
        %v4020 = vsel %vm4010, %v4006, 1326507024
        %v4021 = vsel %vm4009, %v4003, %v4020
        %v4022 = vsel %vm4008, %v4019, %v4021
        %v4023 = vshll.u32 %v3983, 8
        %v4024 = vand.u32 %v4023, 65535
        %v4025 = vshrl.u32 %v4023, 16
        %v4026 = vand.u32 %v4022, 65535
        %v4027 = vshrl.u32 %v4022, 16
        %v4028 = vmul.u32 %v4024, %v4026
        %v4029 = vmul.u32 %v4024, %v4027
        %v4030 = vmul.u32 %v4025, %v4026
        %v4031 = vmul.u32 %v4025, %v4027
        %v4032 = vshll.u32 %v4029, 16
        %v4033 = vshrl.u32 %v4029, 16
        %v4034 = vshll.u32 %v4030, 16
        %v4035 = vshrl.u32 %v4030, 16
        %vm4036 = vc.u32 %v4028, %v4032
        %v4037 = vsel %vm4036, 1, 0
        %v4038 = vadd.s32 %v4028, %v4032
        %v4039 = vadd.s32 %v4031, %v4037
        %vm4040 = vc.u32 %v4038, %v4034
        %v4041 = vsel %vm4040, 1, 0
        %v4042 = vadd.s32 %v4038, %v4034
        %v4043 = vadd.s32 %v4039, %v4041
        %v4044 = vadd.s32 %v4043, %v4033
        %v4045 = vadd.s32 %v4044, %v4035
        %v4046 = vand.u32 %v4023, 65535
        %v4047 = vshrl.u32 %v4023, 16
        %v4048 = vand.u32 %v4018, 65535
        %v4049 = vshrl.u32 %v4018, 16
        %v4050 = vmul.u32 %v4046, %v4048
        %v4051 = vmul.u32 %v4046, %v4049
        %v4052 = vmul.u32 %v4047, %v4048
        %v4053 = vmul.u32 %v4047, %v4049
        %v4054 = vshll.u32 %v4051, 16
        %v4055 = vshrl.u32 %v4051, 16
        %v4056 = vshll.u32 %v4052, 16
        %v4057 = vshrl.u32 %v4052, 16
        %vm4058 = vc.u32 %v4050, %v4054
        %v4059 = vsel %vm4058, 1, 0
        %v4060 = vadd.s32 %v4050, %v4054
        %v4061 = vadd.s32 %v4053, %v4059
        %vm4062 = vc.u32 %v4060, %v4056
        %v4063 = vsel %vm4062, 1, 0
        %v4064 = vadd.s32 %v4060, %v4056
        %v4065 = vadd.s32 %v4061, %v4063
        %v4066 = vadd.s32 %v4065, %v4055
        %v4067 = vadd.s32 %v4066, %v4057
        %v4068 = vmul.u32 %v4023, %v4014
        %v4069 = vadd.s32 %v4045, %v4064
        %vm4070 = vc.u32 %v4045, %v4064
        %v4071 = vadd.s32 %v4067, 1
        %v4072 = vsel %vm4070, %v4071, %v4067
        %v4073 = vadd.s32 %v4068, %v4072
        %v4074 = vadd.s32 %v4073, 536870912
        %v4075 = vshrl.u32 %v4074, 30
        %v4076 = vshll.u32 %v4075, 30
        %v4077 = vsub.s32 %v4073, %v4076
        %vm4078 = vcmp.lt.s32.totalorder %v4077, 0
        %v4079 = vsub.s32 0, %v4077
        %v4080 = vsel %vm4078, %v4079, %v4077
        %v4081 = vclz %v4080
        %v4082 = vsub.s32 %v4081, 2
        %vm4083 = vcmp.gt.s32.totalorder 0, %v4082
        %v4084 = vsel %vm4083, 0, %v4082
        %v4085 = vsub.s32 32, %v4084
        %v4086 = vshll.u32 %v4077, %v4084
        %v4087 = vshrl.u32 %v4069, %v4085
        %v4088 = vor.u32 %v4086, %v4087
        %v4089 = vsub.s32 4294967266, %v4084
        %v4090 = vadd.s32 %v4089, 127
        %v4091 = vshll.u32 %v4090, 23
        %v4092 = vor.u32 4788187, %v4091
        %v4093 = vand.u32 2147483647, %v4092
        %v4095 = vcvt.s32.f32 %v4088
        %v4096 = vmul.f32 %v4095, %v4093
        %v4097 = vxor.u32 %v4096, 2147483648
        %v4098 = vsel %vm3977, %v4097, %v4096
        %v4099 = vsub.s32 4, %v4075
        %v4100 = vsel %vm3977, %v4099, %v4075
        %v4101 = vsel %vm3976, %v725, %v4098
        %v4102 = vsel %vm3976, 0, %v4100
        %v4103 = vmul.f32 %v4101, %v4101
        %v4104 = vmul.f32 %v4103, -0.001358992
        %v4105 = vadd.f32 %v4104, 0.041655596
        %v4106 = vmul.f32 %v4103, %v4105
        %v4107 = vadd.f32 %v4106, -0.4999988
        %v4108 = vmul.f32 %v4103, %v4107
        %v4109 = vadd.f32 1.0, %v4108
        %v4110 = vmul.f32 %v4101, %v4101
        %v4111 = vmul.f32 %v4110, -0.00019511016
        %v4112 = vadd.f32 %v4111, 0.008332121
        %v4113 = vmul.f32 %v4110, %v4112
        %v4114 = vadd.f32 %v4113, -0.16666654
        %v4115 = vmul.f32 %v4110, %v4114
        %v4116 = vadd.f32 %v4115, 1.0
        %v4117 = vmul.f32 %v4116, %v4101
        %vm4118 = vweird.f32 %v725
        %v4119 = vadd.s32 %v4102, 3
        %v4120 = vand.u32 %v4119, 3
        %vm4121 = vcmp.lt.s32.totalorder %v4120, 2
        %vm4122 = vcmp.eq.s32.totalorder %v4120, 0
        %v4123 = vxor.u32 %v4117, 2147483648
        %v4124 = vsel %vm4122, %v4109, %v4123
        %vm4125 = vcmp.eq.s32.totalorder %v4120, 2
        %v4126 = vxor.u32 %v4109, 2147483648
        %v4127 = vsel %vm4125, %v4126, %v4117
        %v4128 = vsel %vm4121, %v4124, %v4127
        %v4129 = vsel %vm4118, nan, %v4128
        %v4130 = vand.u32 2147483647, %v726
        %vm4131 = vcmp.le.f32.partialorder %v4130, 0.7853982
        %vm4132 = vcmp.lt.s32.totalorder %v726, 0
        %v4133 = vand.u32 %v726, 2139095040
        %v4134 = vshrl.u32 %v4133, 23
        %v4135 = vsub.s32 %v4134, 127
        %v4136 = vand.u32 2147483647, %v726
        %v4137 = vand.u32 %v4136, 8388607
        %v4138 = vor.u32 %v4137, 8388608
        %v4139 = vsub.s32 0, %v4138
        %v4140 = vadd.s32 %v4135, 1
        %vm4141 = vcmp.gt.s32.totalorder %v4140, 0
        %v4142 = vsel %vm4141, %v4140, 0
        %v4143 = vshrl.u32 %v4142, 5
        %v4144 = vand.u32 %v4142, 31
        %v4145 = vsub.s32 32, %v4144
        %v4146 = vshrl.u32 683565275, %v4145
        %v4147 = vshll.u32 683565275, %v4144
        %v4148 = vshrl.u32 2475754826, %v4145
        %v4149 = vor.u32 %v4147, %v4148
        %v4150 = vshll.u32 2475754826, %v4144
        %v4151 = vshrl.u32 2131351028, %v4145
        %v4152 = vor.u32 %v4150, %v4151
        %v4153 = vshll.u32 2131351028, %v4144
        %v4154 = vshrl.u32 2102212464, %v4145
        %v4155 = vor.u32 %v4153, %v4154
        %v4156 = vshll.u32 2102212464, %v4144
        %v4157 = vshrl.u32 920167782, %v4145
        %v4158 = vor.u32 %v4156, %v4157
        %v4159 = vshll.u32 920167782, %v4144
        %v4160 = vshrl.u32 1326507024, %v4145
        %v4161 = vor.u32 %v4159, %v4160
        %vm4162 = vcmp.lt.s32.totalorder %v4143, 1
        %vm4163 = vcmp.lt.s32.totalorder %v4143, 2
        %vm4164 = vcmp.lt.s32.totalorder %v4143, 3
        %vm4165 = vcmp.lt.s32.totalorder %v4143, 4
        %v4166 = vsel %vm4162, %v4146, %v4149
        %v4167 = vsel %vm4165, %v4155, 2102212464
        %v4168 = vsel %vm4164, %v4152, %v4167
        %v4169 = vsel %vm4163, %v4166, %v4168
        %v4170 = vsel %vm4162, %v4149, %v4152
        %v4171 = vsel %vm4165, %v4158, 920167782
        %v4172 = vsel %vm4164, %v4155, %v4171
        %v4173 = vsel %vm4163, %v4170, %v4172
        %v4174 = vsel %vm4162, %v4152, %v4155
        %v4175 = vsel %vm4165, %v4161, 1326507024
        %v4176 = vsel %vm4164, %v4158, %v4175
        %v4177 = vsel %vm4163, %v4174, %v4176
        %v4178 = vshll.u32 %v4138, 8
        %v4179 = vand.u32 %v4178, 65535
        %v4180 = vshrl.u32 %v4178, 16
        %v4181 = vand.u32 %v4177, 65535
        %v4182 = vshrl.u32 %v4177, 16
        %v4183 = vmul.u32 %v4179, %v4181
        %v4184 = vmul.u32 %v4179, %v4182
        %v4185 = vmul.u32 %v4180, %v4181
        %v4186 = vmul.u32 %v4180, %v4182
        %v4187 = vshll.u32 %v4184, 16
        %v4188 = vshrl.u32 %v4184, 16
        %v4189 = vshll.u32 %v4185, 16
        %v4190 = vshrl.u32 %v4185, 16
        %vm4191 = vc.u32 %v4183, %v4187
        %v4192 = vsel %vm4191, 1, 0
        %v4193 = vadd.s32 %v4183, %v4187
        %v4194 = vadd.s32 %v4186, %v4192
        %vm4195 = vc.u32 %v4193, %v4189
        %v4196 = vsel %vm4195, 1, 0
        %v4197 = vadd.s32 %v4193, %v4189
        %v4198 = vadd.s32 %v4194, %v4196
        %v4199 = vadd.s32 %v4198, %v4188
        %v4200 = vadd.s32 %v4199, %v4190
        %v4201 = vand.u32 %v4178, 65535
        %v4202 = vshrl.u32 %v4178, 16
        %v4203 = vand.u32 %v4173, 65535
        %v4204 = vshrl.u32 %v4173, 16
        %v4205 = vmul.u32 %v4201, %v4203
        %v4206 = vmul.u32 %v4201, %v4204
        %v4207 = vmul.u32 %v4202, %v4203
        %v4208 = vmul.u32 %v4202, %v4204
        %v4209 = vshll.u32 %v4206, 16
        %v4210 = vshrl.u32 %v4206, 16
        %v4211 = vshll.u32 %v4207, 16
        %v4212 = vshrl.u32 %v4207, 16
        %vm4213 = vc.u32 %v4205, %v4209
        %v4214 = vsel %vm4213, 1, 0
        %v4215 = vadd.s32 %v4205, %v4209
        %v4216 = vadd.s32 %v4208, %v4214
        %vm4217 = vc.u32 %v4215, %v4211
        %v4218 = vsel %vm4217, 1, 0
        %v4219 = vadd.s32 %v4215, %v4211
        %v4220 = vadd.s32 %v4216, %v4218
        %v4221 = vadd.s32 %v4220, %v4210
        %v4222 = vadd.s32 %v4221, %v4212
        %v4223 = vmul.u32 %v4178, %v4169
        %v4224 = vadd.s32 %v4200, %v4219
        %vm4225 = vc.u32 %v4200, %v4219
        %v4226 = vadd.s32 %v4222, 1
        %v4227 = vsel %vm4225, %v4226, %v4222
        %v4228 = vadd.s32 %v4223, %v4227
        %v4229 = vadd.s32 %v4228, 536870912
        %v4230 = vshrl.u32 %v4229, 30
        %v4231 = vshll.u32 %v4230, 30
        %v4232 = vsub.s32 %v4228, %v4231
        %vm4233 = vcmp.lt.s32.totalorder %v4232, 0
        %v4234 = vsub.s32 0, %v4232
        %v4235 = vsel %vm4233, %v4234, %v4232
        %v4236 = vclz %v4235
        %v4237 = vsub.s32 %v4236, 2
        %vm4238 = vcmp.gt.s32.totalorder 0, %v4237
        %v4239 = vsel %vm4238, 0, %v4237
        %v4240 = vsub.s32 32, %v4239
        %v4241 = vshll.u32 %v4232, %v4239
        %v4242 = vshrl.u32 %v4224, %v4240
        %v4243 = vor.u32 %v4241, %v4242
        %v4244 = vsub.s32 4294967266, %v4239
        %v4245 = vadd.s32 %v4244, 127
        %v4246 = vshll.u32 %v4245, 23
        %v4247 = vor.u32 4788187, %v4246
        %v4248 = vand.u32 2147483647, %v4247
        %v4250 = vcvt.s32.f32 %v4243
        %v4251 = vmul.f32 %v4250, %v4248
        %v4252 = vxor.u32 %v4251, 2147483648
        %v4253 = vsel %vm4132, %v4252, %v4251
        %v4254 = vsub.s32 4, %v4230
        %v4255 = vsel %vm4132, %v4254, %v4230
        %v4256 = vsel %vm4131, %v726, %v4253
        %v4257 = vsel %vm4131, 0, %v4255
        %v4258 = vmul.f32 %v4256, %v4256
        %v4259 = vmul.f32 %v4258, -0.001358992
        %v4260 = vadd.f32 %v4259, 0.041655596
        %v4261 = vmul.f32 %v4258, %v4260
        %v4262 = vadd.f32 %v4261, -0.4999988
        %v4263 = vmul.f32 %v4258, %v4262
        %v4264 = vadd.f32 1.0, %v4263
        %v4265 = vmul.f32 %v4256, %v4256
        %v4266 = vmul.f32 %v4265, -0.00019511016
        %v4267 = vadd.f32 %v4266, 0.008332121
        %v4268 = vmul.f32 %v4265, %v4267
        %v4269 = vadd.f32 %v4268, -0.16666654
        %v4270 = vmul.f32 %v4265, %v4269
        %v4271 = vadd.f32 %v4270, 1.0
        %v4272 = vmul.f32 %v4271, %v4256
        %vm4273 = vweird.f32 %v726
        %v4274 = vadd.s32 %v4257, 3
        %v4275 = vand.u32 %v4274, 3
        %vm4276 = vcmp.lt.s32.totalorder %v4275, 2
        %vm4277 = vcmp.eq.s32.totalorder %v4275, 0
        %v4278 = vxor.u32 %v4272, 2147483648
        %v4279 = vsel %vm4277, %v4264, %v4278
        %vm4280 = vcmp.eq.s32.totalorder %v4275, 2
        %v4281 = vxor.u32 %v4264, 2147483648
        %v4282 = vsel %vm4280, %v4281, %v4272
        %v4283 = vsel %vm4276, %v4279, %v4282
        %v4284 = vsel %vm4273, nan, %v4283
        %v4285 = vand.u32 2147483647, %v727
        %vm4286 = vcmp.le.f32.partialorder %v4285, 0.7853982
        %vm4287 = vcmp.lt.s32.totalorder %v727, 0
        %v4288 = vand.u32 %v727, 2139095040
        %v4289 = vshrl.u32 %v4288, 23
        %v4290 = vsub.s32 %v4289, 127
        %v4291 = vand.u32 2147483647, %v727
        %v4292 = vand.u32 %v4291, 8388607
        %v4293 = vor.u32 %v4292, 8388608
        %v4294 = vsub.s32 0, %v4293
        %v4295 = vadd.s32 %v4290, 1
        %vm4296 = vcmp.gt.s32.totalorder %v4295, 0
        %v4297 = vsel %vm4296, %v4295, 0
        %v4298 = vshrl.u32 %v4297, 5
        %v4299 = vand.u32 %v4297, 31
        %v4300 = vsub.s32 32, %v4299
        %v4301 = vshrl.u32 683565275, %v4300
        %v4302 = vshll.u32 683565275, %v4299
        %v4303 = vshrl.u32 2475754826, %v4300
        %v4304 = vor.u32 %v4302, %v4303
        %v4305 = vshll.u32 2475754826, %v4299
        %v4306 = vshrl.u32 2131351028, %v4300
        %v4307 = vor.u32 %v4305, %v4306
        %v4308 = vshll.u32 2131351028, %v4299
        %v4309 = vshrl.u32 2102212464, %v4300
        %v4310 = vor.u32 %v4308, %v4309
        %v4311 = vshll.u32 2102212464, %v4299
        %v4312 = vshrl.u32 920167782, %v4300
        %v4313 = vor.u32 %v4311, %v4312
        %v4314 = vshll.u32 920167782, %v4299
        %v4315 = vshrl.u32 1326507024, %v4300
        %v4316 = vor.u32 %v4314, %v4315
        %vm4317 = vcmp.lt.s32.totalorder %v4298, 1
        %vm4318 = vcmp.lt.s32.totalorder %v4298, 2
        %vm4319 = vcmp.lt.s32.totalorder %v4298, 3
        %vm4320 = vcmp.lt.s32.totalorder %v4298, 4
        %v4321 = vsel %vm4317, %v4301, %v4304
        %v4322 = vsel %vm4320, %v4310, 2102212464
        %v4323 = vsel %vm4319, %v4307, %v4322
        %v4324 = vsel %vm4318, %v4321, %v4323
        %v4325 = vsel %vm4317, %v4304, %v4307
        %v4326 = vsel %vm4320, %v4313, 920167782
        %v4327 = vsel %vm4319, %v4310, %v4326
        %v4328 = vsel %vm4318, %v4325, %v4327
        %v4329 = vsel %vm4317, %v4307, %v4310
        %v4330 = vsel %vm4320, %v4316, 1326507024
        %v4331 = vsel %vm4319, %v4313, %v4330
        %v4332 = vsel %vm4318, %v4329, %v4331
        %v4333 = vshll.u32 %v4293, 8
        %v4334 = vand.u32 %v4333, 65535
        %v4335 = vshrl.u32 %v4333, 16
        %v4336 = vand.u32 %v4332, 65535
        %v4337 = vshrl.u32 %v4332, 16
        %v4338 = vmul.u32 %v4334, %v4336
        %v4339 = vmul.u32 %v4334, %v4337
        %v4340 = vmul.u32 %v4335, %v4336
        %v4341 = vmul.u32 %v4335, %v4337
        %v4342 = vshll.u32 %v4339, 16
        %v4343 = vshrl.u32 %v4339, 16
        %v4344 = vshll.u32 %v4340, 16
        %v4345 = vshrl.u32 %v4340, 16
        %vm4346 = vc.u32 %v4338, %v4342
        %v4347 = vsel %vm4346, 1, 0
        %v4348 = vadd.s32 %v4338, %v4342
        %v4349 = vadd.s32 %v4341, %v4347
        %vm4350 = vc.u32 %v4348, %v4344
        %v4351 = vsel %vm4350, 1, 0
        %v4352 = vadd.s32 %v4348, %v4344
        %v4353 = vadd.s32 %v4349, %v4351
        %v4354 = vadd.s32 %v4353, %v4343
        %v4355 = vadd.s32 %v4354, %v4345
        %v4356 = vand.u32 %v4333, 65535
        %v4357 = vshrl.u32 %v4333, 16
        %v4358 = vand.u32 %v4328, 65535
        %v4359 = vshrl.u32 %v4328, 16
        %v4360 = vmul.u32 %v4356, %v4358
        %v4361 = vmul.u32 %v4356, %v4359
        %v4362 = vmul.u32 %v4357, %v4358
        %v4363 = vmul.u32 %v4357, %v4359
        %v4364 = vshll.u32 %v4361, 16
        %v4365 = vshrl.u32 %v4361, 16
        %v4366 = vshll.u32 %v4362, 16
        %v4367 = vshrl.u32 %v4362, 16
        %vm4368 = vc.u32 %v4360, %v4364
        %v4369 = vsel %vm4368, 1, 0
        %v4370 = vadd.s32 %v4360, %v4364
        %v4371 = vadd.s32 %v4363, %v4369
        %vm4372 = vc.u32 %v4370, %v4366
        %v4373 = vsel %vm4372, 1, 0
        %v4374 = vadd.s32 %v4370, %v4366
        %v4375 = vadd.s32 %v4371, %v4373
        %v4376 = vadd.s32 %v4375, %v4365
        %v4377 = vadd.s32 %v4376, %v4367
        %v4378 = vmul.u32 %v4333, %v4324
        %v4379 = vadd.s32 %v4355, %v4374
        %vm4380 = vc.u32 %v4355, %v4374
        %v4381 = vadd.s32 %v4377, 1
        %v4382 = vsel %vm4380, %v4381, %v4377
        %v4383 = vadd.s32 %v4378, %v4382
        %v4384 = vadd.s32 %v4383, 536870912
        %v4385 = vshrl.u32 %v4384, 30
        %v4386 = vshll.u32 %v4385, 30
        %v4387 = vsub.s32 %v4383, %v4386
        %vm4388 = vcmp.lt.s32.totalorder %v4387, 0
        %v4389 = vsub.s32 0, %v4387
        %v4390 = vsel %vm4388, %v4389, %v4387
        %v4391 = vclz %v4390
        %v4392 = vsub.s32 %v4391, 2
        %vm4393 = vcmp.gt.s32.totalorder 0, %v4392
        %v4394 = vsel %vm4393, 0, %v4392
        %v4395 = vsub.s32 32, %v4394
        %v4396 = vshll.u32 %v4387, %v4394
        %v4397 = vshrl.u32 %v4379, %v4395
        %v4398 = vor.u32 %v4396, %v4397
        %v4399 = vsub.s32 4294967266, %v4394
        %v4400 = vadd.s32 %v4399, 127
        %v4401 = vshll.u32 %v4400, 23
        %v4402 = vor.u32 4788187, %v4401
        %v4403 = vand.u32 2147483647, %v4402
        %v4405 = vcvt.s32.f32 %v4398
        %v4406 = vmul.f32 %v4405, %v4403
        %v4407 = vxor.u32 %v4406, 2147483648
        %v4408 = vsel %vm4287, %v4407, %v4406
        %v4409 = vsub.s32 4, %v4385
        %v4410 = vsel %vm4287, %v4409, %v4385
        %v4411 = vsel %vm4286, %v727, %v4408
        %v4412 = vsel %vm4286, 0, %v4410
        %v4413 = vmul.f32 %v4411, %v4411
        %v4414 = vmul.f32 %v4413, -0.001358992
        %v4415 = vadd.f32 %v4414, 0.041655596
        %v4416 = vmul.f32 %v4413, %v4415
        %v4417 = vadd.f32 %v4416, -0.4999988
        %v4418 = vmul.f32 %v4413, %v4417
        %v4419 = vadd.f32 1.0, %v4418
        %v4420 = vmul.f32 %v4411, %v4411
        %v4421 = vmul.f32 %v4420, -0.00019511016
        %v4422 = vadd.f32 %v4421, 0.008332121
        %v4423 = vmul.f32 %v4420, %v4422
        %v4424 = vadd.f32 %v4423, -0.16666654
        %v4425 = vmul.f32 %v4420, %v4424
        %v4426 = vadd.f32 %v4425, 1.0
        %v4427 = vmul.f32 %v4426, %v4411
        %vm4428 = vweird.f32 %v727
        %v4429 = vadd.s32 %v4412, 3
        %v4430 = vand.u32 %v4429, 3
        %vm4431 = vcmp.lt.s32.totalorder %v4430, 2
        %vm4432 = vcmp.eq.s32.totalorder %v4430, 0
        %v4433 = vxor.u32 %v4427, 2147483648
        %v4434 = vsel %vm4432, %v4419, %v4433
        %vm4435 = vcmp.eq.s32.totalorder %v4430, 2
        %v4436 = vxor.u32 %v4419, 2147483648
        %v4437 = vsel %vm4435, %v4436, %v4427
        %v4438 = vsel %vm4431, %v4434, %v4437
        %v4439 = vsel %vm4428, nan, %v4438
        %v4440 = vand.u32 2147483647, %v728
        %vm4441 = vcmp.le.f32.partialorder %v4440, 0.7853982
        %vm4442 = vcmp.lt.s32.totalorder %v728, 0
        %v4443 = vand.u32 %v728, 2139095040
        %v4444 = vshrl.u32 %v4443, 23
        %v4445 = vsub.s32 %v4444, 127
        %v4446 = vand.u32 2147483647, %v728
        %v4447 = vand.u32 %v4446, 8388607
        %v4448 = vor.u32 %v4447, 8388608
        %v4449 = vsub.s32 0, %v4448
        %v4450 = vadd.s32 %v4445, 1
        %vm4451 = vcmp.gt.s32.totalorder %v4450, 0
        %v4452 = vsel %vm4451, %v4450, 0
        %v4453 = vshrl.u32 %v4452, 5
        %v4454 = vand.u32 %v4452, 31
        %v4455 = vsub.s32 32, %v4454
        %v4456 = vshrl.u32 683565275, %v4455
        %v4457 = vshll.u32 683565275, %v4454
        %v4458 = vshrl.u32 2475754826, %v4455
        %v4459 = vor.u32 %v4457, %v4458
        %v4460 = vshll.u32 2475754826, %v4454
        %v4461 = vshrl.u32 2131351028, %v4455
        %v4462 = vor.u32 %v4460, %v4461
        %v4463 = vshll.u32 2131351028, %v4454
        %v4464 = vshrl.u32 2102212464, %v4455
        %v4465 = vor.u32 %v4463, %v4464
        %v4466 = vshll.u32 2102212464, %v4454
        %v4467 = vshrl.u32 920167782, %v4455
        %v4468 = vor.u32 %v4466, %v4467
        %v4469 = vshll.u32 920167782, %v4454
        %v4470 = vshrl.u32 1326507024, %v4455
        %v4471 = vor.u32 %v4469, %v4470
        %vm4472 = vcmp.lt.s32.totalorder %v4453, 1
        %vm4473 = vcmp.lt.s32.totalorder %v4453, 2
        %vm4474 = vcmp.lt.s32.totalorder %v4453, 3
        %vm4475 = vcmp.lt.s32.totalorder %v4453, 4
        %v4476 = vsel %vm4472, %v4456, %v4459
        %v4477 = vsel %vm4475, %v4465, 2102212464
        %v4478 = vsel %vm4474, %v4462, %v4477
        %v4479 = vsel %vm4473, %v4476, %v4478
        %v4480 = vsel %vm4472, %v4459, %v4462
        %v4481 = vsel %vm4475, %v4468, 920167782
        %v4482 = vsel %vm4474, %v4465, %v4481
        %v4483 = vsel %vm4473, %v4480, %v4482
        %v4484 = vsel %vm4472, %v4462, %v4465
        %v4485 = vsel %vm4475, %v4471, 1326507024
        %v4486 = vsel %vm4474, %v4468, %v4485
        %v4487 = vsel %vm4473, %v4484, %v4486
        %v4488 = vshll.u32 %v4448, 8
        %v4489 = vand.u32 %v4488, 65535
        %v4490 = vshrl.u32 %v4488, 16
        %v4491 = vand.u32 %v4487, 65535
        %v4492 = vshrl.u32 %v4487, 16
        %v4493 = vmul.u32 %v4489, %v4491
        %v4494 = vmul.u32 %v4489, %v4492
        %v4495 = vmul.u32 %v4490, %v4491
        %v4496 = vmul.u32 %v4490, %v4492
        %v4497 = vshll.u32 %v4494, 16
        %v4498 = vshrl.u32 %v4494, 16
        %v4499 = vshll.u32 %v4495, 16
        %v4500 = vshrl.u32 %v4495, 16
        %vm4501 = vc.u32 %v4493, %v4497
        %v4502 = vsel %vm4501, 1, 0
        %v4503 = vadd.s32 %v4493, %v4497
        %v4504 = vadd.s32 %v4496, %v4502
        %vm4505 = vc.u32 %v4503, %v4499
        %v4506 = vsel %vm4505, 1, 0
        %v4507 = vadd.s32 %v4503, %v4499
        %v4508 = vadd.s32 %v4504, %v4506
        %v4509 = vadd.s32 %v4508, %v4498
        %v4510 = vadd.s32 %v4509, %v4500
        %v4511 = vand.u32 %v4488, 65535
        %v4512 = vshrl.u32 %v4488, 16
        %v4513 = vand.u32 %v4483, 65535
        %v4514 = vshrl.u32 %v4483, 16
        %v4515 = vmul.u32 %v4511, %v4513
        %v4516 = vmul.u32 %v4511, %v4514
        %v4517 = vmul.u32 %v4512, %v4513
        %v4518 = vmul.u32 %v4512, %v4514
        %v4519 = vshll.u32 %v4516, 16
        %v4520 = vshrl.u32 %v4516, 16
        %v4521 = vshll.u32 %v4517, 16
        %v4522 = vshrl.u32 %v4517, 16
        %vm4523 = vc.u32 %v4515, %v4519
        %v4524 = vsel %vm4523, 1, 0
        %v4525 = vadd.s32 %v4515, %v4519
        %v4526 = vadd.s32 %v4518, %v4524
        %vm4527 = vc.u32 %v4525, %v4521
        %v4528 = vsel %vm4527, 1, 0
        %v4529 = vadd.s32 %v4525, %v4521
        %v4530 = vadd.s32 %v4526, %v4528
        %v4531 = vadd.s32 %v4530, %v4520
        %v4532 = vadd.s32 %v4531, %v4522
        %v4533 = vmul.u32 %v4488, %v4479
        %v4534 = vadd.s32 %v4510, %v4529
        %vm4535 = vc.u32 %v4510, %v4529
        %v4536 = vadd.s32 %v4532, 1
        %v4537 = vsel %vm4535, %v4536, %v4532
        %v4538 = vadd.s32 %v4533, %v4537
        %v4539 = vadd.s32 %v4538, 536870912
        %v4540 = vshrl.u32 %v4539, 30
        %v4541 = vshll.u32 %v4540, 30
        %v4542 = vsub.s32 %v4538, %v4541
        %vm4543 = vcmp.lt.s32.totalorder %v4542, 0
        %v4544 = vsub.s32 0, %v4542
        %v4545 = vsel %vm4543, %v4544, %v4542
        %v4546 = vclz %v4545
        %v4547 = vsub.s32 %v4546, 2
        %vm4548 = vcmp.gt.s32.totalorder 0, %v4547
        %v4549 = vsel %vm4548, 0, %v4547
        %v4550 = vsub.s32 32, %v4549
        %v4551 = vshll.u32 %v4542, %v4549
        %v4552 = vshrl.u32 %v4534, %v4550
        %v4553 = vor.u32 %v4551, %v4552
        %v4554 = vsub.s32 4294967266, %v4549
        %v4555 = vadd.s32 %v4554, 127
        %v4556 = vshll.u32 %v4555, 23
        %v4557 = vor.u32 4788187, %v4556
        %v4558 = vand.u32 2147483647, %v4557
        %v4560 = vcvt.s32.f32 %v4553
        %v4561 = vmul.f32 %v4560, %v4558
        %v4562 = vxor.u32 %v4561, 2147483648
        %v4563 = vsel %vm4442, %v4562, %v4561
        %v4564 = vsub.s32 4, %v4540
        %v4565 = vsel %vm4442, %v4564, %v4540
        %v4566 = vsel %vm4441, %v728, %v4563
        %v4567 = vsel %vm4441, 0, %v4565
        %v4568 = vmul.f32 %v4566, %v4566
        %v4569 = vmul.f32 %v4568, -0.001358992
        %v4570 = vadd.f32 %v4569, 0.041655596
        %v4571 = vmul.f32 %v4568, %v4570
        %v4572 = vadd.f32 %v4571, -0.4999988
        %v4573 = vmul.f32 %v4568, %v4572
        %v4574 = vadd.f32 1.0, %v4573
        %v4575 = vmul.f32 %v4566, %v4566
        %v4576 = vmul.f32 %v4575, -0.00019511016
        %v4577 = vadd.f32 %v4576, 0.008332121
        %v4578 = vmul.f32 %v4575, %v4577
        %v4579 = vadd.f32 %v4578, -0.16666654
        %v4580 = vmul.f32 %v4575, %v4579
        %v4581 = vadd.f32 %v4580, 1.0
        %v4582 = vmul.f32 %v4581, %v4566
        %vm4583 = vweird.f32 %v728
        %v4584 = vadd.s32 %v4567, 3
        %v4585 = vand.u32 %v4584, 3
        %vm4586 = vcmp.lt.s32.totalorder %v4585, 2
        %vm4587 = vcmp.eq.s32.totalorder %v4585, 0
        %v4588 = vxor.u32 %v4582, 2147483648
        %v4589 = vsel %vm4587, %v4574, %v4588
        %vm4590 = vcmp.eq.s32.totalorder %v4585, 2
        %v4591 = vxor.u32 %v4574, 2147483648
        %v4592 = vsel %vm4590, %v4591, %v4582
        %v4593 = vsel %vm4586, %v4589, %v4592
        %v4594 = vsel %vm4583, nan, %v4593
        %v4595 = vand.u32 2147483647, %v729
        %vm4596 = vcmp.le.f32.partialorder %v4595, 0.7853982
        %vm4597 = vcmp.lt.s32.totalorder %v729, 0
        %v4598 = vand.u32 %v729, 2139095040
        %v4599 = vshrl.u32 %v4598, 23
        %v4600 = vsub.s32 %v4599, 127
        %v4601 = vand.u32 2147483647, %v729
        %v4602 = vand.u32 %v4601, 8388607
        %v4603 = vor.u32 %v4602, 8388608
        %v4604 = vsub.s32 0, %v4603
        %v4605 = vadd.s32 %v4600, 1
        %vm4606 = vcmp.gt.s32.totalorder %v4605, 0
        %v4607 = vsel %vm4606, %v4605, 0
        %v4608 = vshrl.u32 %v4607, 5
        %v4609 = vand.u32 %v4607, 31
        %v4610 = vsub.s32 32, %v4609
        %v4611 = vshrl.u32 683565275, %v4610
        %v4612 = vshll.u32 683565275, %v4609
        %v4613 = vshrl.u32 2475754826, %v4610
        %v4614 = vor.u32 %v4612, %v4613
        %v4615 = vshll.u32 2475754826, %v4609
        %v4616 = vshrl.u32 2131351028, %v4610
        %v4617 = vor.u32 %v4615, %v4616
        %v4618 = vshll.u32 2131351028, %v4609
        %v4619 = vshrl.u32 2102212464, %v4610
        %v4620 = vor.u32 %v4618, %v4619
        %v4621 = vshll.u32 2102212464, %v4609
        %v4622 = vshrl.u32 920167782, %v4610
        %v4623 = vor.u32 %v4621, %v4622
        %v4624 = vshll.u32 920167782, %v4609
        %v4625 = vshrl.u32 1326507024, %v4610
        %v4626 = vor.u32 %v4624, %v4625
        %vm4627 = vcmp.lt.s32.totalorder %v4608, 1
        %vm4628 = vcmp.lt.s32.totalorder %v4608, 2
        %vm4629 = vcmp.lt.s32.totalorder %v4608, 3
        %vm4630 = vcmp.lt.s32.totalorder %v4608, 4
        %v4631 = vsel %vm4627, %v4611, %v4614
        %v4632 = vsel %vm4630, %v4620, 2102212464
        %v4633 = vsel %vm4629, %v4617, %v4632
        %v4634 = vsel %vm4628, %v4631, %v4633
        %v4635 = vsel %vm4627, %v4614, %v4617
        %v4636 = vsel %vm4630, %v4623, 920167782
        %v4637 = vsel %vm4629, %v4620, %v4636
        %v4638 = vsel %vm4628, %v4635, %v4637
        %v4639 = vsel %vm4627, %v4617, %v4620
        %v4640 = vsel %vm4630, %v4626, 1326507024
        %v4641 = vsel %vm4629, %v4623, %v4640
        %v4642 = vsel %vm4628, %v4639, %v4641
        %v4643 = vshll.u32 %v4603, 8
        %v4644 = vand.u32 %v4643, 65535
        %v4645 = vshrl.u32 %v4643, 16
        %v4646 = vand.u32 %v4642, 65535
        %v4647 = vshrl.u32 %v4642, 16
        %v4648 = vmul.u32 %v4644, %v4646
        %v4649 = vmul.u32 %v4644, %v4647
        %v4650 = vmul.u32 %v4645, %v4646
        %v4651 = vmul.u32 %v4645, %v4647
        %v4652 = vshll.u32 %v4649, 16
        %v4653 = vshrl.u32 %v4649, 16
        %v4654 = vshll.u32 %v4650, 16
        %v4655 = vshrl.u32 %v4650, 16
        %vm4656 = vc.u32 %v4648, %v4652
        %v4657 = vsel %vm4656, 1, 0
        %v4658 = vadd.s32 %v4648, %v4652
        %v4659 = vadd.s32 %v4651, %v4657
        %vm4660 = vc.u32 %v4658, %v4654
        %v4661 = vsel %vm4660, 1, 0
        %v4662 = vadd.s32 %v4658, %v4654
        %v4663 = vadd.s32 %v4659, %v4661
        %v4664 = vadd.s32 %v4663, %v4653
        %v4665 = vadd.s32 %v4664, %v4655
        %v4666 = vand.u32 %v4643, 65535
        %v4667 = vshrl.u32 %v4643, 16
        %v4668 = vand.u32 %v4638, 65535
        %v4669 = vshrl.u32 %v4638, 16
        %v4670 = vmul.u32 %v4666, %v4668
        %v4671 = vmul.u32 %v4666, %v4669
        %v4672 = vmul.u32 %v4667, %v4668
        %v4673 = vmul.u32 %v4667, %v4669
        %v4674 = vshll.u32 %v4671, 16
        %v4675 = vshrl.u32 %v4671, 16
        %v4676 = vshll.u32 %v4672, 16
        %v4677 = vshrl.u32 %v4672, 16
        %vm4678 = vc.u32 %v4670, %v4674
        %v4679 = vsel %vm4678, 1, 0
        %v4680 = vadd.s32 %v4670, %v4674
        %v4681 = vadd.s32 %v4673, %v4679
        %vm4682 = vc.u32 %v4680, %v4676
        %v4683 = vsel %vm4682, 1, 0
        %v4684 = vadd.s32 %v4680, %v4676
        %v4685 = vadd.s32 %v4681, %v4683
        %v4686 = vadd.s32 %v4685, %v4675
        %v4687 = vadd.s32 %v4686, %v4677
        %v4688 = vmul.u32 %v4643, %v4634
        %v4689 = vadd.s32 %v4665, %v4684
        %vm4690 = vc.u32 %v4665, %v4684
        %v4691 = vadd.s32 %v4687, 1
        %v4692 = vsel %vm4690, %v4691, %v4687
        %v4693 = vadd.s32 %v4688, %v4692
        %v4694 = vadd.s32 %v4693, 536870912
        %v4695 = vshrl.u32 %v4694, 30
        %v4696 = vshll.u32 %v4695, 30
        %v4697 = vsub.s32 %v4693, %v4696
        %vm4698 = vcmp.lt.s32.totalorder %v4697, 0
        %v4699 = vsub.s32 0, %v4697
        %v4700 = vsel %vm4698, %v4699, %v4697
        %v4701 = vclz %v4700
        %v4702 = vsub.s32 %v4701, 2
        %vm4703 = vcmp.gt.s32.totalorder 0, %v4702
        %v4704 = vsel %vm4703, 0, %v4702
        %v4705 = vsub.s32 32, %v4704
        %v4706 = vshll.u32 %v4697, %v4704
        %v4707 = vshrl.u32 %v4689, %v4705
        %v4708 = vor.u32 %v4706, %v4707
        %v4709 = vsub.s32 4294967266, %v4704
        %v4710 = vadd.s32 %v4709, 127
        %v4711 = vshll.u32 %v4710, 23
        %v4712 = vor.u32 4788187, %v4711
        %v4713 = vand.u32 2147483647, %v4712
        %v4715 = vcvt.s32.f32 %v4708
        %v4716 = vmul.f32 %v4715, %v4713
        %v4717 = vxor.u32 %v4716, 2147483648
        %v4718 = vsel %vm4597, %v4717, %v4716
        %v4719 = vsub.s32 4, %v4695
        %v4720 = vsel %vm4597, %v4719, %v4695
        %v4721 = vsel %vm4596, %v729, %v4718
        %v4722 = vsel %vm4596, 0, %v4720
        %v4723 = vmul.f32 %v4721, %v4721
        %v4724 = vmul.f32 %v4723, -0.001358992
        %v4725 = vadd.f32 %v4724, 0.041655596
        %v4726 = vmul.f32 %v4723, %v4725
        %v4727 = vadd.f32 %v4726, -0.4999988
        %v4728 = vmul.f32 %v4723, %v4727
        %v4729 = vadd.f32 1.0, %v4728
        %v4730 = vmul.f32 %v4721, %v4721
        %v4731 = vmul.f32 %v4730, -0.00019511016
        %v4732 = vadd.f32 %v4731, 0.008332121
        %v4733 = vmul.f32 %v4730, %v4732
        %v4734 = vadd.f32 %v4733, -0.16666654
        %v4735 = vmul.f32 %v4730, %v4734
        %v4736 = vadd.f32 %v4735, 1.0
        %v4737 = vmul.f32 %v4736, %v4721
        %vm4738 = vweird.f32 %v729
        %v4739 = vadd.s32 %v4722, 3
        %v4740 = vand.u32 %v4739, 3
        %vm4741 = vcmp.lt.s32.totalorder %v4740, 2
        %vm4742 = vcmp.eq.s32.totalorder %v4740, 0
        %v4743 = vxor.u32 %v4737, 2147483648
        %v4744 = vsel %vm4742, %v4729, %v4743
        %vm4745 = vcmp.eq.s32.totalorder %v4740, 2
        %v4746 = vxor.u32 %v4729, 2147483648
        %v4747 = vsel %vm4745, %v4746, %v4737
        %v4748 = vsel %vm4741, %v4744, %v4747
        %v4749 = vsel %vm4738, nan, %v4748
        %v4750 = vand.u32 2147483647, %v730
        %vm4751 = vcmp.le.f32.partialorder %v4750, 0.7853982
        %vm4752 = vcmp.lt.s32.totalorder %v730, 0
        %v4753 = vand.u32 %v730, 2139095040
        %v4754 = vshrl.u32 %v4753, 23
        %v4755 = vsub.s32 %v4754, 127
        %v4756 = vand.u32 2147483647, %v730
        %v4757 = vand.u32 %v4756, 8388607
        %v4758 = vor.u32 %v4757, 8388608
        %v4759 = vsub.s32 0, %v4758
        %v4760 = vadd.s32 %v4755, 1
        %vm4761 = vcmp.gt.s32.totalorder %v4760, 0
        %v4762 = vsel %vm4761, %v4760, 0
        %v4763 = vshrl.u32 %v4762, 5
        %v4764 = vand.u32 %v4762, 31
        %v4765 = vsub.s32 32, %v4764
        %v4766 = vshrl.u32 683565275, %v4765
        %v4767 = vshll.u32 683565275, %v4764
        %v4768 = vshrl.u32 2475754826, %v4765
        %v4769 = vor.u32 %v4767, %v4768
        %v4770 = vshll.u32 2475754826, %v4764
        %v4771 = vshrl.u32 2131351028, %v4765
        %v4772 = vor.u32 %v4770, %v4771
        %v4773 = vshll.u32 2131351028, %v4764
        %v4774 = vshrl.u32 2102212464, %v4765
        %v4775 = vor.u32 %v4773, %v4774
        %v4776 = vshll.u32 2102212464, %v4764
        %v4777 = vshrl.u32 920167782, %v4765
        %v4778 = vor.u32 %v4776, %v4777
        %v4779 = vshll.u32 920167782, %v4764
        %v4780 = vshrl.u32 1326507024, %v4765
        %v4781 = vor.u32 %v4779, %v4780
        %vm4782 = vcmp.lt.s32.totalorder %v4763, 1
        %vm4783 = vcmp.lt.s32.totalorder %v4763, 2
        %vm4784 = vcmp.lt.s32.totalorder %v4763, 3
        %vm4785 = vcmp.lt.s32.totalorder %v4763, 4
        %v4786 = vsel %vm4782, %v4766, %v4769
        %v4787 = vsel %vm4785, %v4775, 2102212464
        %v4788 = vsel %vm4784, %v4772, %v4787
        %v4789 = vsel %vm4783, %v4786, %v4788
        %v4790 = vsel %vm4782, %v4769, %v4772
        %v4791 = vsel %vm4785, %v4778, 920167782
        %v4792 = vsel %vm4784, %v4775, %v4791
        %v4793 = vsel %vm4783, %v4790, %v4792
        %v4794 = vsel %vm4782, %v4772, %v4775
        %v4795 = vsel %vm4785, %v4781, 1326507024
        %v4796 = vsel %vm4784, %v4778, %v4795
        %v4797 = vsel %vm4783, %v4794, %v4796
        %v4798 = vshll.u32 %v4758, 8
        %v4799 = vand.u32 %v4798, 65535
        %v4800 = vshrl.u32 %v4798, 16
        %v4801 = vand.u32 %v4797, 65535
        %v4802 = vshrl.u32 %v4797, 16
        %v4803 = vmul.u32 %v4799, %v4801
        %v4804 = vmul.u32 %v4799, %v4802
        %v4805 = vmul.u32 %v4800, %v4801
        %v4806 = vmul.u32 %v4800, %v4802
        %v4807 = vshll.u32 %v4804, 16
        %v4808 = vshrl.u32 %v4804, 16
        %v4809 = vshll.u32 %v4805, 16
        %v4810 = vshrl.u32 %v4805, 16
        %vm4811 = vc.u32 %v4803, %v4807
        %v4812 = vsel %vm4811, 1, 0
        %v4813 = vadd.s32 %v4803, %v4807
        %v4814 = vadd.s32 %v4806, %v4812
        %vm4815 = vc.u32 %v4813, %v4809
        %v4816 = vsel %vm4815, 1, 0
        %v4817 = vadd.s32 %v4813, %v4809
        %v4818 = vadd.s32 %v4814, %v4816
        %v4819 = vadd.s32 %v4818, %v4808
        %v4820 = vadd.s32 %v4819, %v4810
        %v4821 = vand.u32 %v4798, 65535
        %v4822 = vshrl.u32 %v4798, 16
        %v4823 = vand.u32 %v4793, 65535
        %v4824 = vshrl.u32 %v4793, 16
        %v4825 = vmul.u32 %v4821, %v4823
        %v4826 = vmul.u32 %v4821, %v4824
        %v4827 = vmul.u32 %v4822, %v4823
        %v4828 = vmul.u32 %v4822, %v4824
        %v4829 = vshll.u32 %v4826, 16
        %v4830 = vshrl.u32 %v4826, 16
        %v4831 = vshll.u32 %v4827, 16
        %v4832 = vshrl.u32 %v4827, 16
        %vm4833 = vc.u32 %v4825, %v4829
        %v4834 = vsel %vm4833, 1, 0
        %v4835 = vadd.s32 %v4825, %v4829
        %v4836 = vadd.s32 %v4828, %v4834
        %vm4837 = vc.u32 %v4835, %v4831
        %v4838 = vsel %vm4837, 1, 0
        %v4839 = vadd.s32 %v4835, %v4831
        %v4840 = vadd.s32 %v4836, %v4838
        %v4841 = vadd.s32 %v4840, %v4830
        %v4842 = vadd.s32 %v4841, %v4832
        %v4843 = vmul.u32 %v4798, %v4789
        %v4844 = vadd.s32 %v4820, %v4839
        %vm4845 = vc.u32 %v4820, %v4839
        %v4846 = vadd.s32 %v4842, 1
        %v4847 = vsel %vm4845, %v4846, %v4842
        %v4848 = vadd.s32 %v4843, %v4847
        %v4849 = vadd.s32 %v4848, 536870912
        %v4850 = vshrl.u32 %v4849, 30
        %v4851 = vshll.u32 %v4850, 30
        %v4852 = vsub.s32 %v4848, %v4851
        %vm4853 = vcmp.lt.s32.totalorder %v4852, 0
        %v4854 = vsub.s32 0, %v4852
        %v4855 = vsel %vm4853, %v4854, %v4852
        %v4856 = vclz %v4855
        %v4857 = vsub.s32 %v4856, 2
        %vm4858 = vcmp.gt.s32.totalorder 0, %v4857
        %v4859 = vsel %vm4858, 0, %v4857
        %v4860 = vsub.s32 32, %v4859
        %v4861 = vshll.u32 %v4852, %v4859
        %v4862 = vshrl.u32 %v4844, %v4860
        %v4863 = vor.u32 %v4861, %v4862
        %v4864 = vsub.s32 4294967266, %v4859
        %v4865 = vadd.s32 %v4864, 127
        %v4866 = vshll.u32 %v4865, 23
        %v4867 = vor.u32 4788187, %v4866
        %v4868 = vand.u32 2147483647, %v4867
        %v4870 = vcvt.s32.f32 %v4863
        %v4871 = vmul.f32 %v4870, %v4868
        %v4872 = vxor.u32 %v4871, 2147483648
        %v4873 = vsel %vm4752, %v4872, %v4871
        %v4874 = vsub.s32 4, %v4850
        %v4875 = vsel %vm4752, %v4874, %v4850
        %v4876 = vsel %vm4751, %v730, %v4873
        %v4877 = vsel %vm4751, 0, %v4875
        %v4878 = vmul.f32 %v4876, %v4876
        %v4879 = vmul.f32 %v4878, -0.001358992
        %v4880 = vadd.f32 %v4879, 0.041655596
        %v4881 = vmul.f32 %v4878, %v4880
        %v4882 = vadd.f32 %v4881, -0.4999988
        %v4883 = vmul.f32 %v4878, %v4882
        %v4884 = vadd.f32 1.0, %v4883
        %v4885 = vmul.f32 %v4876, %v4876
        %v4886 = vmul.f32 %v4885, -0.00019511016
        %v4887 = vadd.f32 %v4886, 0.008332121
        %v4888 = vmul.f32 %v4885, %v4887
        %v4889 = vadd.f32 %v4888, -0.16666654
        %v4890 = vmul.f32 %v4885, %v4889
        %v4891 = vadd.f32 %v4890, 1.0
        %v4892 = vmul.f32 %v4891, %v4876
        %vm4893 = vweird.f32 %v730
        %v4894 = vadd.s32 %v4877, 3
        %v4895 = vand.u32 %v4894, 3
        %vm4896 = vcmp.lt.s32.totalorder %v4895, 2
        %vm4897 = vcmp.eq.s32.totalorder %v4895, 0
        %v4898 = vxor.u32 %v4892, 2147483648
        %v4899 = vsel %vm4897, %v4884, %v4898
        %vm4900 = vcmp.eq.s32.totalorder %v4895, 2
        %v4901 = vxor.u32 %v4884, 2147483648
        %v4902 = vsel %vm4900, %v4901, %v4892
        %v4903 = vsel %vm4896, %v4899, %v4902
        %v4904 = vsel %vm4893, nan, %v4903
        %v4905 = vand.u32 2147483647, %v731
        %vm4906 = vcmp.le.f32.partialorder %v4905, 0.7853982
        %vm4907 = vcmp.lt.s32.totalorder %v731, 0
        %v4908 = vand.u32 %v731, 2139095040
        %v4909 = vshrl.u32 %v4908, 23
        %v4910 = vsub.s32 %v4909, 127
        %v4911 = vand.u32 2147483647, %v731
        %v4912 = vand.u32 %v4911, 8388607
        %v4913 = vor.u32 %v4912, 8388608
        %v4914 = vsub.s32 0, %v4913
        %v4915 = vadd.s32 %v4910, 1
        %vm4916 = vcmp.gt.s32.totalorder %v4915, 0
        %v4917 = vsel %vm4916, %v4915, 0
        %v4918 = vshrl.u32 %v4917, 5
        %v4919 = vand.u32 %v4917, 31
        %v4920 = vsub.s32 32, %v4919
        %v4921 = vshrl.u32 683565275, %v4920
        %v4922 = vshll.u32 683565275, %v4919
        %v4923 = vshrl.u32 2475754826, %v4920
        %v4924 = vor.u32 %v4922, %v4923
        %v4925 = vshll.u32 2475754826, %v4919
        %v4926 = vshrl.u32 2131351028, %v4920
        %v4927 = vor.u32 %v4925, %v4926
        %v4928 = vshll.u32 2131351028, %v4919
        %v4929 = vshrl.u32 2102212464, %v4920
        %v4930 = vor.u32 %v4928, %v4929
        %v4931 = vshll.u32 2102212464, %v4919
        %v4932 = vshrl.u32 920167782, %v4920
        %v4933 = vor.u32 %v4931, %v4932
        %v4934 = vshll.u32 920167782, %v4919
        %v4935 = vshrl.u32 1326507024, %v4920
        %v4936 = vor.u32 %v4934, %v4935
        %vm4937 = vcmp.lt.s32.totalorder %v4918, 1
        %vm4938 = vcmp.lt.s32.totalorder %v4918, 2
        %vm4939 = vcmp.lt.s32.totalorder %v4918, 3
        %vm4940 = vcmp.lt.s32.totalorder %v4918, 4
        %v4941 = vsel %vm4937, %v4921, %v4924
        %v4942 = vsel %vm4940, %v4930, 2102212464
        %v4943 = vsel %vm4939, %v4927, %v4942
        %v4944 = vsel %vm4938, %v4941, %v4943
        %v4945 = vsel %vm4937, %v4924, %v4927
        %v4946 = vsel %vm4940, %v4933, 920167782
        %v4947 = vsel %vm4939, %v4930, %v4946
        %v4948 = vsel %vm4938, %v4945, %v4947
        %v4949 = vsel %vm4937, %v4927, %v4930
        %v4950 = vsel %vm4940, %v4936, 1326507024
        %v4951 = vsel %vm4939, %v4933, %v4950
        %v4952 = vsel %vm4938, %v4949, %v4951
        %v4953 = vshll.u32 %v4913, 8
        %v4954 = vand.u32 %v4953, 65535
        %v4955 = vshrl.u32 %v4953, 16
        %v4956 = vand.u32 %v4952, 65535
        %v4957 = vshrl.u32 %v4952, 16
        %v4958 = vmul.u32 %v4954, %v4956
        %v4959 = vmul.u32 %v4954, %v4957
        %v4960 = vmul.u32 %v4955, %v4956
        %v4961 = vmul.u32 %v4955, %v4957
        %v4962 = vshll.u32 %v4959, 16
        %v4963 = vshrl.u32 %v4959, 16
        %v4964 = vshll.u32 %v4960, 16
        %v4965 = vshrl.u32 %v4960, 16
        %vm4966 = vc.u32 %v4958, %v4962
        %v4967 = vsel %vm4966, 1, 0
        %v4968 = vadd.s32 %v4958, %v4962
        %v4969 = vadd.s32 %v4961, %v4967
        %vm4970 = vc.u32 %v4968, %v4964
        %v4971 = vsel %vm4970, 1, 0
        %v4972 = vadd.s32 %v4968, %v4964
        %v4973 = vadd.s32 %v4969, %v4971
        %v4974 = vadd.s32 %v4973, %v4963
        %v4975 = vadd.s32 %v4974, %v4965
        %v4976 = vand.u32 %v4953, 65535
        %v4977 = vshrl.u32 %v4953, 16
        %v4978 = vand.u32 %v4948, 65535
        %v4979 = vshrl.u32 %v4948, 16
        %v4980 = vmul.u32 %v4976, %v4978
        %v4981 = vmul.u32 %v4976, %v4979
        %v4982 = vmul.u32 %v4977, %v4978
        %v4983 = vmul.u32 %v4977, %v4979
        %v4984 = vshll.u32 %v4981, 16
        %v4985 = vshrl.u32 %v4981, 16
        %v4986 = vshll.u32 %v4982, 16
        %v4987 = vshrl.u32 %v4982, 16
        %vm4988 = vc.u32 %v4980, %v4984
        %v4989 = vsel %vm4988, 1, 0
        %v4990 = vadd.s32 %v4980, %v4984
        %v4991 = vadd.s32 %v4983, %v4989
        %vm4992 = vc.u32 %v4990, %v4986
        %v4993 = vsel %vm4992, 1, 0
        %v4994 = vadd.s32 %v4990, %v4986
        %v4995 = vadd.s32 %v4991, %v4993
        %v4996 = vadd.s32 %v4995, %v4985
        %v4997 = vadd.s32 %v4996, %v4987
        %v4998 = vmul.u32 %v4953, %v4944
        %v4999 = vadd.s32 %v4975, %v4994
        %vm5000 = vc.u32 %v4975, %v4994
        %v5001 = vadd.s32 %v4997, 1
        %v5002 = vsel %vm5000, %v5001, %v4997
        %v5003 = vadd.s32 %v4998, %v5002
        %v5004 = vadd.s32 %v5003, 536870912
        %v5005 = vshrl.u32 %v5004, 30
        %v5006 = vshll.u32 %v5005, 30
        %v5007 = vsub.s32 %v5003, %v5006
        %vm5008 = vcmp.lt.s32.totalorder %v5007, 0
        %v5009 = vsub.s32 0, %v5007
        %v5010 = vsel %vm5008, %v5009, %v5007
        %v5011 = vclz %v5010
        %v5012 = vsub.s32 %v5011, 2
        %vm5013 = vcmp.gt.s32.totalorder 0, %v5012
        %v5014 = vsel %vm5013, 0, %v5012
        %v5015 = vsub.s32 32, %v5014
        %v5016 = vshll.u32 %v5007, %v5014
        %v5017 = vshrl.u32 %v4999, %v5015
        %v5018 = vor.u32 %v5016, %v5017
        %v5019 = vsub.s32 4294967266, %v5014
        %v5020 = vadd.s32 %v5019, 127
        %v5021 = vshll.u32 %v5020, 23
        %v5022 = vor.u32 4788187, %v5021
        %v5023 = vand.u32 2147483647, %v5022
        %v5025 = vcvt.s32.f32 %v5018
        %v5026 = vmul.f32 %v5025, %v5023
        %v5027 = vxor.u32 %v5026, 2147483648
        %v5028 = vsel %vm4907, %v5027, %v5026
        %v5029 = vsub.s32 4, %v5005
        %v5030 = vsel %vm4907, %v5029, %v5005
        %v5031 = vsel %vm4906, %v731, %v5028
        %v5032 = vsel %vm4906, 0, %v5030
        %v5033 = vmul.f32 %v5031, %v5031
        %v5034 = vmul.f32 %v5033, -0.001358992
        %v5035 = vadd.f32 %v5034, 0.041655596
        %v5036 = vmul.f32 %v5033, %v5035
        %v5037 = vadd.f32 %v5036, -0.4999988
        %v5038 = vmul.f32 %v5033, %v5037
        %v5039 = vadd.f32 1.0, %v5038
        %v5040 = vmul.f32 %v5031, %v5031
        %v5041 = vmul.f32 %v5040, -0.00019511016
        %v5042 = vadd.f32 %v5041, 0.008332121
        %v5043 = vmul.f32 %v5040, %v5042
        %v5044 = vadd.f32 %v5043, -0.16666654
        %v5045 = vmul.f32 %v5040, %v5044
        %v5046 = vadd.f32 %v5045, 1.0
        %v5047 = vmul.f32 %v5046, %v5031
        %vm5048 = vweird.f32 %v731
        %v5049 = vadd.s32 %v5032, 3
        %v5050 = vand.u32 %v5049, 3
        %vm5051 = vcmp.lt.s32.totalorder %v5050, 2
        %vm5052 = vcmp.eq.s32.totalorder %v5050, 0
        %v5053 = vxor.u32 %v5047, 2147483648
        %v5054 = vsel %vm5052, %v5039, %v5053
        %vm5055 = vcmp.eq.s32.totalorder %v5050, 2
        %v5056 = vxor.u32 %v5039, 2147483648
        %v5057 = vsel %vm5055, %v5056, %v5047
        %v5058 = vsel %vm5051, %v5054, %v5057
        %v5059 = vsel %vm5048, nan, %v5058
        %v5060 = vand.u32 2147483647, %v732
        %vm5061 = vcmp.le.f32.partialorder %v5060, 0.7853982
        %vm5062 = vcmp.lt.s32.totalorder %v732, 0
        %v5063 = vand.u32 %v732, 2139095040
        %v5064 = vshrl.u32 %v5063, 23
        %v5065 = vsub.s32 %v5064, 127
        %v5066 = vand.u32 2147483647, %v732
        %v5067 = vand.u32 %v5066, 8388607
        %v5068 = vor.u32 %v5067, 8388608
        %v5069 = vsub.s32 0, %v5068
        %v5070 = vadd.s32 %v5065, 1
        %vm5071 = vcmp.gt.s32.totalorder %v5070, 0
        %v5072 = vsel %vm5071, %v5070, 0
        %v5073 = vshrl.u32 %v5072, 5
        %v5074 = vand.u32 %v5072, 31
        %v5075 = vsub.s32 32, %v5074
        %v5076 = vshrl.u32 683565275, %v5075
        %v5077 = vshll.u32 683565275, %v5074
        %v5078 = vshrl.u32 2475754826, %v5075
        %v5079 = vor.u32 %v5077, %v5078
        %v5080 = vshll.u32 2475754826, %v5074
        %v5081 = vshrl.u32 2131351028, %v5075
        %v5082 = vor.u32 %v5080, %v5081
        %v5083 = vshll.u32 2131351028, %v5074
        %v5084 = vshrl.u32 2102212464, %v5075
        %v5085 = vor.u32 %v5083, %v5084
        %v5086 = vshll.u32 2102212464, %v5074
        %v5087 = vshrl.u32 920167782, %v5075
        %v5088 = vor.u32 %v5086, %v5087
        %v5089 = vshll.u32 920167782, %v5074
        %v5090 = vshrl.u32 1326507024, %v5075
        %v5091 = vor.u32 %v5089, %v5090
        %vm5092 = vcmp.lt.s32.totalorder %v5073, 1
        %vm5093 = vcmp.lt.s32.totalorder %v5073, 2
        %vm5094 = vcmp.lt.s32.totalorder %v5073, 3
        %vm5095 = vcmp.lt.s32.totalorder %v5073, 4
        %v5096 = vsel %vm5092, %v5076, %v5079
        %v5097 = vsel %vm5095, %v5085, 2102212464
        %v5098 = vsel %vm5094, %v5082, %v5097
        %v5099 = vsel %vm5093, %v5096, %v5098
        %v5100 = vsel %vm5092, %v5079, %v5082
        %v5101 = vsel %vm5095, %v5088, 920167782
        %v5102 = vsel %vm5094, %v5085, %v5101
        %v5103 = vsel %vm5093, %v5100, %v5102
        %v5104 = vsel %vm5092, %v5082, %v5085
        %v5105 = vsel %vm5095, %v5091, 1326507024
        %v5106 = vsel %vm5094, %v5088, %v5105
        %v5107 = vsel %vm5093, %v5104, %v5106
        %v5108 = vshll.u32 %v5068, 8
        %v5109 = vand.u32 %v5108, 65535
        %v5110 = vshrl.u32 %v5108, 16
        %v5111 = vand.u32 %v5107, 65535
        %v5112 = vshrl.u32 %v5107, 16
        %v5113 = vmul.u32 %v5109, %v5111
        %v5114 = vmul.u32 %v5109, %v5112
        %v5115 = vmul.u32 %v5110, %v5111
        %v5116 = vmul.u32 %v5110, %v5112
        %v5117 = vshll.u32 %v5114, 16
        %v5118 = vshrl.u32 %v5114, 16
        %v5119 = vshll.u32 %v5115, 16
        %v5120 = vshrl.u32 %v5115, 16
        %vm5121 = vc.u32 %v5113, %v5117
        %v5122 = vsel %vm5121, 1, 0
        %v5123 = vadd.s32 %v5113, %v5117
        %v5124 = vadd.s32 %v5116, %v5122
        %vm5125 = vc.u32 %v5123, %v5119
        %v5126 = vsel %vm5125, 1, 0
        %v5127 = vadd.s32 %v5123, %v5119
        %v5128 = vadd.s32 %v5124, %v5126
        %v5129 = vadd.s32 %v5128, %v5118
        %v5130 = vadd.s32 %v5129, %v5120
        %v5131 = vand.u32 %v5108, 65535
        %v5132 = vshrl.u32 %v5108, 16
        %v5133 = vand.u32 %v5103, 65535
        %v5134 = vshrl.u32 %v5103, 16
        %v5135 = vmul.u32 %v5131, %v5133
        %v5136 = vmul.u32 %v5131, %v5134
        %v5137 = vmul.u32 %v5132, %v5133
        %v5138 = vmul.u32 %v5132, %v5134
        %v5139 = vshll.u32 %v5136, 16
        %v5140 = vshrl.u32 %v5136, 16
        %v5141 = vshll.u32 %v5137, 16
        %v5142 = vshrl.u32 %v5137, 16
        %vm5143 = vc.u32 %v5135, %v5139
        %v5144 = vsel %vm5143, 1, 0
        %v5145 = vadd.s32 %v5135, %v5139
        %v5146 = vadd.s32 %v5138, %v5144
        %vm5147 = vc.u32 %v5145, %v5141
        %v5148 = vsel %vm5147, 1, 0
        %v5149 = vadd.s32 %v5145, %v5141
        %v5150 = vadd.s32 %v5146, %v5148
        %v5151 = vadd.s32 %v5150, %v5140
        %v5152 = vadd.s32 %v5151, %v5142
        %v5153 = vmul.u32 %v5108, %v5099
        %v5154 = vadd.s32 %v5130, %v5149
        %vm5155 = vc.u32 %v5130, %v5149
        %v5156 = vadd.s32 %v5152, 1
        %v5157 = vsel %vm5155, %v5156, %v5152
        %v5158 = vadd.s32 %v5153, %v5157
        %v5159 = vadd.s32 %v5158, 536870912
        %v5160 = vshrl.u32 %v5159, 30
        %v5161 = vshll.u32 %v5160, 30
        %v5162 = vsub.s32 %v5158, %v5161
        %vm5163 = vcmp.lt.s32.totalorder %v5162, 0
        %v5164 = vsub.s32 0, %v5162
        %v5165 = vsel %vm5163, %v5164, %v5162
        %v5166 = vclz %v5165
        %v5167 = vsub.s32 %v5166, 2
        %vm5168 = vcmp.gt.s32.totalorder 0, %v5167
        %v5169 = vsel %vm5168, 0, %v5167
        %v5170 = vsub.s32 32, %v5169
        %v5171 = vshll.u32 %v5162, %v5169
        %v5172 = vshrl.u32 %v5154, %v5170
        %v5173 = vor.u32 %v5171, %v5172
        %v5174 = vsub.s32 4294967266, %v5169
        %v5175 = vadd.s32 %v5174, 127
        %v5176 = vshll.u32 %v5175, 23
        %v5177 = vor.u32 4788187, %v5176
        %v5178 = vand.u32 2147483647, %v5177
        %v5180 = vcvt.s32.f32 %v5173
        %v5181 = vmul.f32 %v5180, %v5178
        %v5182 = vxor.u32 %v5181, 2147483648
        %v5183 = vsel %vm5062, %v5182, %v5181
        %v5184 = vsub.s32 4, %v5160
        %v5185 = vsel %vm5062, %v5184, %v5160
        %v5186 = vsel %vm5061, %v732, %v5183
        %v5187 = vsel %vm5061, 0, %v5185
        %v5188 = vmul.f32 %v5186, %v5186
        %v5189 = vmul.f32 %v5188, -0.001358992
        %v5190 = vadd.f32 %v5189, 0.041655596
        %v5191 = vmul.f32 %v5188, %v5190
        %v5192 = vadd.f32 %v5191, -0.4999988
        %v5193 = vmul.f32 %v5188, %v5192
        %v5194 = vadd.f32 1.0, %v5193
        %v5195 = vmul.f32 %v5186, %v5186
        %v5196 = vmul.f32 %v5195, -0.00019511016
        %v5197 = vadd.f32 %v5196, 0.008332121
        %v5198 = vmul.f32 %v5195, %v5197
        %v5199 = vadd.f32 %v5198, -0.16666654
        %v5200 = vmul.f32 %v5195, %v5199
        %v5201 = vadd.f32 %v5200, 1.0
        %v5202 = vmul.f32 %v5201, %v5186
        %vm5203 = vweird.f32 %v732
        %v5204 = vadd.s32 %v5187, 3
        %v5205 = vand.u32 %v5204, 3
        %vm5206 = vcmp.lt.s32.totalorder %v5205, 2
        %vm5207 = vcmp.eq.s32.totalorder %v5205, 0
        %v5208 = vxor.u32 %v5202, 2147483648
        %v5209 = vsel %vm5207, %v5194, %v5208
        %vm5210 = vcmp.eq.s32.totalorder %v5205, 2
        %v5211 = vxor.u32 %v5194, 2147483648
        %v5212 = vsel %vm5210, %v5211, %v5202
        %v5213 = vsel %vm5206, %v5209, %v5212
        %v5214 = vsel %vm5203, nan, %v5213
        %v5215 = vand.u32 2147483647, %v733
        %vm5216 = vcmp.le.f32.partialorder %v5215, 0.7853982
        %vm5217 = vcmp.lt.s32.totalorder %v733, 0
        %v5218 = vand.u32 %v733, 2139095040
        %v5219 = vshrl.u32 %v5218, 23
        %v5220 = vsub.s32 %v5219, 127
        %v5221 = vand.u32 2147483647, %v733
        %v5222 = vand.u32 %v5221, 8388607
        %v5223 = vor.u32 %v5222, 8388608
        %v5224 = vsub.s32 0, %v5223
        %v5225 = vadd.s32 %v5220, 1
        %vm5226 = vcmp.gt.s32.totalorder %v5225, 0
        %v5227 = vsel %vm5226, %v5225, 0
        %v5228 = vshrl.u32 %v5227, 5
        %v5229 = vand.u32 %v5227, 31
        %v5230 = vsub.s32 32, %v5229
        %v5231 = vshrl.u32 683565275, %v5230
        %v5232 = vshll.u32 683565275, %v5229
        %v5233 = vshrl.u32 2475754826, %v5230
        %v5234 = vor.u32 %v5232, %v5233
        %v5235 = vshll.u32 2475754826, %v5229
        %v5236 = vshrl.u32 2131351028, %v5230
        %v5237 = vor.u32 %v5235, %v5236
        %v5238 = vshll.u32 2131351028, %v5229
        %v5239 = vshrl.u32 2102212464, %v5230
        %v5240 = vor.u32 %v5238, %v5239
        %v5241 = vshll.u32 2102212464, %v5229
        %v5242 = vshrl.u32 920167782, %v5230
        %v5243 = vor.u32 %v5241, %v5242
        %v5244 = vshll.u32 920167782, %v5229
        %v5245 = vshrl.u32 1326507024, %v5230
        %v5246 = vor.u32 %v5244, %v5245
        %vm5247 = vcmp.lt.s32.totalorder %v5228, 1
        %vm5248 = vcmp.lt.s32.totalorder %v5228, 2
        %vm5249 = vcmp.lt.s32.totalorder %v5228, 3
        %vm5250 = vcmp.lt.s32.totalorder %v5228, 4
        %v5251 = vsel %vm5247, %v5231, %v5234
        %v5252 = vsel %vm5250, %v5240, 2102212464
        %v5253 = vsel %vm5249, %v5237, %v5252
        %v5254 = vsel %vm5248, %v5251, %v5253
        %v5255 = vsel %vm5247, %v5234, %v5237
        %v5256 = vsel %vm5250, %v5243, 920167782
        %v5257 = vsel %vm5249, %v5240, %v5256
        %v5258 = vsel %vm5248, %v5255, %v5257
        %v5259 = vsel %vm5247, %v5237, %v5240
        %v5260 = vsel %vm5250, %v5246, 1326507024
        %v5261 = vsel %vm5249, %v5243, %v5260
        %v5262 = vsel %vm5248, %v5259, %v5261
        %v5263 = vshll.u32 %v5223, 8
        %v5264 = vand.u32 %v5263, 65535
        %v5265 = vshrl.u32 %v5263, 16
        %v5266 = vand.u32 %v5262, 65535
        %v5267 = vshrl.u32 %v5262, 16
        %v5268 = vmul.u32 %v5264, %v5266
        %v5269 = vmul.u32 %v5264, %v5267
        %v5270 = vmul.u32 %v5265, %v5266
        %v5271 = vmul.u32 %v5265, %v5267
        %v5272 = vshll.u32 %v5269, 16
        %v5273 = vshrl.u32 %v5269, 16
        %v5274 = vshll.u32 %v5270, 16
        %v5275 = vshrl.u32 %v5270, 16
        %vm5276 = vc.u32 %v5268, %v5272
        %v5277 = vsel %vm5276, 1, 0
        %v5278 = vadd.s32 %v5268, %v5272
        %v5279 = vadd.s32 %v5271, %v5277
        %vm5280 = vc.u32 %v5278, %v5274
        %v5281 = vsel %vm5280, 1, 0
        %v5282 = vadd.s32 %v5278, %v5274
        %v5283 = vadd.s32 %v5279, %v5281
        %v5284 = vadd.s32 %v5283, %v5273
        %v5285 = vadd.s32 %v5284, %v5275
        %v5286 = vand.u32 %v5263, 65535
        %v5287 = vshrl.u32 %v5263, 16
        %v5288 = vand.u32 %v5258, 65535
        %v5289 = vshrl.u32 %v5258, 16
        %v5290 = vmul.u32 %v5286, %v5288
        %v5291 = vmul.u32 %v5286, %v5289
        %v5292 = vmul.u32 %v5287, %v5288
        %v5293 = vmul.u32 %v5287, %v5289
        %v5294 = vshll.u32 %v5291, 16
        %v5295 = vshrl.u32 %v5291, 16
        %v5296 = vshll.u32 %v5292, 16
        %v5297 = vshrl.u32 %v5292, 16
        %vm5298 = vc.u32 %v5290, %v5294
        %v5299 = vsel %vm5298, 1, 0
        %v5300 = vadd.s32 %v5290, %v5294
        %v5301 = vadd.s32 %v5293, %v5299
        %vm5302 = vc.u32 %v5300, %v5296
        %v5303 = vsel %vm5302, 1, 0
        %v5304 = vadd.s32 %v5300, %v5296
        %v5305 = vadd.s32 %v5301, %v5303
        %v5306 = vadd.s32 %v5305, %v5295
        %v5307 = vadd.s32 %v5306, %v5297
        %v5308 = vmul.u32 %v5263, %v5254
        %v5309 = vadd.s32 %v5285, %v5304
        %vm5310 = vc.u32 %v5285, %v5304
        %v5311 = vadd.s32 %v5307, 1
        %v5312 = vsel %vm5310, %v5311, %v5307
        %v5313 = vadd.s32 %v5308, %v5312
        %v5314 = vadd.s32 %v5313, 536870912
        %v5315 = vshrl.u32 %v5314, 30
        %v5316 = vshll.u32 %v5315, 30
        %v5317 = vsub.s32 %v5313, %v5316
        %vm5318 = vcmp.lt.s32.totalorder %v5317, 0
        %v5319 = vsub.s32 0, %v5317
        %v5320 = vsel %vm5318, %v5319, %v5317
        %v5321 = vclz %v5320
        %v5322 = vsub.s32 %v5321, 2
        %vm5323 = vcmp.gt.s32.totalorder 0, %v5322
        %v5324 = vsel %vm5323, 0, %v5322
        %v5325 = vsub.s32 32, %v5324
        %v5326 = vshll.u32 %v5317, %v5324
        %v5327 = vshrl.u32 %v5309, %v5325
        %v5328 = vor.u32 %v5326, %v5327
        %v5329 = vsub.s32 4294967266, %v5324
        %v5330 = vadd.s32 %v5329, 127
        %v5331 = vshll.u32 %v5330, 23
        %v5332 = vor.u32 4788187, %v5331
        %v5333 = vand.u32 2147483647, %v5332
        %v5335 = vcvt.s32.f32 %v5328
        %v5336 = vmul.f32 %v5335, %v5333
        %v5337 = vxor.u32 %v5336, 2147483648
        %v5338 = vsel %vm5217, %v5337, %v5336
        %v5339 = vsub.s32 4, %v5315
        %v5340 = vsel %vm5217, %v5339, %v5315
        %v5341 = vsel %vm5216, %v733, %v5338
        %v5342 = vsel %vm5216, 0, %v5340
        %v5343 = vmul.f32 %v5341, %v5341
        %v5344 = vmul.f32 %v5343, -0.001358992
        %v5345 = vadd.f32 %v5344, 0.041655596
        %v5346 = vmul.f32 %v5343, %v5345
        %v5347 = vadd.f32 %v5346, -0.4999988
        %v5348 = vmul.f32 %v5343, %v5347
        %v5349 = vadd.f32 1.0, %v5348
        %v5350 = vmul.f32 %v5341, %v5341
        %v5351 = vmul.f32 %v5350, -0.00019511016
        %v5352 = vadd.f32 %v5351, 0.008332121
        %v5353 = vmul.f32 %v5350, %v5352
        %v5354 = vadd.f32 %v5353, -0.16666654
        %v5355 = vmul.f32 %v5350, %v5354
        %v5356 = vadd.f32 %v5355, 1.0
        %v5357 = vmul.f32 %v5356, %v5341
        %vm5358 = vweird.f32 %v733
        %v5359 = vadd.s32 %v5342, 3
        %v5360 = vand.u32 %v5359, 3
        %vm5361 = vcmp.lt.s32.totalorder %v5360, 2
        %vm5362 = vcmp.eq.s32.totalorder %v5360, 0
        %v5363 = vxor.u32 %v5357, 2147483648
        %v5364 = vsel %vm5362, %v5349, %v5363
        %vm5365 = vcmp.eq.s32.totalorder %v5360, 2
        %v5366 = vxor.u32 %v5349, 2147483648
        %v5367 = vsel %vm5365, %v5366, %v5357
        %v5368 = vsel %vm5361, %v5364, %v5367
        %v5369 = vsel %vm5358, nan, %v5368
        %v5370 = vand.u32 2147483647, %v734
        %vm5371 = vcmp.le.f32.partialorder %v5370, 0.7853982
        %vm5372 = vcmp.lt.s32.totalorder %v734, 0
        %v5373 = vand.u32 %v734, 2139095040
        %v5374 = vshrl.u32 %v5373, 23
        %v5375 = vsub.s32 %v5374, 127
        %v5376 = vand.u32 2147483647, %v734
        %v5377 = vand.u32 %v5376, 8388607
        %v5378 = vor.u32 %v5377, 8388608
        %v5379 = vsub.s32 0, %v5378
        %v5380 = vadd.s32 %v5375, 1
        %vm5381 = vcmp.gt.s32.totalorder %v5380, 0
        %v5382 = vsel %vm5381, %v5380, 0
        %v5383 = vshrl.u32 %v5382, 5
        %v5384 = vand.u32 %v5382, 31
        %v5385 = vsub.s32 32, %v5384
        %v5386 = vshrl.u32 683565275, %v5385
        %v5387 = vshll.u32 683565275, %v5384
        %v5388 = vshrl.u32 2475754826, %v5385
        %v5389 = vor.u32 %v5387, %v5388
        %v5390 = vshll.u32 2475754826, %v5384
        %v5391 = vshrl.u32 2131351028, %v5385
        %v5392 = vor.u32 %v5390, %v5391
        %v5393 = vshll.u32 2131351028, %v5384
        %v5394 = vshrl.u32 2102212464, %v5385
        %v5395 = vor.u32 %v5393, %v5394
        %v5396 = vshll.u32 2102212464, %v5384
        %v5397 = vshrl.u32 920167782, %v5385
        %v5398 = vor.u32 %v5396, %v5397
        %v5399 = vshll.u32 920167782, %v5384
        %v5400 = vshrl.u32 1326507024, %v5385
        %v5401 = vor.u32 %v5399, %v5400
        %vm5402 = vcmp.lt.s32.totalorder %v5383, 1
        %vm5403 = vcmp.lt.s32.totalorder %v5383, 2
        %vm5404 = vcmp.lt.s32.totalorder %v5383, 3
        %vm5405 = vcmp.lt.s32.totalorder %v5383, 4
        %v5406 = vsel %vm5402, %v5386, %v5389
        %v5407 = vsel %vm5405, %v5395, 2102212464
        %v5408 = vsel %vm5404, %v5392, %v5407
        %v5409 = vsel %vm5403, %v5406, %v5408
        %v5410 = vsel %vm5402, %v5389, %v5392
        %v5411 = vsel %vm5405, %v5398, 920167782
        %v5412 = vsel %vm5404, %v5395, %v5411
        %v5413 = vsel %vm5403, %v5410, %v5412
        %v5414 = vsel %vm5402, %v5392, %v5395
        %v5415 = vsel %vm5405, %v5401, 1326507024
        %v5416 = vsel %vm5404, %v5398, %v5415
        %v5417 = vsel %vm5403, %v5414, %v5416
        %v5418 = vshll.u32 %v5378, 8
        %v5419 = vand.u32 %v5418, 65535
        %v5420 = vshrl.u32 %v5418, 16
        %v5421 = vand.u32 %v5417, 65535
        %v5422 = vshrl.u32 %v5417, 16
        %v5423 = vmul.u32 %v5419, %v5421
        %v5424 = vmul.u32 %v5419, %v5422
        %v5425 = vmul.u32 %v5420, %v5421
        %v5426 = vmul.u32 %v5420, %v5422
        %v5427 = vshll.u32 %v5424, 16
        %v5428 = vshrl.u32 %v5424, 16
        %v5429 = vshll.u32 %v5425, 16
        %v5430 = vshrl.u32 %v5425, 16
        %vm5431 = vc.u32 %v5423, %v5427
        %v5432 = vsel %vm5431, 1, 0
        %v5433 = vadd.s32 %v5423, %v5427
        %v5434 = vadd.s32 %v5426, %v5432
        %vm5435 = vc.u32 %v5433, %v5429
        %v5436 = vsel %vm5435, 1, 0
        %v5437 = vadd.s32 %v5433, %v5429
        %v5438 = vadd.s32 %v5434, %v5436
        %v5439 = vadd.s32 %v5438, %v5428
        %v5440 = vadd.s32 %v5439, %v5430
        %v5441 = vand.u32 %v5418, 65535
        %v5442 = vshrl.u32 %v5418, 16
        %v5443 = vand.u32 %v5413, 65535
        %v5444 = vshrl.u32 %v5413, 16
        %v5445 = vmul.u32 %v5441, %v5443
        %v5446 = vmul.u32 %v5441, %v5444
        %v5447 = vmul.u32 %v5442, %v5443
        %v5448 = vmul.u32 %v5442, %v5444
        %v5449 = vshll.u32 %v5446, 16
        %v5450 = vshrl.u32 %v5446, 16
        %v5451 = vshll.u32 %v5447, 16
        %v5452 = vshrl.u32 %v5447, 16
        %vm5453 = vc.u32 %v5445, %v5449
        %v5454 = vsel %vm5453, 1, 0
        %v5455 = vadd.s32 %v5445, %v5449
        %v5456 = vadd.s32 %v5448, %v5454
        %vm5457 = vc.u32 %v5455, %v5451
        %v5458 = vsel %vm5457, 1, 0
        %v5459 = vadd.s32 %v5455, %v5451
        %v5460 = vadd.s32 %v5456, %v5458
        %v5461 = vadd.s32 %v5460, %v5450
        %v5462 = vadd.s32 %v5461, %v5452
        %v5463 = vmul.u32 %v5418, %v5409
        %v5464 = vadd.s32 %v5440, %v5459
        %vm5465 = vc.u32 %v5440, %v5459
        %v5466 = vadd.s32 %v5462, 1
        %v5467 = vsel %vm5465, %v5466, %v5462
        %v5468 = vadd.s32 %v5463, %v5467
        %v5469 = vadd.s32 %v5468, 536870912
        %v5470 = vshrl.u32 %v5469, 30
        %v5471 = vshll.u32 %v5470, 30
        %v5472 = vsub.s32 %v5468, %v5471
        %vm5473 = vcmp.lt.s32.totalorder %v5472, 0
        %v5474 = vsub.s32 0, %v5472
        %v5475 = vsel %vm5473, %v5474, %v5472
        %v5476 = vclz %v5475
        %v5477 = vsub.s32 %v5476, 2
        %vm5478 = vcmp.gt.s32.totalorder 0, %v5477
        %v5479 = vsel %vm5478, 0, %v5477
        %v5480 = vsub.s32 32, %v5479
        %v5481 = vshll.u32 %v5472, %v5479
        %v5482 = vshrl.u32 %v5464, %v5480
        %v5483 = vor.u32 %v5481, %v5482
        %v5484 = vsub.s32 4294967266, %v5479
        %v5485 = vadd.s32 %v5484, 127
        %v5486 = vshll.u32 %v5485, 23
        %v5487 = vor.u32 4788187, %v5486
        %v5488 = vand.u32 2147483647, %v5487
        %v5490 = vcvt.s32.f32 %v5483
        %v5491 = vmul.f32 %v5490, %v5488
        %v5492 = vxor.u32 %v5491, 2147483648
        %v5493 = vsel %vm5372, %v5492, %v5491
        %v5494 = vsub.s32 4, %v5470
        %v5495 = vsel %vm5372, %v5494, %v5470
        %v5496 = vsel %vm5371, %v734, %v5493
        %v5497 = vsel %vm5371, 0, %v5495
        %v5498 = vmul.f32 %v5496, %v5496
        %v5499 = vmul.f32 %v5498, -0.001358992
        %v5500 = vadd.f32 %v5499, 0.041655596
        %v5501 = vmul.f32 %v5498, %v5500
        %v5502 = vadd.f32 %v5501, -0.4999988
        %v5503 = vmul.f32 %v5498, %v5502
        %v5504 = vadd.f32 1.0, %v5503
        %v5505 = vmul.f32 %v5496, %v5496
        %v5506 = vmul.f32 %v5505, -0.00019511016
        %v5507 = vadd.f32 %v5506, 0.008332121
        %v5508 = vmul.f32 %v5505, %v5507
        %v5509 = vadd.f32 %v5508, -0.16666654
        %v5510 = vmul.f32 %v5505, %v5509
        %v5511 = vadd.f32 %v5510, 1.0
        %v5512 = vmul.f32 %v5511, %v5496
        %vm5513 = vweird.f32 %v734
        %v5514 = vadd.s32 %v5497, 3
        %v5515 = vand.u32 %v5514, 3
        %vm5516 = vcmp.lt.s32.totalorder %v5515, 2
        %vm5517 = vcmp.eq.s32.totalorder %v5515, 0
        %v5518 = vxor.u32 %v5512, 2147483648
        %v5519 = vsel %vm5517, %v5504, %v5518
        %vm5520 = vcmp.eq.s32.totalorder %v5515, 2
        %v5521 = vxor.u32 %v5504, 2147483648
        %v5522 = vsel %vm5520, %v5521, %v5512
        %v5523 = vsel %vm5516, %v5519, %v5522
        %v5524 = vsel %vm5513, nan, %v5523
        %v5525 = vand.u32 2147483647, %v735
        %vm5526 = vcmp.le.f32.partialorder %v5525, 0.7853982
        %vm5527 = vcmp.lt.s32.totalorder %v735, 0
        %v5528 = vand.u32 %v735, 2139095040
        %v5529 = vshrl.u32 %v5528, 23
        %v5530 = vsub.s32 %v5529, 127
        %v5531 = vand.u32 2147483647, %v735
        %v5532 = vand.u32 %v5531, 8388607
        %v5533 = vor.u32 %v5532, 8388608
        %v5534 = vsub.s32 0, %v5533
        %v5535 = vadd.s32 %v5530, 1
        %vm5536 = vcmp.gt.s32.totalorder %v5535, 0
        %v5537 = vsel %vm5536, %v5535, 0
        %v5538 = vshrl.u32 %v5537, 5
        %v5539 = vand.u32 %v5537, 31
        %v5540 = vsub.s32 32, %v5539
        %v5541 = vshrl.u32 683565275, %v5540
        %v5542 = vshll.u32 683565275, %v5539
        %v5543 = vshrl.u32 2475754826, %v5540
        %v5544 = vor.u32 %v5542, %v5543
        %v5545 = vshll.u32 2475754826, %v5539
        %v5546 = vshrl.u32 2131351028, %v5540
        %v5547 = vor.u32 %v5545, %v5546
        %v5548 = vshll.u32 2131351028, %v5539
        %v5549 = vshrl.u32 2102212464, %v5540
        %v5550 = vor.u32 %v5548, %v5549
        %v5551 = vshll.u32 2102212464, %v5539
        %v5552 = vshrl.u32 920167782, %v5540
        %v5553 = vor.u32 %v5551, %v5552
        %v5554 = vshll.u32 920167782, %v5539
        %v5555 = vshrl.u32 1326507024, %v5540
        %v5556 = vor.u32 %v5554, %v5555
        %vm5557 = vcmp.lt.s32.totalorder %v5538, 1
        %vm5558 = vcmp.lt.s32.totalorder %v5538, 2
        %vm5559 = vcmp.lt.s32.totalorder %v5538, 3
        %vm5560 = vcmp.lt.s32.totalorder %v5538, 4
        %v5561 = vsel %vm5557, %v5541, %v5544
        %v5562 = vsel %vm5560, %v5550, 2102212464
        %v5563 = vsel %vm5559, %v5547, %v5562
        %v5564 = vsel %vm5558, %v5561, %v5563
        %v5565 = vsel %vm5557, %v5544, %v5547
        %v5566 = vsel %vm5560, %v5553, 920167782
        %v5567 = vsel %vm5559, %v5550, %v5566
        %v5568 = vsel %vm5558, %v5565, %v5567
        %v5569 = vsel %vm5557, %v5547, %v5550
        %v5570 = vsel %vm5560, %v5556, 1326507024
        %v5571 = vsel %vm5559, %v5553, %v5570
        %v5572 = vsel %vm5558, %v5569, %v5571
        %v5573 = vshll.u32 %v5533, 8
        %v5574 = vand.u32 %v5573, 65535
        %v5575 = vshrl.u32 %v5573, 16
        %v5576 = vand.u32 %v5572, 65535
        %v5577 = vshrl.u32 %v5572, 16
        %v5578 = vmul.u32 %v5574, %v5576
        %v5579 = vmul.u32 %v5574, %v5577
        %v5580 = vmul.u32 %v5575, %v5576
        %v5581 = vmul.u32 %v5575, %v5577
        %v5582 = vshll.u32 %v5579, 16
        %v5583 = vshrl.u32 %v5579, 16
        %v5584 = vshll.u32 %v5580, 16
        %v5585 = vshrl.u32 %v5580, 16
        %vm5586 = vc.u32 %v5578, %v5582
        %v5587 = vsel %vm5586, 1, 0
        %v5588 = vadd.s32 %v5578, %v5582
        %v5589 = vadd.s32 %v5581, %v5587
        %vm5590 = vc.u32 %v5588, %v5584
        %v5591 = vsel %vm5590, 1, 0
        %v5592 = vadd.s32 %v5588, %v5584
        %v5593 = vadd.s32 %v5589, %v5591
        %v5594 = vadd.s32 %v5593, %v5583
        %v5595 = vadd.s32 %v5594, %v5585
        %v5596 = vand.u32 %v5573, 65535
        %v5597 = vshrl.u32 %v5573, 16
        %v5598 = vand.u32 %v5568, 65535
        %v5599 = vshrl.u32 %v5568, 16
        %v5600 = vmul.u32 %v5596, %v5598
        %v5601 = vmul.u32 %v5596, %v5599
        %v5602 = vmul.u32 %v5597, %v5598
        %v5603 = vmul.u32 %v5597, %v5599
        %v5604 = vshll.u32 %v5601, 16
        %v5605 = vshrl.u32 %v5601, 16
        %v5606 = vshll.u32 %v5602, 16
        %v5607 = vshrl.u32 %v5602, 16
        %vm5608 = vc.u32 %v5600, %v5604
        %v5609 = vsel %vm5608, 1, 0
        %v5610 = vadd.s32 %v5600, %v5604
        %v5611 = vadd.s32 %v5603, %v5609
        %vm5612 = vc.u32 %v5610, %v5606
        %v5613 = vsel %vm5612, 1, 0
        %v5614 = vadd.s32 %v5610, %v5606
        %v5615 = vadd.s32 %v5611, %v5613
        %v5616 = vadd.s32 %v5615, %v5605
        %v5617 = vadd.s32 %v5616, %v5607
        %v5618 = vmul.u32 %v5573, %v5564
        %v5619 = vadd.s32 %v5595, %v5614
        %vm5620 = vc.u32 %v5595, %v5614
        %v5621 = vadd.s32 %v5617, 1
        %v5622 = vsel %vm5620, %v5621, %v5617
        %v5623 = vadd.s32 %v5618, %v5622
        %v5624 = vadd.s32 %v5623, 536870912
        %v5625 = vshrl.u32 %v5624, 30
        %v5626 = vshll.u32 %v5625, 30
        %v5627 = vsub.s32 %v5623, %v5626
        %vm5628 = vcmp.lt.s32.totalorder %v5627, 0
        %v5629 = vsub.s32 0, %v5627
        %v5630 = vsel %vm5628, %v5629, %v5627
        %v5631 = vclz %v5630
        %v5632 = vsub.s32 %v5631, 2
        %vm5633 = vcmp.gt.s32.totalorder 0, %v5632
        %v5634 = vsel %vm5633, 0, %v5632
        %v5635 = vsub.s32 32, %v5634
        %v5636 = vshll.u32 %v5627, %v5634
        %v5637 = vshrl.u32 %v5619, %v5635
        %v5638 = vor.u32 %v5636, %v5637
        %v5639 = vsub.s32 4294967266, %v5634
        %v5640 = vadd.s32 %v5639, 127
        %v5641 = vshll.u32 %v5640, 23
        %v5642 = vor.u32 4788187, %v5641
        %v5643 = vand.u32 2147483647, %v5642
        %v5645 = vcvt.s32.f32 %v5638
        %v5646 = vmul.f32 %v5645, %v5643
        %v5647 = vxor.u32 %v5646, 2147483648
        %v5648 = vsel %vm5527, %v5647, %v5646
        %v5649 = vsub.s32 4, %v5625
        %v5650 = vsel %vm5527, %v5649, %v5625
        %v5651 = vsel %vm5526, %v735, %v5648
        %v5652 = vsel %vm5526, 0, %v5650
        %v5653 = vmul.f32 %v5651, %v5651
        %v5654 = vmul.f32 %v5653, -0.001358992
        %v5655 = vadd.f32 %v5654, 0.041655596
        %v5656 = vmul.f32 %v5653, %v5655
        %v5657 = vadd.f32 %v5656, -0.4999988
        %v5658 = vmul.f32 %v5653, %v5657
        %v5659 = vadd.f32 1.0, %v5658
        %v5660 = vmul.f32 %v5651, %v5651
        %v5661 = vmul.f32 %v5660, -0.00019511016
        %v5662 = vadd.f32 %v5661, 0.008332121
        %v5663 = vmul.f32 %v5660, %v5662
        %v5664 = vadd.f32 %v5663, -0.16666654
        %v5665 = vmul.f32 %v5660, %v5664
        %v5666 = vadd.f32 %v5665, 1.0
        %v5667 = vmul.f32 %v5666, %v5651
        %vm5668 = vweird.f32 %v735
        %v5669 = vadd.s32 %v5652, 3
        %v5670 = vand.u32 %v5669, 3
        %vm5671 = vcmp.lt.s32.totalorder %v5670, 2
        %vm5672 = vcmp.eq.s32.totalorder %v5670, 0
        %v5673 = vxor.u32 %v5667, 2147483648
        %v5674 = vsel %vm5672, %v5659, %v5673
        %vm5675 = vcmp.eq.s32.totalorder %v5670, 2
        %v5676 = vxor.u32 %v5659, 2147483648
        %v5677 = vsel %vm5675, %v5676, %v5667
        %v5678 = vsel %vm5671, %v5674, %v5677
        %v5679 = vsel %vm5668, nan, %v5678
        %v5680 = vld [vmem:[#allocation6] sm:$0xff]
        %v5681 = vld [vmem:[#allocation6 + $0x8] sm:$0xff]
        %v5682 = vld [vmem:[#allocation6 + $0x10] sm:$0xff]
        %v5683 = vld [vmem:[#allocation6 + $0x18] sm:$0xff]
        %v5684 = vld [vmem:[#allocation6 + $0x20] sm:$0xff]
        %v5685 = vld [vmem:[#allocation6 + $0x28] sm:$0xff]
        %v5686 = vld [vmem:[#allocation6 + $0x30] sm:$0xff]
        %v5687 = vld [vmem:[#allocation6 + $0x38] sm:$0xff]
        %v5688 = vld [vmem:[#allocation6 + $0x40] sm:$0xff]
        %v5689 = vld [vmem:[#allocation6 + $0x48] sm:$0xff]
        %v5690 = vld [vmem:[#allocation6 + $0x50] sm:$0xff]
        %v5691 = vld [vmem:[#allocation6 + $0x58] sm:$0xff]
        %v5692 = vld [vmem:[#allocation6 + $0x60] sm:$0xff]
        %v5693 = vld [vmem:[#allocation6 + $0x68] sm:$0xff]
        %v5694 = vld [vmem:[#allocation6 + $0x70] sm:$0xff]
        %v5695 = vld [vmem:[#allocation6 + $0x78] sm:$0xff]
        %v5696 = vmax.f32 %v5680, 0.0
        %v5697 = vmax.f32 %v5681, 0.0
        %v5698 = vmax.f32 %v5682, 0.0
        %v5699 = vmax.f32 %v5683, 0.0
        %v5700 = vmax.f32 %v5684, 0.0
        %v5701 = vmax.f32 %v5685, 0.0
        %v5702 = vmax.f32 %v5686, 0.0
        %v5703 = vmax.f32 %v5687, 0.0
        %v5704 = vmax.f32 %v5688, 0.0
        %v5705 = vmax.f32 %v5689, 0.0
        %v5706 = vmax.f32 %v5690, 0.0
        %v5707 = vmax.f32 %v5691, 0.0
        %v5708 = vmax.f32 %v5692, 0.0
        %v5709 = vmax.f32 %v5693, 0.0
        %v5710 = vmax.f32 %v5694, 0.0
        %v5711 = vmax.f32 %v5695, 0.0
        %s5712 = sld [smem:[#allocation2]]
        %v5713 = vstv %s5712
        %v5714 = vmul.f32 %v5696, %v5713
        %v5715 = vmul.f32 %v5697, %v5713
        %v5716 = vmul.f32 %v5698, %v5713
        %v5717 = vmul.f32 %v5699, %v5713
        %v5718 = vmul.f32 %v5700, %v5713
        %v5719 = vmul.f32 %v5701, %v5713
        %v5720 = vmul.f32 %v5702, %v5713
        %v5721 = vmul.f32 %v5703, %v5713
        %v5722 = vmul.f32 %v5704, %v5713
        %v5723 = vmul.f32 %v5705, %v5713
        %v5724 = vmul.f32 %v5706, %v5713
        %v5725 = vmul.f32 %v5707, %v5713
        %v5726 = vmul.f32 %v5708, %v5713
        %v5727 = vmul.f32 %v5709, %v5713
        %v5728 = vmul.f32 %v5710, %v5713
        %v5729 = vmul.f32 %v5711, %v5713
        %v5730 = vmul.f32 %v5714, %v889
        %v5731 = vmul.f32 %v5715, %v1043
        %v5732 = vmul.f32 %v5716, %v1197
        %v5733 = vmul.f32 %v5717, %v1351
        %v5734 = vmul.f32 %v5718, %v1505
        %v5735 = vmul.f32 %v5719, %v1659
        %v5736 = vmul.f32 %v5720, %v1813
        %v5737 = vmul.f32 %v5721, %v1967
        %v5738 = vmul.f32 %v5722, %v2121
        %v5739 = vmul.f32 %v5723, %v2275
        %v5740 = vmul.f32 %v5724, %v2429
        %v5741 = vmul.f32 %v5725, %v2583
        %v5742 = vmul.f32 %v5726, %v2737
        %v5743 = vmul.f32 %v5727, %v2891
        %v5744 = vmul.f32 %v5728, %v3045
        %v5745 = vmul.f32 %v5729, %v3199
        %v5746 = vmul.f32 %v5714, %v3354
        %v5747 = vmul.f32 %v5715, %v3509
        %v5748 = vmul.f32 %v5716, %v3664
        %v5749 = vmul.f32 %v5717, %v3819
        %v5750 = vmul.f32 %v5718, %v3974
        %v5751 = vmul.f32 %v5719, %v4129
        %v5752 = vmul.f32 %v5720, %v4284
        %v5753 = vmul.f32 %v5721, %v4439
        %v5754 = vmul.f32 %v5722, %v4594
        %v5755 = vmul.f32 %v5723, %v4749
        %v5756 = vmul.f32 %v5724, %v4904
        %v5757 = vmul.f32 %v5725, %v5059
        %v5758 = vmul.f32 %v5726, %v5214
        %v5759 = vmul.f32 %v5727, %v5369
        %v5760 = vmul.f32 %v5728, %v5524
        %v5761 = vmul.f32 %v5729, %v5679
        %v5762 = vld [vmem:[%s344] sm:$0xff]
        %v5763 = vld [vmem:[%s344 + $0x8] sm:$0xff]
        %v5764 = vld [vmem:[%s344 + $0x10] sm:$0xff]
        %v5765 = vld [vmem:[%s344 + $0x18] sm:$0xff]
        %v5766 = vld [vmem:[%s344 + $0x20] sm:$0xff]
        %v5767 = vld [vmem:[%s344 + $0x28] sm:$0xff]
        %v5768 = vld [vmem:[%s344 + $0x30] sm:$0xff]
        %v5769 = vld [vmem:[%s344 + $0x38] sm:$0xff]
        %v5770 = vld [vmem:[%s344 + $0x40] sm:$0xff]
        %v5771 = vld [vmem:[%s344 + $0x48] sm:$0xff]
        %v5772 = vld [vmem:[%s344 + $0x50] sm:$0xff]
        %v5773 = vld [vmem:[%s344 + $0x58] sm:$0xff]
        %v5774 = vld [vmem:[%s344 + $0x60] sm:$0xff]
        %v5775 = vld [vmem:[%s344 + $0x68] sm:$0xff]
        %v5776 = vld [vmem:[%s344 + $0x70] sm:$0xff]
        %v5777 = vld [vmem:[%s344 + $0x78] sm:$0xff]
        %v5778 = vld [vmem:[%s354] sm:$0xff]
        %v5779 = vld [vmem:[%s354 + $0x8] sm:$0xff]
        %v5780 = vld [vmem:[%s354 + $0x10] sm:$0xff]
        %v5781 = vld [vmem:[%s354 + $0x18] sm:$0xff]
        %v5782 = vld [vmem:[%s354 + $0x20] sm:$0xff]
        %v5783 = vld [vmem:[%s354 + $0x28] sm:$0xff]
        %v5784 = vld [vmem:[%s354 + $0x30] sm:$0xff]
        %v5785 = vld [vmem:[%s354 + $0x38] sm:$0xff]
        %v5786 = vld [vmem:[%s354 + $0x40] sm:$0xff]
        %v5787 = vld [vmem:[%s354 + $0x48] sm:$0xff]
        %v5788 = vld [vmem:[%s354 + $0x50] sm:$0xff]
        %v5789 = vld [vmem:[%s354 + $0x58] sm:$0xff]
        %v5790 = vld [vmem:[%s354 + $0x60] sm:$0xff]
        %v5791 = vld [vmem:[%s354 + $0x68] sm:$0xff]
        %v5792 = vld [vmem:[%s354 + $0x70] sm:$0xff]
        %v5793 = vld [vmem:[%s354 + $0x78] sm:$0xff]
        %v5794 = vmul.f32 %v5730, %v5762
        %v5795 = vmul.f32 %v5731, %v5763
        %v5796 = vmul.f32 %v5732, %v5764
        %v5797 = vmul.f32 %v5733, %v5765
        %v5798 = vmul.f32 %v5734, %v5766
        %v5799 = vmul.f32 %v5735, %v5767
        %v5800 = vmul.f32 %v5736, %v5768
        %v5801 = vmul.f32 %v5737, %v5769
        %v5802 = vmul.f32 %v5738, %v5770
        %v5803 = vmul.f32 %v5739, %v5771
        %v5804 = vmul.f32 %v5740, %v5772
        %v5805 = vmul.f32 %v5741, %v5773
        %v5806 = vmul.f32 %v5742, %v5774
        %v5807 = vmul.f32 %v5743, %v5775
        %v5808 = vmul.f32 %v5744, %v5776
        %v5809 = vmul.f32 %v5745, %v5777
        %v5810 = vmul.f32 %v5746, %v5778
        %v5811 = vmul.f32 %v5747, %v5779
        %v5812 = vmul.f32 %v5748, %v5780
        %v5813 = vmul.f32 %v5749, %v5781
        %v5814 = vmul.f32 %v5750, %v5782
        %v5815 = vmul.f32 %v5751, %v5783
        %v5816 = vmul.f32 %v5752, %v5784
        %v5817 = vmul.f32 %v5753, %v5785
        %v5818 = vmul.f32 %v5754, %v5786
        %v5819 = vmul.f32 %v5755, %v5787
        %v5820 = vmul.f32 %v5756, %v5788
        %v5821 = vmul.f32 %v5757, %v5789
        %v5822 = vmul.f32 %v5758, %v5790
        %v5823 = vmul.f32 %v5759, %v5791
        %v5824 = vmul.f32 %v5760, %v5792
        %v5825 = vmul.f32 %v5761, %v5793
        %v5826 = vsub.f32 %v5794, %v5810
        %v5827 = vsub.f32 %v5795, %v5811
        %v5828 = vsub.f32 %v5796, %v5812
        %v5829 = vsub.f32 %v5797, %v5813
        %v5830 = vsub.f32 %v5798, %v5814
        %v5831 = vsub.f32 %v5799, %v5815
        %v5832 = vsub.f32 %v5800, %v5816
        %v5833 = vsub.f32 %v5801, %v5817
        %v5834 = vsub.f32 %v5802, %v5818
        %v5835 = vsub.f32 %v5803, %v5819
        %v5836 = vsub.f32 %v5804, %v5820
        %v5837 = vsub.f32 %v5805, %v5821
        %v5838 = vsub.f32 %v5806, %v5822
        %v5839 = vsub.f32 %v5807, %v5823
        %v5840 = vsub.f32 %v5808, %v5824
        %v5841 = vsub.f32 %v5809, %v5825
        %5842 = vst [vmem:[%s386] sm:$0xff] %v5826
        %5843 = vst [vmem:[%s386 + $0x8] sm:$0xff] %v5827
        %5844 = vst [vmem:[%s386 + $0x10] sm:$0xff] %v5828
        %5845 = vst [vmem:[%s386 + $0x18] sm:$0xff] %v5829
        %5846 = vst [vmem:[%s386 + $0x20] sm:$0xff] %v5830
        %5847 = vst [vmem:[%s386 + $0x28] sm:$0xff] %v5831
        %5848 = vst [vmem:[%s386 + $0x30] sm:$0xff] %v5832
        %5849 = vst [vmem:[%s386 + $0x38] sm:$0xff] %v5833
        %5850 = vst [vmem:[%s386 + $0x40] sm:$0xff] %v5834
        %5851 = vst [vmem:[%s386 + $0x48] sm:$0xff] %v5835
        %5852 = vst [vmem:[%s386 + $0x50] sm:$0xff] %v5836
        %5853 = vst [vmem:[%s386 + $0x58] sm:$0xff] %v5837
        %5854 = vst [vmem:[%s386 + $0x60] sm:$0xff] %v5838
        %5855 = vst [vmem:[%s386 + $0x68] sm:$0xff] %v5839
        %5856 = vst [vmem:[%s386 + $0x70] sm:$0xff] %v5840
        %5857 = vst [vmem:[%s386 + $0x78] sm:$0xff] %v5841
        %v5858 = vmul.f32 %v5730, %v5778
        %v5859 = vmul.f32 %v5731, %v5779
        %v5860 = vmul.f32 %v5732, %v5780
        %v5861 = vmul.f32 %v5733, %v5781
        %v5862 = vmul.f32 %v5734, %v5782
        %v5863 = vmul.f32 %v5735, %v5783
        %v5864 = vmul.f32 %v5736, %v5784
        %v5865 = vmul.f32 %v5737, %v5785
        %v5866 = vmul.f32 %v5738, %v5786
        %v5867 = vmul.f32 %v5739, %v5787
        %v5868 = vmul.f32 %v5740, %v5788
        %v5869 = vmul.f32 %v5741, %v5789
        %v5870 = vmul.f32 %v5742, %v5790
        %v5871 = vmul.f32 %v5743, %v5791
        %v5872 = vmul.f32 %v5744, %v5792
        %v5873 = vmul.f32 %v5745, %v5793
        %v5874 = vmul.f32 %v5746, %v5762
        %v5875 = vmul.f32 %v5747, %v5763
        %v5876 = vmul.f32 %v5748, %v5764
        %v5877 = vmul.f32 %v5749, %v5765
        %v5878 = vmul.f32 %v5750, %v5766
        %v5879 = vmul.f32 %v5751, %v5767
        %v5880 = vmul.f32 %v5752, %v5768
        %v5881 = vmul.f32 %v5753, %v5769
        %v5882 = vmul.f32 %v5754, %v5770
        %v5883 = vmul.f32 %v5755, %v5771
        %v5884 = vmul.f32 %v5756, %v5772
        %v5885 = vmul.f32 %v5757, %v5773
        %v5886 = vmul.f32 %v5758, %v5774
        %v5887 = vmul.f32 %v5759, %v5775
        %v5888 = vmul.f32 %v5760, %v5776
        %v5889 = vmul.f32 %v5761, %v5777
        %v5890 = vadd.f32 %v5858, %v5874
        %v5891 = vadd.f32 %v5859, %v5875
        %v5892 = vadd.f32 %v5860, %v5876
        %v5893 = vadd.f32 %v5861, %v5877
        %v5894 = vadd.f32 %v5862, %v5878
        %v5895 = vadd.f32 %v5863, %v5879
        %v5896 = vadd.f32 %v5864, %v5880
        %v5897 = vadd.f32 %v5865, %v5881
        %v5898 = vadd.f32 %v5866, %v5882
        %v5899 = vadd.f32 %v5867, %v5883
        %v5900 = vadd.f32 %v5868, %v5884
        %v5901 = vadd.f32 %v5869, %v5885
        %v5902 = vadd.f32 %v5870, %v5886
        %v5903 = vadd.f32 %v5871, %v5887
        %v5904 = vadd.f32 %v5872, %v5888
        %v5905 = vadd.f32 %v5873, %v5889
        %5906 = vst [vmem:[%s393] sm:$0xff] %v5890
        %5907 = vst [vmem:[%s393 + $0x8] sm:$0xff] %v5891
        %5908 = vst [vmem:[%s393 + $0x10] sm:$0xff] %v5892
        %5909 = vst [vmem:[%s393 + $0x18] sm:$0xff] %v5893
        %5910 = vst [vmem:[%s393 + $0x20] sm:$0xff] %v5894
        %5911 = vst [vmem:[%s393 + $0x28] sm:$0xff] %v5895
        %5912 = vst [vmem:[%s393 + $0x30] sm:$0xff] %v5896
        %5913 = vst [vmem:[%s393 + $0x38] sm:$0xff] %v5897
        %5914 = vst [vmem:[%s393 + $0x40] sm:$0xff] %v5898
        %5915 = vst [vmem:[%s393 + $0x48] sm:$0xff] %v5899
        %5916 = vst [vmem:[%s393 + $0x50] sm:$0xff] %v5900
        %5917 = vst [vmem:[%s393 + $0x58] sm:$0xff] %v5901
        %5918 = vst [vmem:[%s393 + $0x60] sm:$0xff] %v5902
        %5919 = vst [vmem:[%s393 + $0x68] sm:$0xff] %v5903
        %5920 = vst [vmem:[%s393 + $0x70] sm:$0xff] %v5904
        %5921 = vst [vmem:[%s393 + $0x78] sm:$0xff] %v5905
        %s5922 = sand.u32 %s178, 1
        %s5923 = scalar_lea.sflag [#allocation5], %s5922
        %s5924 = sand.u32 %s178, 1
        %s5925 = smul.addr %s5924, 128
        %s5926 = scalar_lea.vmem [#allocation10], %s5925
        %s5927 = sand.u32 %s206, 1
        %s5928 = scalar_lea.sflag [#allocation12], %s5927
        %s5929 = sand.u32 %s206, 1
        %s5930 = smul.addr %s5929, 128
        %s5931 = scalar_lea.vmem [#allocation11], %s5930
        // Predicated region
        $region57: #{tpu_custom_call.1} parent=39 // pred_check
          %p5932 = pneg %p188
        $region58: #{tpu_custom_call.1} parent=39 // pred_check_branch
          %5934 = sbr.rel (%p5932) target = $region60
        $region59: #{tpu_custom_call.1} parent=39 // pred_region
          %s5935 = smul.u32 16, %s31
          %5937 = vsyncadd %s5923, 0
          %s5938 = smul.addr %s32, 16
          %s5939 = sadd.s32 %s5935, %s5938
          %s5940 = smul.addr %s5939, 8
          %s5941 = scalar_lea.hbm %s5, %s5940
          %s5942 = sshll.u32 %s5926, 4
          %s5943 = int_to_ptr.vmem [resolvable:$true] %s5942
          %s5944 = sshll.u32 %s5941, 4
          %s5945 = int_to_ptr.hbm [resolvable:$true] %s5944
          %5950 = dma.vmem_to_hbm [thread:$0]  %s5943, 2048, %s5945, %s5923, 128, 128, 8
        $region60: #{tpu_custom_call.1} parent=39 // pred_fallthru
          _
        // Predicated region
        $region61: #{tpu_custom_call.1} parent=39 // pred_check
          %p5951 = pneg %p216
        $region62: #{tpu_custom_call.1} parent=39 // pred_check_branch
          %5953 = sbr.rel (%p5951) target = $region64
        $region63: #{tpu_custom_call.1} parent=39 // pred_region
          %s5954 = smul.u32 16, %s31
          %5956 = vsyncadd %s5928, 0
          %s5957 = smul.addr %s32, 16
          %s5958 = sadd.s32 %s5954, %s5957
          %s5959 = smul.addr %s5958, 8
          %s5960 = scalar_lea.hbm %s6, %s5959
          %s5961 = sshll.u32 %s5931, 4
          %s5962 = int_to_ptr.vmem [resolvable:$true] %s5961
          %s5963 = sshll.u32 %s5960, 4
          %s5964 = int_to_ptr.hbm [resolvable:$true] %s5963
          %5969 = dma.vmem_to_hbm [thread:$0]  %s5962, 2048, %s5964, %s5928, 128, 128, 8
        $region64: #{tpu_custom_call.1} parent=39 // pred_fallthru
          _
      $region40: #{tpu_custom_call.1} parent=5 // pred_fallthru
        _
      %p5970 = scmp.le.s32.totalorder 2, %s22
      // Predicated region
      $region65: #{tpu_custom_call.1} parent=5 // pred_check
        %p5971 = pneg %p5970
      $region66: #{tpu_custom_call.1} parent=5 // pred_check_branch
        %5973 = sbr.rel (%p5971) target = $region68
      $region67: #{tpu_custom_call.1} parent=5 // pred_region
        %s5974 = ssub.s32 %s22, 2
        // Predicated region
        $region69: #{tpu_custom_call.1} parent=67 // pred_check
          %p5975 = pneg %p194
        $region70: #{tpu_custom_call.1} parent=67 // pred_check_branch
          %5977 = sbr.rel (%p5975) target = $region72
        $region71: #{tpu_custom_call.1} parent=67 // pred_region
          %s5978 = sand.u32 %s179, 1
          %s5979 = scalar_lea.sflag [#allocation5], %s5978
          %s5980 = sand.u32 %s179, 1
          %s5981 = smul.addr %s5980, 128
          %s5982 = scalar_lea.vmem [#allocation10], %s5981
          %5984 = dma.done %s5979, 2048
        $region72: #{tpu_custom_call.1} parent=67 // pred_fallthru
          _
        // Predicated region
        $region73: #{tpu_custom_call.1} parent=67 // pred_check
          %p5985 = pneg %p222
        $region74: #{tpu_custom_call.1} parent=67 // pred_check_branch
          %5987 = sbr.rel (%p5985) target = $region76
        $region75: #{tpu_custom_call.1} parent=67 // pred_region
          %s5988 = sand.u32 %s207, 1
          %s5989 = scalar_lea.sflag [#allocation12], %s5988
          %s5990 = sand.u32 %s207, 1
          %s5991 = smul.addr %s5990, 128
          %s5992 = scalar_lea.vmem [#allocation11], %s5991
          %5994 = dma.done %s5989, 2048
        $region76: #{tpu_custom_call.1} parent=67 // pred_fallthru
          _
      $region68: #{tpu_custom_call.1} parent=5 // pred_fallthru
        _
    $region6: #{tpu_custom_call.1} parent=1 // loop_footer
      %s26 = sadd.s32 1, %s22
    $region7: #{tpu_custom_call.1} parent=1 // loop_footer_branch
      %21 = sbr.rel target = $region3
    $region8: #{tpu_custom_call.1} parent=1 // loop_exit
      _
    %5995 = vsyncpa [#allocation4], 1
    %s5996 = scalar_lea.sflag [#allocation4], 1
    %5997 = vsyncpa %s5996, 1
    %5998 = vsyncpa [#allocation7], 1
    %5999 = vsyncpa [#allocation5], 1
    %s6000 = scalar_lea.sflag [#allocation5], 1
    %6001 = vsyncpa %s6000, 1
    %6002 = vsyncpa [#allocation12], 1
    %s6003 = scalar_lea.sflag [#allocation12], 1
    %6004 = vsyncpa %s6003, 1

</llo_original>
